<compile_context>
chip_gen: v5e
topology: v5e:2x2
jax: 0.10.0
libtpu: 0.0.40
codegen_flags: <defaults>
</compile_context>

<pallas_src>
import functools
import math

import jax
import jax.numpy as jnp
from jax.experimental import pallas as pl
from jax.experimental.pallas import tpu as pltpu


def transformer_kernel(x_ref, wp_ref, bp_ref,
                       wqkv_ref, bqkv_ref, wo_ref, bo_ref,
                       ln1g_ref, ln1b_ref,
                       w1_ref, b1_ref, w2_ref, b2_ref,
                       ln2g_ref, ln2b_ref,
                       wfc_ref, bfc_ref,
                       o_ref,
                       h_ref, ffacc_ref,
                       *, B, S, D, H, eps):
    l = pl.program_id(0)           # encoder layer
    c = pl.program_id(1)           # FFN hidden-dim chunk
    nL = pl.num_programs(0)
    nC = pl.num_programs(1)
    hd = D // H
    f32 = jnp.float32
    bf16 = jnp.bfloat16

    def layernorm(x, g, b):
        mu = jnp.mean(x, axis=-1, keepdims=True)
        xc = x - mu
        var = jnp.mean(xc * xc, axis=-1, keepdims=True)   # biased var (PyTorch LN)
        return xc * jax.lax.rsqrt(var + eps) * g + b

    # ----- input projection: only at the very first grid step -----
    @pl.when(jnp.logical_and(l == 0, c == 0))
    def _():
        h_ref[...] = (jnp.dot(x_ref[...].astype(bf16), wp_ref[...],
                              preferred_element_type=f32) + bp_ref[...])

    # ----- multi-head self-attention + LN1: once per layer (first chunk) -----
    @pl.when(c == 0)
    def _():
        h = h_ref[...]                                              # (B*S, D) f32
        # Q columns / bias were pre-scaled by 1/sqrt(hd) at init time.
        qkv = jnp.dot(h.astype(bf16), wqkv_ref[0],
                      preferred_element_type=f32) + bqkv_ref[0]     # (B*S, 3D) f32

        def heads(cols):                                            # -> (B*H, S, hd) bf16
            return (cols.reshape(B, S, H, hd)
                        .transpose(0, 2, 1, 3)
                        .reshape(B * H, S, hd)
                        .astype(bf16))

        q = heads(qkv[:, :D])
        k = heads(qkv[:, D:2 * D])
        v = heads(qkv[:, 2 * D:])

        s = jnp.einsum('bqd,bkd->bqk', q, k,
                       preferred_element_type=f32)                  # (B*H, S, S)
        s = s - jnp.max(s, axis=-1, keepdims=True)
        p = jnp.exp(s)
        p = p * pl.reciprocal(jnp.sum(p, axis=-1, keepdims=True), approx=True)

        ctx = jnp.einsum('bqk,bkd->bqd', p.astype(bf16), v,
                         preferred_element_type=f32)                # (B*H, S, hd)
        ctx = (ctx.reshape(B, H, S, hd)
                  .transpose(0, 2, 1, 3)
                  .reshape(B * S, D))
        attn = jnp.dot(ctx.astype(bf16), wo_ref[0],
                       preferred_element_type=f32) + bo_ref[0]      # (B*S, D)

        # dropout omitted (inference)
        h_ref[...] = layernorm(h + attn, ln1g_ref[0], ln1b_ref[0])
        ffacc_ref[...] = jnp.zeros_like(ffacc_ref)

    # ----- FFN chunk c: ReLU(h @ W1[:, chunk] + b1[chunk]) @ W2[chunk, :] -----
    hl = h_ref[...]
    ff = jnp.dot(hl.astype(bf16), w1_ref[0],
                 preferred_element_type=f32) + b1_ref[0]            # (B*S, Fc)
    ff = jnp.maximum(ff, 0.0)
    ffacc_ref[...] += jnp.dot(ff.astype(bf16), w2_ref[0],
                              preferred_element_type=f32)           # (B*S, D)

    # ----- close FFN sub-layer (bias + residual + LN2) at the last chunk -----
    @pl.when(c == nC - 1)
    def _():
        h_ref[...] = layernorm(h_ref[...] + ffacc_ref[...] + b2_ref[0],
                               ln2g_ref[0], ln2b_ref[0])

    # ----- final head: fc on the last time step, at the very last step -----
    @pl.when(jnp.logical_and(l == nL - 1, c == nC - 1))
    def _():
        last = h_ref[...].reshape(B, S, D)[:, S - 1, :]             # (B, D)
        o_ref[...] = jnp.dot(last.astype(bf16), wfc_ref[...],
                             preferred_element_type=f32) + bfc_ref[...]


def time_series_transformer(x, params, *, nhead, num_layers, ff_chunk=1024):
    B, S, Fin = x.shape
    D = params["wp_t"].shape[1]
    F = params["w1_t"].shape[2]
    out_size = params["wfc_t"].shape[1]
    L = num_layers
    assert params["wqkv_t"].shape[0] == L
    assert F % ff_chunk == 0
    C = F // ff_chunk

    x2 = x.reshape(B * S, Fin).astype(jnp.float32)   # glue: (B,S,F) -> (B*S,F)

    const2 = lambda l, c: (0, 0)       # whole-array, DMA'd once (index never changes)
    layer3 = lambda l, c: (l, 0, 0)    # per-layer block, DMA'd once per layer

    in_specs = [
        pl.BlockSpec((B * S, Fin), const2),                       # x
        pl.BlockSpec((Fin, D), const2),                           # wp_t
        pl.BlockSpec((1, D), const2),                             # bp
        pl.BlockSpec((1, D, 3 * D), layer3),                      # wqkv_t
        pl.BlockSpec((1, 1, 3 * D), layer3),                      # bqkv
        pl.BlockSpec((1, D, D), layer3),                          # wo_t
        pl.BlockSpec((1, 1, D), layer3),                          # bo
        pl.BlockSpec((1, 1, D), layer3),                          # ln1_g
        pl.BlockSpec((1, 1, D), layer3),                          # ln1_b
        pl.BlockSpec((1, D, ff_chunk), lambda l, c: (l, 0, c)),   # w1_t chunk
        pl.BlockSpec((1, 1, ff_chunk), lambda l, c: (l, 0, c)),   # b1 chunk
        pl.BlockSpec((1, ff_chunk, D), lambda l, c: (l, c, 0)),   # w2_t chunk
        pl.BlockSpec((1, 1, D), layer3),                          # b2
        pl.BlockSpec((1, 1, D), layer3),                          # ln2_g
        pl.BlockSpec((1, 1, D), layer3),                          # ln2_b
        pl.BlockSpec((D, out_size), const2),                      # wfc_t
        pl.BlockSpec((1, out_size), const2),                      # bfc
    ]
    out_spec = pl.BlockSpec((B, out_size), const2)

    kernel = functools.partial(transformer_kernel,
                               B=B, S=S, D=D, H=nhead, eps=1e-5)

    return pl.pallas_call(
        kernel,
        out_shape=jax.ShapeDtypeStruct((B, out_size), jnp.float32),
        grid=(L, C),
        in_specs=in_specs,
        out_specs=out_spec,
        scratch_shapes=[pltpu.VMEM((B * S, D), jnp.float32),   # h carried across layers
                        pltpu.VMEM((B * S, D), jnp.float32)],  # FFN partial accumulator
        compiler_params=pltpu.CompilerParams(
            dimension_semantics=("arbitrary", "arbitrary"),
            vmem_limit_bytes=16 * 1024 * 1024),
    )(x2, params["wp_t"], params["bp"],
      params["wqkv_t"], params["bqkv"], params["wo_t"], params["bo"],
      params["ln1_g"], params["ln1_b"],
      params["w1_t"], params["b1"], params["w2_t"], params["b2"],
      params["ln2_g"], params["ln2_b"],
      params["wfc_t"], params["bfc"])


def init_params(key, input_size, d_model, nhead, num_layers,
                dim_feedforward, output_size):
    ks = jax.random.split(key, 12)
    scale = 0.05

    def rnd(k, shape):
        return jax.random.normal(k, shape, jnp.float32) * scale

    L, D, F = num_layers, d_model, dim_feedforward
    hd = D // nhead
    qscale = 1.0 / math.sqrt(hd)
    bf16 = jnp.bfloat16

    # fold the attention 1/sqrt(hd) scale into the Q projection (one-time transform)
    wqkv_t = rnd(ks[2], (L, D, 3 * D))
    bqkv = rnd(ks[3], (L, 1, 3 * D))
    wqkv_t = wqkv_t.at[:, :, :D].multiply(qscale)
    bqkv = bqkv.at[:, :, :D].multiply(qscale)

    # matmul weights stored in bf16 (MXU-native, half the HBM traffic);
    # biases / LayerNorm params stay f32 (VPU math stays f32).
    return dict(
        wp_t=rnd(ks[0], (input_size, D)).astype(bf16), bp=rnd(ks[1], (1, D)),
        wqkv_t=wqkv_t.astype(bf16),                    bqkv=bqkv,
        wo_t=rnd(ks[4], (L, D, D)).astype(bf16),       bo=rnd(ks[5], (L, 1, D)),
        ln1_g=jnp.ones((L, 1, D), jnp.float32),
        ln1_b=jnp.zeros((L, 1, D), jnp.float32),
        w1_t=rnd(ks[6], (L, D, F)).astype(bf16),       b1=rnd(ks[7], (L, 1, F)),
        w2_t=rnd(ks[8], (L, F, D)).astype(bf16),       b2=rnd(ks[9], (L, 1, D)),
        ln2_g=jnp.ones((L, 1, D), jnp.float32),
        ln2_b=jnp.zeros((L, 1, D), jnp.float32),
        wfc_t=rnd(ks[10], (D, output_size)).astype(bf16),
        bfc=rnd(ks[11], (1, output_size)),
    )


if __name__ == "__main__":
    # Module hyperparameters (PyTorch defaults: d_model=64, nhead=4,
    # num_layers=2, output_size=1, dim_feedforward=2048, eps=1e-5, ReLU, post-norm).
    input_size, d_model, nhead, num_layers, output_size, dff = 8, 64, 4, 2, 1, 2048
    B, S = 2, 8

    key = jax.random.PRNGKey(0)
    kx, kp = jax.random.split(key)
    x = jax.random.normal(kx, (B, S, input_size), jnp.float32)   # (batch, seq, feat)
    params = init_params(kp, input_size, d_model, nhead, num_layers, dff, output_size)

    out = time_series_transformer(x, params, nhead=nhead, num_layers=num_layers)
    out = jax.block_until_ready(out)
    assert out.shape == (B, output_size)
    assert bool(jnp.all(jnp.isfinite(out)))
    print("KERNEL_OK")
</pallas_src>

<mosaic_0001>
module attributes {stable_mosaic.version = 11 : i64} {
  func.func @transformer_kernel(%arg0: i32, %arg1: i32, %arg2: memref<16x8xf32, #tpu.memory_space<vmem>>, %arg3: memref<8x64xbf16, #tpu.memory_space<vmem>>, %arg4: memref<1x64xf32, #tpu.memory_space<vmem>>, %arg5: memref<1x64x192xbf16, #tpu.memory_space<vmem>>, %arg6: memref<1x1x192xf32, #tpu.memory_space<vmem>>, %arg7: memref<1x64x64xbf16, #tpu.memory_space<vmem>>, %arg8: memref<1x1x64xf32, #tpu.memory_space<vmem>>, %arg9: memref<1x1x64xf32, #tpu.memory_space<vmem>>, %arg10: memref<1x1x64xf32, #tpu.memory_space<vmem>>, %arg11: memref<1x64x1024xbf16, #tpu.memory_space<vmem>>, %arg12: memref<1x1x1024xf32, #tpu.memory_space<vmem>>, %arg13: memref<1x1024x64xbf16, #tpu.memory_space<vmem>>, %arg14: memref<1x1x64xf32, #tpu.memory_space<vmem>>, %arg15: memref<1x1x64xf32, #tpu.memory_space<vmem>>, %arg16: memref<1x1x64xf32, #tpu.memory_space<vmem>>, %arg17: memref<64x1xbf16, #tpu.memory_space<vmem>>, %arg18: memref<1x1xf32, #tpu.memory_space<vmem>>, %arg19: memref<2x1xf32, #tpu.memory_space<vmem>>, %arg20: memref<16x64xf32, #tpu.memory_space<vmem>>, %arg21: memref<16x64xf32, #tpu.memory_space<vmem>>) attributes {dimension_semantics = [#tpu.dimension_semantics<arbitrary>, #tpu.dimension_semantics<arbitrary>], iteration_bounds = array<i64: 2, 2>, scalar_prefetch = 0 : i64, scratch_operands = 2 : i64, tpu.core_type = #tpu.core_type<tc>, window_params = [{pipeline_mode = #tpu.pipeline_mode<synchronous>, transform_indices = @transform_0, window_bounds = array<i64: 16, 8>}, {pipeline_mode = #tpu.pipeline_mode<synchronous>, transform_indices = @transform_1, window_bounds = array<i64: 8, 64>}, {pipeline_mode = #tpu.pipeline_mode<synchronous>, transform_indices = @transform_2, window_bounds = array<i64: 1, 64>}, {transform_indices = @transform_3, window_bounds = array<i64: 1, 64, 192>}, {transform_indices = @transform_4, window_bounds = array<i64: 1, 1, 192>}, {transform_indices = @transform_5, window_bounds = array<i64: 1, 64, 64>}, {transform_indices = @transform_6, window_bounds = array<i64: 1, 1, 64>}, {transform_indices = @transform_7, window_bounds = array<i64: 1, 1, 64>}, {transform_indices = @transform_8, window_bounds = array<i64: 1, 1, 64>}, {transform_indices = @transform_9, window_bounds = array<i64: 1, 64, 1024>}, {transform_indices = @transform_10, window_bounds = array<i64: 1, 1, 1024>}, {transform_indices = @transform_11, window_bounds = array<i64: 1, 1024, 64>}, {transform_indices = @transform_12, window_bounds = array<i64: 1, 1, 64>}, {transform_indices = @transform_13, window_bounds = array<i64: 1, 1, 64>}, {transform_indices = @transform_14, window_bounds = array<i64: 1, 1, 64>}, {pipeline_mode = #tpu.pipeline_mode<synchronous>, transform_indices = @transform_15, window_bounds = array<i64: 64, 1>}, {pipeline_mode = #tpu.pipeline_mode<synchronous>, transform_indices = @transform_16, window_bounds = array<i64: 1, 1>}, {pipeline_mode = #tpu.pipeline_mode<synchronous>, transform_indices = @transform_17, window_bounds = array<i64: 2, 1>}]} {
    %c0_i32 = arith.constant 0 : i32
    %0 = arith.cmpi eq, %arg0, %c0_i32 : i32
    %c0_i32_0 = arith.constant 0 : i32
    %1 = arith.cmpi eq, %arg1, %c0_i32_0 : i32
    %2 = arith.andi %0, %1 : i1
    %3 = arith.extui %2 : i1 to i32
    %c0_i32_1 = arith.constant 0 : i32
    %4 = arith.cmpi ne, %3, %c0_i32_1 : i32
    scf.if %4 {
      %c0_24 = arith.constant 0 : index
      %c0_25 = arith.constant 0 : index
      %34 = vector.load %arg2[%c0_24, %c0_25] : memref<16x8xf32, #tpu.memory_space<vmem>>, vector<16x8xf32>
      %35 = arith.truncf %34 : vector<16x8xf32> to vector<16x8xbf16>
      %c0_26 = arith.constant 0 : index
      %c0_27 = arith.constant 0 : index
      %36 = vector.load %arg3[%c0_26, %c0_27] : memref<8x64xbf16, #tpu.memory_space<vmem>>, vector<8x64xbf16>
      %cst_28 = arith.constant dense<0.000000e+00> : vector<16x64xf32>
      %37 = tpu.matmul %35, %36, %cst_28 {dimension_numbers = #tpu.dot_dimension_numbers<[1], [0], [0], [1], [0, 0, 1, 1], [], []>} : vector<16x8xbf16>, vector<8x64xbf16>, vector<16x64xf32> -> vector<16x64xf32>
      %c0_29 = arith.constant 0 : index
      %c0_30 = arith.constant 0 : index
      %38 = vector.load %arg4[%c0_29, %c0_30] : memref<1x64xf32, #tpu.memory_space<vmem>>, vector<1x64xf32>
      %39 = vector.broadcast %38 : vector<1x64xf32> to vector<16x64xf32>
      %40 = arith.addf %37, %39 : vector<16x64xf32>
      %c0_31 = arith.constant 0 : index
      %c0_32 = arith.constant 0 : index
      %41 = vector.load %arg20[%c0_31, %c0_32] : memref<16x64xf32, #tpu.memory_space<vmem>>, vector<16x64xf32>
      tpu.vector_store %arg20[%c0_31, %c0_32], %40 {strides = array<i32>} : memref<16x64xf32, #tpu.memory_space<vmem>>, vector<16x64xf32>,
    } else {
    }
    %c0_i32_2 = arith.constant 0 : i32
    %5 = arith.cmpi eq, %arg1, %c0_i32_2 : i32
    %6 = arith.extui %5 : i1 to i32
    %c0_i32_3 = arith.constant 0 : i32
    %7 = arith.cmpi ne, %6, %c0_i32_3 : i32
    scf.if %7 {
      %c0_24 = arith.constant 0 : index
      %c0_25 = arith.constant 0 : index
      %34 = vector.load %arg20[%c0_24, %c0_25] : memref<16x64xf32, #tpu.memory_space<vmem>>, vector<16x64xf32>
      %35 = arith.truncf %34 : vector<16x64xf32> to vector<16x64xbf16>
      %c0_26 = arith.constant 0 : index
      %c0_27 = arith.constant 0 : index
      %c0_28 = arith.constant 0 : index
      %36 = vector.load %arg5[%c0_26, %c0_27, %c0_28] : memref<1x64x192xbf16, #tpu.memory_space<vmem>>, vector<1x64x192xbf16>
      %37 = vector.shape_cast %36 : vector<1x64x192xbf16> to vector<64x192xbf16>
      %cst_29 = arith.constant dense<0.000000e+00> : vector<16x192xf32>
      %38 = tpu.matmul %35, %37, %cst_29 {dimension_numbers = #tpu.dot_dimension_numbers<[1], [0], [0], [1], [0, 0, 1, 1], [], []>} : vector<16x64xbf16>, vector<64x192xbf16>, vector<16x192xf32> -> vector<16x192xf32>
      %c0_30 = arith.constant 0 : index
      %c0_31 = arith.constant 0 : index
      %c0_32 = arith.constant 0 : index
      %39 = vector.load %arg6[%c0_30, %c0_31, %c0_32] : memref<1x1x192xf32, #tpu.memory_space<vmem>>, vector<1x1x192xf32>
      %40 = vector.shape_cast %39 : vector<1x1x192xf32> to vector<1x192xf32>
      %41 = vector.broadcast %40 : vector<1x192xf32> to vector<16x192xf32>
      %42 = arith.addf %38, %41 : vector<16x192xf32>
      %43 = vector.extract_strided_slice %42 {offsets = [0, 0], sizes = [16, 64], strides = [1, 1]} : vector<16x192xf32> to vector<16x64xf32>
      %44 = vector.shape_cast %43 : vector<16x64xf32> to vector<2x8x4x16xf32>
      %45 = tpu.transpose %44, [0, 2, 1, 3] : vector<2x8x4x16xf32> -> vector<2x4x8x16xf32>
      %46 = vector.shape_cast %45 : vector<2x4x8x16xf32> to vector<8x8x16xf32>
      %47 = arith.truncf %46 : vector<8x8x16xf32> to vector<8x8x16xbf16>
      %48 = vector.extract_strided_slice %42 {offsets = [0, 64], sizes = [16, 64], strides = [1, 1]} : vector<16x192xf32> to vector<16x64xf32>
      %49 = vector.shape_cast %48 : vector<16x64xf32> to vector<2x8x4x16xf32>
      %50 = tpu.transpose %49, [0, 2, 1, 3] : vector<2x8x4x16xf32> -> vector<2x4x8x16xf32>
      %51 = vector.shape_cast %50 : vector<2x4x8x16xf32> to vector<8x8x16xf32>
      %52 = arith.truncf %51 : vector<8x8x16xf32> to vector<8x8x16xbf16>
      %53 = vector.extract_strided_slice %42 {offsets = [0, 128], sizes = [16, 64], strides = [1, 1]} : vector<16x192xf32> to vector<16x64xf32>
      %54 = vector.shape_cast %53 : vector<16x64xf32> to vector<2x8x4x16xf32>
      %55 = tpu.transpose %54, [0, 2, 1, 3] : vector<2x8x4x16xf32> -> vector<2x4x8x16xf32>
      %56 = vector.shape_cast %55 : vector<2x4x8x16xf32> to vector<8x8x16xf32>
      %57 = arith.truncf %56 : vector<8x8x16xf32> to vector<8x8x16xbf16>
      "tpu.trace_start"() <{level = 10 : i32, message = "bqd,bkd->bqk"}> : () -> ()
      %cst_33 = arith.constant dense<0.000000e+00> : vector<8x8x8xf32>
      %58 = tpu.matmul %47, %52, %cst_33 {dimension_numbers = #tpu.dot_dimension_numbers<[2], [2], [1], [1], [0, 0, 0, 1, 1, 1], [0], [0]>} : vector<8x8x16xbf16>, vector<8x8x16xbf16>, vector<8x8x8xf32> -> vector<8x8x8xf32>
      "tpu.trace_stop"() : () -> ()
      %cst_34 = arith.constant dense<0xFF800000> : vector<8x8xf32>
      %59 = vector.multi_reduction <maximumf>, %58, %cst_34 [2] : vector<8x8x8xf32> to vector<8x8xf32>
      %60 = vector.shape_cast %59 : vector<8x8xf32> to vector<8x8x1xf32>
      %61 = vector.broadcast %60 : vector<8x8x1xf32> to vector<8x8x8xf32>
      %62 = arith.subf %58, %61 : vector<8x8x8xf32>
      %63 = math.exp %62 : vector<8x8x8xf32>
      %cst_35 = arith.constant dense<0.000000e+00> : vector<8x8xf32>
      %64 = vector.multi_reduction <add>, %63, %cst_35 [2] : vector<8x8x8xf32> to vector<8x8xf32>
      %65 = vector.shape_cast %64 : vector<8x8xf32> to vector<8x8x1xf32>
      %66 = tpu.reciprocal %65 {approx = true} : vector<8x8x1xf32> -> vector<8x8x1xf32>
      %67 = vector.broadcast %66 : vector<8x8x1xf32> to vector<8x8x8xf32>
      %68 = arith.mulf %63, %67 : vector<8x8x8xf32>
      %69 = arith.truncf %68 : vector<8x8x8xf32> to vector<8x8x8xbf16>
      "tpu.trace_start"() <{level = 10 : i32, message = "bqk,bkd->bqd"}> : () -> ()
      %cst_36 = arith.constant dense<0.000000e+00> : vector<8x8x16xf32>
      %70 = tpu.matmul %69, %57, %cst_36 {dimension_numbers = #tpu.dot_dimension_numbers<[2], [1], [1], [2], [0, 0, 0, 1, 1, 2], [0], [0]>} : vector<8x8x8xbf16>, vector<8x8x16xbf16>, vector<8x8x16xf32> -> vector<8x8x16xf32>
      "tpu.trace_stop"() : () -> ()
      %71 = vector.shape_cast %70 : vector<8x8x16xf32> to vector<2x4x8x16xf32>
      %72 = tpu.transpose %71, [0, 2, 1, 3] : vector<2x4x8x16xf32> -> vector<2x8x4x16xf32>
      %73 = vector.shape_cast %72 : vector<2x8x4x16xf32> to vector<16x64xf32>
      %74 = arith.truncf %73 : vector<16x64xf32> to vector<16x64xbf16>
      %c0_37 = arith.constant 0 : index
      %c0_38 = arith.constant 0 : index
      %c0_39 = arith.constant 0 : index
      %75 = vector.load %arg7[%c0_37, %c0_38, %c0_39] : memref<1x64x64xbf16, #tpu.memory_space<vmem>>, vector<1x64x64xbf16>
      %76 = vector.shape_cast %75 : vector<1x64x64xbf16> to vector<64x64xbf16>
      %cst_40 = arith.constant dense<0.000000e+00> : vector<16x64xf32>
      %77 = tpu.matmul %74, %76, %cst_40 {dimension_numbers = #tpu.dot_dimension_numbers<[1], [0], [0], [1], [0, 0, 1, 1], [], []>} : vector<16x64xbf16>, vector<64x64xbf16>, vector<16x64xf32> -> vector<16x64xf32>
      %c0_41 = arith.constant 0 : index
      %c0_42 = arith.constant 0 : index
      %c0_43 = arith.constant 0 : index
      %78 = vector.load %arg8[%c0_41, %c0_42, %c0_43] : memref<1x1x64xf32, #tpu.memory_space<vmem>>, vector<1x1x64xf32>
      %79 = vector.shape_cast %78 : vector<1x1x64xf32> to vector<1x64xf32>
      %80 = vector.broadcast %79 : vector<1x64xf32> to vector<16x64xf32>
      %81 = arith.addf %77, %80 : vector<16x64xf32>
      %82 = arith.addf %34, %81 : vector<16x64xf32>
      %c0_44 = arith.constant 0 : index
      %c0_45 = arith.constant 0 : index
      %c0_46 = arith.constant 0 : index
      %83 = vector.load %arg9[%c0_44, %c0_45, %c0_46] : memref<1x1x64xf32, #tpu.memory_space<vmem>>, vector<1x1x64xf32>
      %84 = vector.shape_cast %83 : vector<1x1x64xf32> to vector<1x64xf32>
      %c0_47 = arith.constant 0 : index
      %c0_48 = arith.constant 0 : index
      %c0_49 = arith.constant 0 : index
      %85 = vector.load %arg10[%c0_47, %c0_48, %c0_49] : memref<1x1x64xf32, #tpu.memory_space<vmem>>, vector<1x1x64xf32>
      %86 = vector.shape_cast %85 : vector<1x1x64xf32> to vector<1x64xf32>
      %cst_50 = arith.constant dense<0.000000e+00> : vector<16xf32>
      %87 = vector.multi_reduction <add>, %82, %cst_50 [1] : vector<16x64xf32> to vector<16xf32>
      %88 = vector.shape_cast %87 : vector<16xf32> to vector<16x1xf32>
      %cst_51 = arith.constant 6.400000e+01 : f32
      %89 = vector.broadcast %cst_51 : f32 to vector<16x1xf32>
      %90 = arith.divf %88, %89 : vector<16x1xf32>
      %91 = vector.broadcast %90 : vector<16x1xf32> to vector<16x64xf32>
      %92 = arith.subf %82, %91 : vector<16x64xf32>
      %93 = arith.mulf %92, %92 : vector<16x64xf32>
      %cst_52 = arith.constant dense<0.000000e+00> : vector<16xf32>
      %94 = vector.multi_reduction <add>, %93, %cst_52 [1] : vector<16x64xf32> to vector<16xf32>
      %95 = vector.shape_cast %94 : vector<16xf32> to vector<16x1xf32>
      %cst_53 = arith.constant 6.400000e+01 : f32
      %96 = vector.broadcast %cst_53 : f32 to vector<16x1xf32>
      %97 = arith.divf %95, %96 : vector<16x1xf32>
      %cst_54 = arith.constant 9.99999974E-6 : f32
      %98 = vector.broadcast %cst_54 : f32 to vector<16x1xf32>
      %99 = arith.addf %97, %98 : vector<16x1xf32>
      %100 = math.rsqrt %99 : vector<16x1xf32>
      %101 = vector.broadcast %100 : vector<16x1xf32> to vector<16x64xf32>
      %102 = arith.mulf %92, %101 : vector<16x64xf32>
      %103 = vector.broadcast %84 : vector<1x64xf32> to vector<16x64xf32>
      %104 = arith.mulf %102, %103 : vector<16x64xf32>
      %105 = vector.broadcast %86 : vector<1x64xf32> to vector<16x64xf32>
      %106 = arith.addf %104, %105 : vector<16x64xf32>
      %c0_55 = arith.constant 0 : index
      %c0_56 = arith.constant 0 : index
      %107 = vector.load %arg20[%c0_55, %c0_56] : memref<16x64xf32, #tpu.memory_space<vmem>>, vector<16x64xf32>
      tpu.vector_store %arg20[%c0_55, %c0_56], %106 {strides = array<i32>} : memref<16x64xf32, #tpu.memory_space<vmem>>, vector<16x64xf32>,
      %cst_57 = arith.constant 0.000000e+00 : f32
      %108 = vector.broadcast %cst_57 : f32 to vector<16x64xf32>
      %c0_58 = arith.constant 0 : index
      %c0_59 = arith.constant 0 : index
      %109 = vector.load %arg21[%c0_58, %c0_59] : memref<16x64xf32, #tpu.memory_space<vmem>>, vector<16x64xf32>
      tpu.vector_store %arg21[%c0_58, %c0_59], %108 {strides = array<i32>} : memref<16x64xf32, #tpu.memory_space<vmem>>, vector<16x64xf32>,
    } else {
    }
    %c0 = arith.constant 0 : index
    %c0_4 = arith.constant 0 : index
    %8 = vector.load %arg20[%c0, %c0_4] : memref<16x64xf32, #tpu.memory_space<vmem>>, vector<16x64xf32>
    %9 = arith.truncf %8 : vector<16x64xf32> to vector<16x64xbf16>
    %c0_5 = arith.constant 0 : index
    %c0_6 = arith.constant 0 : index
    %c0_7 = arith.constant 0 : index
    %10 = vector.load %arg11[%c0_5, %c0_6, %c0_7] : memref<1x64x1024xbf16, #tpu.memory_space<vmem>>, vector<1x64x1024xbf16>
    %11 = vector.shape_cast %10 : vector<1x64x1024xbf16> to vector<64x1024xbf16>
    %cst = arith.constant dense<0.000000e+00> : vector<16x1024xf32>
    %12 = tpu.matmul %9, %11, %cst {dimension_numbers = #tpu.dot_dimension_numbers<[1], [0], [0], [1], [0, 0, 1, 1], [], []>} : vector<16x64xbf16>, vector<64x1024xbf16>, vector<16x1024xf32> -> vector<16x1024xf32>
    %c0_8 = arith.constant 0 : index
    %c0_9 = arith.constant 0 : index
    %c0_10 = arith.constant 0 : index
    %13 = vector.load %arg12[%c0_8, %c0_9, %c0_10] : memref<1x1x1024xf32, #tpu.memory_space<vmem>>, vector<1x1x1024xf32>
    %14 = vector.shape_cast %13 : vector<1x1x1024xf32> to vector<1x1024xf32>
    %15 = vector.broadcast %14 : vector<1x1024xf32> to vector<16x1024xf32>
    %16 = arith.addf %12, %15 : vector<16x1024xf32>
    %cst_11 = arith.constant 0.000000e+00 : f32
    %17 = vector.broadcast %cst_11 : f32 to vector<16x1024xf32>
    %18 = arith.maximumf %16, %17 : vector<16x1024xf32>
    %c0_12 = arith.constant 0 : index
    %c0_13 = arith.constant 0 : index
    %19 = vector.load %arg21[%c0_12, %c0_13] : memref<16x64xf32, #tpu.memory_space<vmem>>, vector<16x64xf32>
    %20 = arith.truncf %18 : vector<16x1024xf32> to vector<16x1024xbf16>
    %c0_14 = arith.constant 0 : index
    %c0_15 = arith.constant 0 : index
    %c0_16 = arith.constant 0 : index
    %21 = vector.load %arg13[%c0_14, %c0_15, %c0_16] : memref<1x1024x64xbf16, #tpu.memory_space<vmem>>, vector<1x1024x64xbf16>
    %22 = vector.shape_cast %21 : vector<1x1024x64xbf16> to vector<1024x64xbf16>
    %cst_17 = arith.constant dense<0.000000e+00> : vector<16x64xf32>
    %23 = tpu.matmul %20, %22, %cst_17 {dimension_numbers = #tpu.dot_dimension_numbers<[1], [0], [0], [1], [0, 0, 1, 1], [], []>} : vector<16x1024xbf16>, vector<1024x64xbf16>, vector<16x64xf32> -> vector<16x64xf32>
    %24 = arith.addf %19, %23 : vector<16x64xf32>
    %c0_18 = arith.constant 0 : index
    %c0_19 = arith.constant 0 : index
    %25 = vector.load %arg21[%c0_18, %c0_19] : memref<16x64xf32, #tpu.memory_space<vmem>>, vector<16x64xf32>
    tpu.vector_store %arg21[%c0_18, %c0_19], %24 {strides = array<i32>} : memref<16x64xf32, #tpu.memory_space<vmem>>, vector<16x64xf32>,
    %c1_i32 = arith.constant 1 : i32
    %26 = arith.cmpi eq, %arg1, %c1_i32 : i32
    %27 = arith.extui %26 : i1 to i32
    %c0_i32_20 = arith.constant 0 : i32
    %28 = arith.cmpi ne, %27, %c0_i32_20 : i32
    scf.if %28 {
      %c0_24 = arith.constant 0 : index
      %c0_25 = arith.constant 0 : index
      %34 = vector.load %arg20[%c0_24, %c0_25] : memref<16x64xf32, #tpu.memory_space<vmem>>, vector<16x64xf32>
      %c0_26 = arith.constant 0 : index
      %c0_27 = arith.constant 0 : index
      %35 = vector.load %arg21[%c0_26, %c0_27] : memref<16x64xf32, #tpu.memory_space<vmem>>, vector<16x64xf32>
      %36 = arith.addf %34, %35 : vector<16x64xf32>
      %c0_28 = arith.constant 0 : index
      %c0_29 = arith.constant 0 : index
      %c0_30 = arith.constant 0 : index
      %37 = vector.load %arg14[%c0_28, %c0_29, %c0_30] : memref<1x1x64xf32, #tpu.memory_space<vmem>>, vector<1x1x64xf32>
      %38 = vector.shape_cast %37 : vector<1x1x64xf32> to vector<1x64xf32>
      %39 = vector.broadcast %38 : vector<1x64xf32> to vector<16x64xf32>
      %40 = arith.addf %36, %39 : vector<16x64xf32>
      %c0_31 = arith.constant 0 : index
      %c0_32 = arith.constant 0 : index
      %c0_33 = arith.constant 0 : index
      %41 = vector.load %arg15[%c0_31, %c0_32, %c0_33] : memref<1x1x64xf32, #tpu.memory_space<vmem>>, vector<1x1x64xf32>
      %42 = vector.shape_cast %41 : vector<1x1x64xf32> to vector<1x64xf32>
      %c0_34 = arith.constant 0 : index
      %c0_35 = arith.constant 0 : index
      %c0_36 = arith.constant 0 : index
      %43 = vector.load %arg16[%c0_34, %c0_35, %c0_36] : memref<1x1x64xf32, #tpu.memory_space<vmem>>, vector<1x1x64xf32>
      %44 = vector.shape_cast %43 : vector<1x1x64xf32> to vector<1x64xf32>
      %cst_37 = arith.constant dense<0.000000e+00> : vector<16xf32>
      %45 = vector.multi_reduction <add>, %40, %cst_37 [1] : vector<16x64xf32> to vector<16xf32>
      %46 = vector.shape_cast %45 : vector<16xf32> to vector<16x1xf32>
      %cst_38 = arith.constant 6.400000e+01 : f32
      %47 = vector.broadcast %cst_38 : f32 to vector<16x1xf32>
      %48 = arith.divf %46, %47 : vector<16x1xf32>
      %49 = vector.broadcast %48 : vector<16x1xf32> to vector<16x64xf32>
      %50 = arith.subf %40, %49 : vector<16x64xf32>
      %51 = arith.mulf %50, %50 : vector<16x64xf32>
      %cst_39 = arith.constant dense<0.000000e+00> : vector<16xf32>
      %52 = vector.multi_reduction <add>, %51, %cst_39 [1] : vector<16x64xf32> to vector<16xf32>
      %53 = vector.shape_cast %52 : vector<16xf32> to vector<16x1xf32>
      %cst_40 = arith.constant 6.400000e+01 : f32
      %54 = vector.broadcast %cst_40 : f32 to vector<16x1xf32>
      %55 = arith.divf %53, %54 : vector<16x1xf32>
      %cst_41 = arith.constant 9.99999974E-6 : f32
      %56 = vector.broadcast %cst_41 : f32 to vector<16x1xf32>
      %57 = arith.addf %55, %56 : vector<16x1xf32>
      %58 = math.rsqrt %57 : vector<16x1xf32>
      %59 = vector.broadcast %58 : vector<16x1xf32> to vector<16x64xf32>
      %60 = arith.mulf %50, %59 : vector<16x64xf32>
      %61 = vector.broadcast %42 : vector<1x64xf32> to vector<16x64xf32>
      %62 = arith.mulf %60, %61 : vector<16x64xf32>
      %63 = vector.broadcast %44 : vector<1x64xf32> to vector<16x64xf32>
      %64 = arith.addf %62, %63 : vector<16x64xf32>
      %c0_42 = arith.constant 0 : index
      %c0_43 = arith.constant 0 : index
      %65 = vector.load %arg20[%c0_42, %c0_43] : memref<16x64xf32, #tpu.memory_space<vmem>>, vector<16x64xf32>
      tpu.vector_store %arg20[%c0_42, %c0_43], %64 {strides = array<i32>} : memref<16x64xf32, #tpu.memory_space<vmem>>, vector<16x64xf32>,
    } else {
    }
    %c1_i32_21 = arith.constant 1 : i32
    %29 = arith.cmpi eq, %arg0, %c1_i32_21 : i32
    %c1_i32_22 = arith.constant 1 : i32
    %30 = arith.cmpi eq, %arg1, %c1_i32_22 : i32
    %31 = arith.andi %29, %30 : i1
    %32 = arith.extui %31 : i1 to i32
    %c0_i32_23 = arith.constant 0 : i32
    %33 = arith.cmpi ne, %32, %c0_i32_23 : i32
    scf.if %33 {
      %c0_24 = arith.constant 0 : index
      %c0_25 = arith.constant 0 : index
      %34 = vector.load %arg20[%c0_24, %c0_25] : memref<16x64xf32, #tpu.memory_space<vmem>>, vector<16x64xf32>
      %35 = vector.shape_cast %34 : vector<16x64xf32> to vector<2x8x64xf32>
      %36 = vector.extract_strided_slice %35 {offsets = [0, 7, 0], sizes = [2, 1, 64], strides = [1, 1, 1]} : vector<2x8x64xf32> to vector<2x1x64xf32>
      %37 = vector.shape_cast %36 : vector<2x1x64xf32> to vector<2x64xf32>
      %38 = arith.truncf %37 : vector<2x64xf32> to vector<2x64xbf16>
      %c0_26 = arith.constant 0 : index
      %c0_27 = arith.constant 0 : index
      %39 = vector.load %arg17[%c0_26, %c0_27] : memref<64x1xbf16, #tpu.memory_space<vmem>>, vector<64x1xbf16>
      %cst_28 = arith.constant dense<0.000000e+00> : vector<2x1xf32>
      %40 = tpu.matmul %38, %39, %cst_28 {dimension_numbers = #tpu.dot_dimension_numbers<[1], [0], [0], [1], [0, 0, 1, 1], [], []>} : vector<2x64xbf16>, vector<64x1xbf16>, vector<2x1xf32> -> vector<2x1xf32>
      %c0_29 = arith.constant 0 : index
      %c0_30 = arith.constant 0 : index
      %41 = vector.load %arg18[%c0_29, %c0_30] : memref<1x1xf32, #tpu.memory_space<vmem>>, vector<1x1xf32>
      %42 = vector.broadcast %41 : vector<1x1xf32> to vector<2x1xf32>
      %43 = arith.addf %40, %42 : vector<2x1xf32>
      %c0_31 = arith.constant 0 : index
      %c0_32 = arith.constant 0 : index
      %44 = vector.load %arg19[%c0_31, %c0_32] : memref<2x1xf32, #tpu.memory_space<vmem>>, vector<2x1xf32>
      tpu.vector_store %arg19[%c0_31, %c0_32], %43 {strides = array<i32>} : memref<2x1xf32, #tpu.memory_space<vmem>>, vector<2x1xf32>,
    } else {
    }
    return
  }
  func.func @transform_0(%arg0: i32, %arg1: i32) -> (i32, i32) {
    %c0_i32 = arith.constant 0 : i32
    %c0_i32_0 = arith.constant 0 : i32
    %c0_i32_1 = arith.constant 0 : i32
    return %c0_i32, %c0_i32_0 : i32, i32
  }
  func.func @transform_1(%arg0: i32, %arg1: i32) -> (i32, i32) {
    %c0_i32 = arith.constant 0 : i32
    %c0_i32_0 = arith.constant 0 : i32
    %c0_i32_1 = arith.constant 0 : i32
    return %c0_i32, %c0_i32_0 : i32, i32
  }
  func.func @transform_2(%arg0: i32, %arg1: i32) -> (i32, i32) {
    %c0_i32 = arith.constant 0 : i32
    %c0_i32_0 = arith.constant 0 : i32
    %c0_i32_1 = arith.constant 0 : i32
    return %c0_i32, %c0_i32_0 : i32, i32
  }
  func.func @transform_3(%arg0: i32, %arg1: i32) -> (i32, i32, i32) {
    %c0_i32 = arith.constant 0 : i32
    %c0_i32_0 = arith.constant 0 : i32
    %c0_i32_1 = arith.constant 0 : i32
    return %arg0, %c0_i32, %c0_i32_0 : i32, i32, i32
  }
  func.func @transform_4(%arg0: i32, %arg1: i32) -> (i32, i32, i32) {
    %c0_i32 = arith.constant 0 : i32
    %c0_i32_0 = arith.constant 0 : i32
    %c0_i32_1 = arith.constant 0 : i32
    return %arg0, %c0_i32, %c0_i32_0 : i32, i32, i32
  }
  func.func @transform_5(%arg0: i32, %arg1: i32) -> (i32, i32, i32) {
    %c0_i32 = arith.constant 0 : i32
    %c0_i32_0 = arith.constant 0 : i32
    %c0_i32_1 = arith.constant 0 : i32
    return %arg0, %c0_i32, %c0_i32_0 : i32, i32, i32
  }
  func.func @transform_6(%arg0: i32, %arg1: i32) -> (i32, i32, i32) {
    %c0_i32 = arith.constant 0 : i32
    %c0_i32_0 = arith.constant 0 : i32
    %c0_i32_1 = arith.constant 0 : i32
    return %arg0, %c0_i32, %c0_i32_0 : i32, i32, i32
  }
  func.func @transform_7(%arg0: i32, %arg1: i32) -> (i32, i32, i32) {
    %c0_i32 = arith.constant 0 : i32
    %c0_i32_0 = arith.constant 0 : i32
    %c0_i32_1 = arith.constant 0 : i32
    return %arg0, %c0_i32, %c0_i32_0 : i32, i32, i32
  }
  func.func @transform_8(%arg0: i32, %arg1: i32) -> (i32, i32, i32) {
    %c0_i32 = arith.constant 0 : i32
    %c0_i32_0 = arith.constant 0 : i32
    %c0_i32_1 = arith.constant 0 : i32
    return %arg0, %c0_i32, %c0_i32_0 : i32, i32, i32
  }
  func.func @transform_9(%arg0: i32, %arg1: i32) -> (i32, i32, i32) {
    %c0_i32 = arith.constant 0 : i32
    %c0_i32_0 = arith.constant 0 : i32
    return %arg0, %c0_i32, %arg1 : i32, i32, i32
  }
  func.func @transform_10(%arg0: i32, %arg1: i32) -> (i32, i32, i32) {
    %c0_i32 = arith.constant 0 : i32
    %c0_i32_0 = arith.constant 0 : i32
    return %arg0, %c0_i32, %arg1 : i32, i32, i32
  }
  func.func @transform_11(%arg0: i32, %arg1: i32) -> (i32, i32, i32) {
    %c0_i32 = arith.constant 0 : i32
    %c0_i32_0 = arith.constant 0 : i32
    return %arg0, %arg1, %c0_i32 : i32, i32, i32
  }
  func.func @transform_12(%arg0: i32, %arg1: i32) -> (i32, i32, i32) {
    %c0_i32 = arith.constant 0 : i32
    %c0_i32_0 = arith.constant 0 : i32
    %c0_i32_1 = arith.constant 0 : i32
    return %arg0, %c0_i32, %c0_i32_0 : i32, i32, i32
  }
  func.func @transform_13(%arg0: i32, %arg1: i32) -> (i32, i32, i32) {
    %c0_i32 = arith.constant 0 : i32
    %c0_i32_0 = arith.constant 0 : i32
    %c0_i32_1 = arith.constant 0 : i32
    return %arg0, %c0_i32, %c0_i32_0 : i32, i32, i32
  }
  func.func @transform_14(%arg0: i32, %arg1: i32) -> (i32, i32, i32) {
    %c0_i32 = arith.constant 0 : i32
    %c0_i32_0 = arith.constant 0 : i32
    %c0_i32_1 = arith.constant 0 : i32
    return %arg0, %c0_i32, %c0_i32_0 : i32, i32, i32
  }
  func.func @transform_15(%arg0: i32, %arg1: i32) -> (i32, i32) {
    %c0_i32 = arith.constant 0 : i32
    %c0_i32_0 = arith.constant 0 : i32
    %c0_i32_1 = arith.constant 0 : i32
    return %c0_i32, %c0_i32_0 : i32, i32
  }
  func.func @transform_16(%arg0: i32, %arg1: i32) -> (i32, i32) {
    %c0_i32 = arith.constant 0 : i32
    %c0_i32_0 = arith.constant 0 : i32
    %c0_i32_1 = arith.constant 0 : i32
    return %c0_i32, %c0_i32_0 : i32, i32
  }
  func.func @transform_17(%arg0: i32, %arg1: i32) -> (i32, i32) {
    %c0_i32 = arith.constant 0 : i32
    %c0_i32_0 = arith.constant 0 : i32
    %c0_i32_1 = arith.constant 0 : i32
    return %c0_i32, %c0_i32_0 : i32, i32
  }
}

</mosaic_0001>

<llo_original>
// kernel: tpu_custom_call.1
$region0: #{tpu_custom_call.1}
  #allocation0 [shape = 'u32[]', space=smem, size = 0x4, offset = 0x4, fixed_abs, tag = 'smem constant byte address 0x4 - core index']
  #allocation1 [shape = 'u32[72,128]{1,0:T(1,128)}', space=vmem, size = 0x9000, scoped, tag = 'internal scratch']
  #allocation2 [shape = 'f32[16,64]{1,0:T(8,128)}', space=vmem, size = 0x2000, scoped, tag = 'scratch operand']
  #allocation3 [shape = 'f32[16,64]{1,0:T(8,128)}', space=vmem, size = 0x2000, scoped, tag = 'scratch operand']
  #allocation4 [shape = 'f32[1,1]{1,0:T(1,128)S(1)}', space=vmem, size = 0x200, scoped, tag = 'scoped memory for tpu_custom_call.1']
  %s0 = inlined_call_operand.vmem [shape: f32[16,8], index: 0, kind: input, shape index: {}]
  %s1 = inlined_call_operand.vmem [shape: bf16[8,64], index: 1, kind: input, shape index: {}]
  %s2 = inlined_call_operand.vmem [shape: f32[1,64], index: 2, kind: input, shape index: {}]
  %s3 = inlined_call_operand.vmem [shape: bf16[2,64,192], index: 3, kind: input, shape index: {}]
  %s4 = inlined_call_operand.vmem [shape: f32[2,1,192], index: 4, kind: input, shape index: {}]
  %s5 = inlined_call_operand.vmem [shape: bf16[2,64,64], index: 5, kind: input, shape index: {}]
  %s6 = inlined_call_operand.vmem [shape: f32[2,1,64], index: 6, kind: input, shape index: {}]
  %s7 = inlined_call_operand.vmem [shape: f32[2,1,64], index: 7, kind: input, shape index: {}]
  %s8 = inlined_call_operand.vmem [shape: f32[2,1,64], index: 8, kind: input, shape index: {}]
  %s9 = inlined_call_operand.vmem [shape: bf16[2,64,2048], index: 9, kind: input, shape index: {}]
  %s10 = inlined_call_operand.vmem [shape: f32[2,1,2048], index: 10, kind: input, shape index: {}]
  %s11 = inlined_call_operand.vmem [shape: bf16[2,2048,64], index: 11, kind: input, shape index: {}]
  %s12 = inlined_call_operand.vmem [shape: f32[2,1,64], index: 12, kind: input, shape index: {}]
  %s13 = inlined_call_operand.vmem [shape: f32[2,1,64], index: 13, kind: input, shape index: {}]
  %s14 = inlined_call_operand.vmem [shape: f32[2,1,64], index: 14, kind: input, shape index: {}]
  %s15 = inlined_call_operand.vmem [shape: bf16[64,1], index: 15, kind: input, shape index: {}]
  %s16 = inlined_call_operand.<no memory space> [shape: f32[1,1], index: 16, kind: input, shape index: {}]
  %s17 = inlined_call_operand.vmem [shape: f32[2,1], index: 17, kind: output, shape index: {}]
  %s18 = sld [smem:[#allocation0]]
  $region140: #{tpu_custom_call.1} parent=0
    _
  %s20 = ssub.s32 1, %s18
  %s21 = scalar_select 0, %s20, %s18
  %v22 = vstv %s16
  %23 = vst [vmem:[#allocation4] sm:$0x1] %v22
  $region1: #{tpu_custom_call.1} parent=0
    #allocation5 [shape = 'u8[262144]{0}', space=vmem, size = 0x40000, scoped, tag = 'input window, operand 9']
    loop: start=0, step=1, limit=6
    $region2: #{tpu_custom_call.1} parent=1 // loop_pre_header
      _
    $region3: #{tpu_custom_call.1} parent=1 // loop_header
      %s25 = sphi 0, %s29
      %p26 = scmp.ge.s32.totalorder %s25, 6
      %s32 = sphi 0, %s44
      %s33 = sphi 0, %s40
      %s34 = sphi 0, %s32
      %s35 = sphi 0, %s33
      %s36 = sphi 0, %s34
      %s37 = sphi 0, %s35
      %s45 = sphi 0, %s45
      %s47 = sphi 0, %s45
      %s48 = sphi 0, %s47
      %s62 = sphi 0, %s48
      %s66 = sphi 0, %s66
      %s68 = sphi 0, %s66
      %s69 = sphi 0, %s68
      %s83 = sphi 0, %s69
      %s87 = sphi 0, %s87
      %s89 = sphi 0, %s87
      %s90 = sphi 0, %s89
      %s104 = sphi 0, %s90
      %s110 = sphi 0, %s112
      %s113 = sphi 0, %s110
      %s114 = sphi 0, %s113
      %s130 = sphi 0, %s114
      %s136 = sphi 0, %s138
      %s139 = sphi 0, %s136
      %s140 = sphi 0, %s139
      %s156 = sphi 0, %s140
      %s162 = sphi 0, %s164
      %s165 = sphi 0, %s162
      %s166 = sphi 0, %s165
      %s182 = sphi 0, %s166
      %s188 = sphi 0, %s190
      %s191 = sphi 0, %s188
      %s192 = sphi 0, %s191
      %s208 = sphi 0, %s192
      %s214 = sphi 0, %s216
      %s217 = sphi 0, %s214
      %s218 = sphi 0, %s217
      %s234 = sphi 0, %s218
      %s240 = sphi 0, %s242
      %s243 = sphi 0, %s240
      %s244 = sphi 0, %s243
      %s260 = sphi 0, %s244
      %s268 = sphi 0, %s270
      %s271 = sphi 0, %s268
      %s272 = sphi 0, %s271
      %s288 = sphi 0, %s272
      %s296 = sphi 0, %s298
      %s299 = sphi 0, %s296
      %s300 = sphi 0, %s299
      %s316 = sphi 0, %s300
      %s324 = sphi 0, %s326
      %s327 = sphi 0, %s324
      %s328 = sphi 0, %s327
      %s344 = sphi 0, %s328
      %s350 = sphi 0, %s352
      %s353 = sphi 0, %s350
      %s354 = sphi 0, %s353
      %s370 = sphi 0, %s354
      %s376 = sphi 0, %s378
      %s379 = sphi 0, %s376
      %s380 = sphi 0, %s379
      %s396 = sphi 0, %s380
      %s402 = sphi 0, %s404
      %s405 = sphi 0, %s402
      %s406 = sphi 0, %s405
      %s422 = sphi 0, %s406
      %s426 = sphi 0, %s426
      %s428 = sphi 0, %s426
      %s429 = sphi 0, %s428
      %s443 = sphi 0, %s429
      %s447 = sphi 0, %s447
      %s449 = sphi 0, %s447
      %s450 = sphi 0, %s449
      %s464 = sphi 0, %s450
      %s468 = sphi 0, %s468
      %s470 = sphi 0, %s468
      %s471 = sphi 0, %s470
      %s485 = sphi 0, %s471
    $region4: #{tpu_custom_call.1} parent=1 // loop_header_branch
      %28 = sbr.rel (%p26) target = $region8
    $region5: #{tpu_custom_call.1} parent=1 // loop_body
      %s30 = ssub.s32 %s25, 1
      %s31 = ssub.s32 %s25, 2
      %s38 = sadd.s32 1, %s33
      %p39 = scmp.ge.s32.totalorder %s38, 2
      %s40 = scalar_select %p39, 0, %s38
      %s41 = sadd.s32 1, %s32
      %s42 = scalar_select %p39, %s41, %s32
      %p43 = scmp.ge.s32.totalorder %s42, 2
      %s44 = scalar_select %p43, 0, %s42
      %s46 = sadd.s32 %s45, 1
      %p49 = scmp.eq.s32.totalorder %s25, 3
      %p50 = scmp.ne.s32.totalorder %s45, %s47
      %p51 = scmp.eq.s32.totalorder %s25, 0
      %p52 = por %p50, %p51
      %p53 = scmp.ne.s32.totalorder %s45, %s47
      %p54 = scmp.eq.s32.totalorder %s30, 3
      %p55 = por %p53, %p54
      %p56 = scmp.ne.s32.totalorder %s47, %s48
      %p57 = scmp.eq.s32.totalorder %s30, 0
      %p58 = por %p56, %p57
      %p59 = scmp.ne.s32.totalorder %s47, %s48
      %p60 = scmp.eq.s32.totalorder %s31, 3
      %p61 = por %p59, %p60
      %p63 = scmp.ne.s32.totalorder %s48, %s62
      %p64 = scmp.eq.s32.totalorder %s31, 0
      %p65 = por %p63, %p64
      %s67 = sadd.s32 %s66, 1
      %p70 = scmp.eq.s32.totalorder %s25, 3
      %p71 = scmp.ne.s32.totalorder %s66, %s68
      %p72 = scmp.eq.s32.totalorder %s25, 0
      %p73 = por %p71, %p72
      %p74 = scmp.ne.s32.totalorder %s66, %s68
      %p75 = scmp.eq.s32.totalorder %s30, 3
      %p76 = por %p74, %p75
      %p77 = scmp.ne.s32.totalorder %s68, %s69
      %p78 = scmp.eq.s32.totalorder %s30, 0
      %p79 = por %p77, %p78
      %p80 = scmp.ne.s32.totalorder %s68, %s69
      %p81 = scmp.eq.s32.totalorder %s31, 3
      %p82 = por %p80, %p81
      %p84 = scmp.ne.s32.totalorder %s69, %s83
      %p85 = scmp.eq.s32.totalorder %s31, 0
      %p86 = por %p84, %p85
      %s88 = sadd.s32 %s87, 1
      %p91 = scmp.eq.s32.totalorder %s25, 3
      %p92 = scmp.ne.s32.totalorder %s87, %s89
      %p93 = scmp.eq.s32.totalorder %s25, 0
      %p94 = por %p92, %p93
      %p95 = scmp.ne.s32.totalorder %s87, %s89
      %p96 = scmp.eq.s32.totalorder %s30, 3
      %p97 = por %p95, %p96
      %p98 = scmp.ne.s32.totalorder %s89, %s90
      %p99 = scmp.eq.s32.totalorder %s30, 0
      %p100 = por %p98, %p99
      %p101 = scmp.ne.s32.totalorder %s89, %s90
      %p102 = scmp.eq.s32.totalorder %s31, 3
      %p103 = por %p101, %p102
      %p105 = scmp.ne.s32.totalorder %s90, %s104
      %p106 = scmp.eq.s32.totalorder %s31, 0
      %p107 = por %p105, %p106
      %s108 = ssub.s32 %s32, %s44
      %p109 = scmp.eq.s32.totalorder %s108, 0
      %s111 = sadd.s32 %s110, 1
      %s112 = scalar_select %p109, %s110, %s111
      %p115 = pneg %p109
      %p116 = scmp.eq.s32.totalorder %s25, 3
      %p117 = por %p115, %p116
      %p118 = scmp.ne.s32.totalorder %s110, %s113
      %p119 = scmp.eq.s32.totalorder %s25, 0
      %p120 = por %p118, %p119
      %p121 = scmp.ne.s32.totalorder %s110, %s113
      %p122 = scmp.eq.s32.totalorder %s30, 3
      %p123 = por %p121, %p122
      %p124 = scmp.ne.s32.totalorder %s113, %s114
      %p125 = scmp.eq.s32.totalorder %s30, 0
      %p126 = por %p124, %p125
      %p127 = scmp.ne.s32.totalorder %s113, %s114
      %p128 = scmp.eq.s32.totalorder %s31, 3
      %p129 = por %p127, %p128
      %p131 = scmp.ne.s32.totalorder %s114, %s130
      %p132 = scmp.eq.s32.totalorder %s31, 0
      %p133 = por %p131, %p132
      %s134 = ssub.s32 %s32, %s44
      %p135 = scmp.eq.s32.totalorder %s134, 0
      %s137 = sadd.s32 %s136, 1
      %s138 = scalar_select %p135, %s136, %s137
      %p141 = pneg %p135
      %p142 = scmp.eq.s32.totalorder %s25, 3
      %p143 = por %p141, %p142
      %p144 = scmp.ne.s32.totalorder %s136, %s139
      %p145 = scmp.eq.s32.totalorder %s25, 0
      %p146 = por %p144, %p145
      %p147 = scmp.ne.s32.totalorder %s136, %s139
      %p148 = scmp.eq.s32.totalorder %s30, 3
      %p149 = por %p147, %p148
      %p150 = scmp.ne.s32.totalorder %s139, %s140
      %p151 = scmp.eq.s32.totalorder %s30, 0
      %p152 = por %p150, %p151
      %p153 = scmp.ne.s32.totalorder %s139, %s140
      %p154 = scmp.eq.s32.totalorder %s31, 3
      %p155 = por %p153, %p154
      %p157 = scmp.ne.s32.totalorder %s140, %s156
      %p158 = scmp.eq.s32.totalorder %s31, 0
      %p159 = por %p157, %p158
      %s160 = ssub.s32 %s32, %s44
      %p161 = scmp.eq.s32.totalorder %s160, 0
      %s163 = sadd.s32 %s162, 1
      %s164 = scalar_select %p161, %s162, %s163
      %p167 = pneg %p161
      %p168 = scmp.eq.s32.totalorder %s25, 3
      %p169 = por %p167, %p168
      %p170 = scmp.ne.s32.totalorder %s162, %s165
      %p171 = scmp.eq.s32.totalorder %s25, 0
      %p172 = por %p170, %p171
      %p173 = scmp.ne.s32.totalorder %s162, %s165
      %p174 = scmp.eq.s32.totalorder %s30, 3
      %p175 = por %p173, %p174
      %p176 = scmp.ne.s32.totalorder %s165, %s166
      %p177 = scmp.eq.s32.totalorder %s30, 0
      %p178 = por %p176, %p177
      %p179 = scmp.ne.s32.totalorder %s165, %s166
      %p180 = scmp.eq.s32.totalorder %s31, 3
      %p181 = por %p179, %p180
      %p183 = scmp.ne.s32.totalorder %s166, %s182
      %p184 = scmp.eq.s32.totalorder %s31, 0
      %p185 = por %p183, %p184
      %s186 = ssub.s32 %s32, %s44
      %p187 = scmp.eq.s32.totalorder %s186, 0
      %s189 = sadd.s32 %s188, 1
      %s190 = scalar_select %p187, %s188, %s189
      %p193 = pneg %p187
      %p194 = scmp.eq.s32.totalorder %s25, 3
      %p195 = por %p193, %p194
      %p196 = scmp.ne.s32.totalorder %s188, %s191
      %p197 = scmp.eq.s32.totalorder %s25, 0
      %p198 = por %p196, %p197
      %p199 = scmp.ne.s32.totalorder %s188, %s191
      %p200 = scmp.eq.s32.totalorder %s30, 3
      %p201 = por %p199, %p200
      %p202 = scmp.ne.s32.totalorder %s191, %s192
      %p203 = scmp.eq.s32.totalorder %s30, 0
      %p204 = por %p202, %p203
      %p205 = scmp.ne.s32.totalorder %s191, %s192
      %p206 = scmp.eq.s32.totalorder %s31, 3
      %p207 = por %p205, %p206
      %p209 = scmp.ne.s32.totalorder %s192, %s208
      %p210 = scmp.eq.s32.totalorder %s31, 0
      %p211 = por %p209, %p210
      %s212 = ssub.s32 %s32, %s44
      %p213 = scmp.eq.s32.totalorder %s212, 0
      %s215 = sadd.s32 %s214, 1
      %s216 = scalar_select %p213, %s214, %s215
      %p219 = pneg %p213
      %p220 = scmp.eq.s32.totalorder %s25, 3
      %p221 = por %p219, %p220
      %p222 = scmp.ne.s32.totalorder %s214, %s217
      %p223 = scmp.eq.s32.totalorder %s25, 0
      %p224 = por %p222, %p223
      %p225 = scmp.ne.s32.totalorder %s214, %s217
      %p226 = scmp.eq.s32.totalorder %s30, 3
      %p227 = por %p225, %p226
      %p228 = scmp.ne.s32.totalorder %s217, %s218
      %p229 = scmp.eq.s32.totalorder %s30, 0
      %p230 = por %p228, %p229
      %p231 = scmp.ne.s32.totalorder %s217, %s218
      %p232 = scmp.eq.s32.totalorder %s31, 3
      %p233 = por %p231, %p232
      %p235 = scmp.ne.s32.totalorder %s218, %s234
      %p236 = scmp.eq.s32.totalorder %s31, 0
      %p237 = por %p235, %p236
      %s238 = ssub.s32 %s32, %s44
      %p239 = scmp.eq.s32.totalorder %s238, 0
      %s241 = sadd.s32 %s240, 1
      %s242 = scalar_select %p239, %s240, %s241
      %p245 = pneg %p239
      %p246 = scmp.eq.s32.totalorder %s25, 3
      %p247 = por %p245, %p246
      %p248 = scmp.ne.s32.totalorder %s240, %s243
      %p249 = scmp.eq.s32.totalorder %s25, 0
      %p250 = por %p248, %p249
      %p251 = scmp.ne.s32.totalorder %s240, %s243
      %p252 = scmp.eq.s32.totalorder %s30, 3
      %p253 = por %p251, %p252
      %p254 = scmp.ne.s32.totalorder %s243, %s244
      %p255 = scmp.eq.s32.totalorder %s30, 0
      %p256 = por %p254, %p255
      %p257 = scmp.ne.s32.totalorder %s243, %s244
      %p258 = scmp.eq.s32.totalorder %s31, 3
      %p259 = por %p257, %p258
      %p261 = scmp.ne.s32.totalorder %s244, %s260
      %p262 = scmp.eq.s32.totalorder %s31, 0
      %p263 = por %p261, %p262
      %s264 = ssub.s32 %s32, %s44
      %s265 = ssub.s32 %s33, %s40
      %s266 = sor.u32 %s264, %s265
      %p267 = scmp.eq.s32.totalorder %s266, 0
      %s269 = sadd.s32 %s268, 1
      %s270 = scalar_select %p267, %s268, %s269
      %p273 = pneg %p267
      %p274 = scmp.eq.s32.totalorder %s25, 3
      %p275 = por %p273, %p274
      %p276 = scmp.ne.s32.totalorder %s268, %s271
      %p277 = scmp.eq.s32.totalorder %s25, 0
      %p278 = por %p276, %p277
      %p279 = scmp.ne.s32.totalorder %s268, %s271
      %p280 = scmp.eq.s32.totalorder %s30, 3
      %p281 = por %p279, %p280
      %p282 = scmp.ne.s32.totalorder %s271, %s272
      %p283 = scmp.eq.s32.totalorder %s30, 0
      %p284 = por %p282, %p283
      %p285 = scmp.ne.s32.totalorder %s271, %s272
      %p286 = scmp.eq.s32.totalorder %s31, 3
      %p287 = por %p285, %p286
      %p289 = scmp.ne.s32.totalorder %s272, %s288
      %p290 = scmp.eq.s32.totalorder %s31, 0
      %p291 = por %p289, %p290
      %s292 = ssub.s32 %s32, %s44
      %s293 = ssub.s32 %s33, %s40
      %s294 = sor.u32 %s292, %s293
      %p295 = scmp.eq.s32.totalorder %s294, 0
      %s297 = sadd.s32 %s296, 1
      %s298 = scalar_select %p295, %s296, %s297
      %p301 = pneg %p295
      %p302 = scmp.eq.s32.totalorder %s25, 3
      %p303 = por %p301, %p302
      %p304 = scmp.ne.s32.totalorder %s296, %s299
      %p305 = scmp.eq.s32.totalorder %s25, 0
      %p306 = por %p304, %p305
      %p307 = scmp.ne.s32.totalorder %s296, %s299
      %p308 = scmp.eq.s32.totalorder %s30, 3
      %p309 = por %p307, %p308
      %p310 = scmp.ne.s32.totalorder %s299, %s300
      %p311 = scmp.eq.s32.totalorder %s30, 0
      %p312 = por %p310, %p311
      %p313 = scmp.ne.s32.totalorder %s299, %s300
      %p314 = scmp.eq.s32.totalorder %s31, 3
      %p315 = por %p313, %p314
      %p317 = scmp.ne.s32.totalorder %s300, %s316
      %p318 = scmp.eq.s32.totalorder %s31, 0
      %p319 = por %p317, %p318
      %s320 = ssub.s32 %s32, %s44
      %s321 = ssub.s32 %s33, %s40
      %s322 = sor.u32 %s320, %s321
      %p323 = scmp.eq.s32.totalorder %s322, 0
      %s325 = sadd.s32 %s324, 1
      %s326 = scalar_select %p323, %s324, %s325
      %p329 = pneg %p323
      %p330 = scmp.eq.s32.totalorder %s25, 3
      %p331 = por %p329, %p330
      %p332 = scmp.ne.s32.totalorder %s324, %s327
      %p333 = scmp.eq.s32.totalorder %s25, 0
      %p334 = por %p332, %p333
      %p335 = scmp.ne.s32.totalorder %s324, %s327
      %p336 = scmp.eq.s32.totalorder %s30, 3
      %p337 = por %p335, %p336
      %p338 = scmp.ne.s32.totalorder %s327, %s328
      %p339 = scmp.eq.s32.totalorder %s30, 0
      %p340 = por %p338, %p339
      %p341 = scmp.ne.s32.totalorder %s327, %s328
      %p342 = scmp.eq.s32.totalorder %s31, 3
      %p343 = por %p341, %p342
      %p345 = scmp.ne.s32.totalorder %s328, %s344
      %p346 = scmp.eq.s32.totalorder %s31, 0
      %p347 = por %p345, %p346
      %s348 = ssub.s32 %s32, %s44
      %p349 = scmp.eq.s32.totalorder %s348, 0
      %s351 = sadd.s32 %s350, 1
      %s352 = scalar_select %p349, %s350, %s351
      %p355 = pneg %p349
      %p356 = scmp.eq.s32.totalorder %s25, 3
      %p357 = por %p355, %p356
      %p358 = scmp.ne.s32.totalorder %s350, %s353
      %p359 = scmp.eq.s32.totalorder %s25, 0
      %p360 = por %p358, %p359
      %p361 = scmp.ne.s32.totalorder %s350, %s353
      %p362 = scmp.eq.s32.totalorder %s30, 3
      %p363 = por %p361, %p362
      %p364 = scmp.ne.s32.totalorder %s353, %s354
      %p365 = scmp.eq.s32.totalorder %s30, 0
      %p366 = por %p364, %p365
      %p367 = scmp.ne.s32.totalorder %s353, %s354
      %p368 = scmp.eq.s32.totalorder %s31, 3
      %p369 = por %p367, %p368
      %p371 = scmp.ne.s32.totalorder %s354, %s370
      %p372 = scmp.eq.s32.totalorder %s31, 0
      %p373 = por %p371, %p372
      %s374 = ssub.s32 %s32, %s44
      %p375 = scmp.eq.s32.totalorder %s374, 0
      %s377 = sadd.s32 %s376, 1
      %s378 = scalar_select %p375, %s376, %s377
      %p381 = pneg %p375
      %p382 = scmp.eq.s32.totalorder %s25, 3
      %p383 = por %p381, %p382
      %p384 = scmp.ne.s32.totalorder %s376, %s379
      %p385 = scmp.eq.s32.totalorder %s25, 0
      %p386 = por %p384, %p385
      %p387 = scmp.ne.s32.totalorder %s376, %s379
      %p388 = scmp.eq.s32.totalorder %s30, 3
      %p389 = por %p387, %p388
      %p390 = scmp.ne.s32.totalorder %s379, %s380
      %p391 = scmp.eq.s32.totalorder %s30, 0
      %p392 = por %p390, %p391
      %p393 = scmp.ne.s32.totalorder %s379, %s380
      %p394 = scmp.eq.s32.totalorder %s31, 3
      %p395 = por %p393, %p394
      %p397 = scmp.ne.s32.totalorder %s380, %s396
      %p398 = scmp.eq.s32.totalorder %s31, 0
      %p399 = por %p397, %p398
      %s400 = ssub.s32 %s32, %s44
      %p401 = scmp.eq.s32.totalorder %s400, 0
      %s403 = sadd.s32 %s402, 1
      %s404 = scalar_select %p401, %s402, %s403
      %p407 = pneg %p401
      %p408 = scmp.eq.s32.totalorder %s25, 3
      %p409 = por %p407, %p408
      %p410 = scmp.ne.s32.totalorder %s402, %s405
      %p411 = scmp.eq.s32.totalorder %s25, 0
      %p412 = por %p410, %p411
      %p413 = scmp.ne.s32.totalorder %s402, %s405
      %p414 = scmp.eq.s32.totalorder %s30, 3
      %p415 = por %p413, %p414
      %p416 = scmp.ne.s32.totalorder %s405, %s406
      %p417 = scmp.eq.s32.totalorder %s30, 0
      %p418 = por %p416, %p417
      %p419 = scmp.ne.s32.totalorder %s405, %s406
      %p420 = scmp.eq.s32.totalorder %s31, 3
      %p421 = por %p419, %p420
      %p423 = scmp.ne.s32.totalorder %s406, %s422
      %p424 = scmp.eq.s32.totalorder %s31, 0
      %p425 = por %p423, %p424
      %s427 = sadd.s32 %s426, 1
      %p430 = scmp.eq.s32.totalorder %s25, 3
      %p431 = scmp.ne.s32.totalorder %s426, %s428
      %p432 = scmp.eq.s32.totalorder %s25, 0
      %p433 = por %p431, %p432
      %p434 = scmp.ne.s32.totalorder %s426, %s428
      %p435 = scmp.eq.s32.totalorder %s30, 3
      %p436 = por %p434, %p435
      %p437 = scmp.ne.s32.totalorder %s428, %s429
      %p438 = scmp.eq.s32.totalorder %s30, 0
      %p439 = por %p437, %p438
      %p440 = scmp.ne.s32.totalorder %s428, %s429
      %p441 = scmp.eq.s32.totalorder %s31, 3
      %p442 = por %p440, %p441
      %p444 = scmp.ne.s32.totalorder %s429, %s443
      %p445 = scmp.eq.s32.totalorder %s31, 0
      %p446 = por %p444, %p445
      %s448 = sadd.s32 %s447, 1
      %p451 = scmp.eq.s32.totalorder %s25, 3
      %p452 = scmp.ne.s32.totalorder %s447, %s449
      %p453 = scmp.eq.s32.totalorder %s25, 0
      %p454 = por %p452, %p453
      %p455 = scmp.ne.s32.totalorder %s447, %s449
      %p456 = scmp.eq.s32.totalorder %s30, 3
      %p457 = por %p455, %p456
      %p458 = scmp.ne.s32.totalorder %s449, %s450
      %p459 = scmp.eq.s32.totalorder %s30, 0
      %p460 = por %p458, %p459
      %p461 = scmp.ne.s32.totalorder %s449, %s450
      %p462 = scmp.eq.s32.totalorder %s31, 3
      %p463 = por %p461, %p462
      %p465 = scmp.ne.s32.totalorder %s450, %s464
      %p466 = scmp.eq.s32.totalorder %s31, 0
      %p467 = por %p465, %p466
      %s469 = sadd.s32 %s468, 1
      %p472 = scmp.eq.s32.totalorder %s25, 3
      %p473 = scmp.ne.s32.totalorder %s468, %s470
      %p474 = scmp.eq.s32.totalorder %s25, 0
      %p475 = por %p473, %p474
      %p476 = scmp.ne.s32.totalorder %s468, %s470
      %p477 = scmp.eq.s32.totalorder %s30, 3
      %p478 = por %p476, %p477
      %p479 = scmp.ne.s32.totalorder %s470, %s471
      %p480 = scmp.eq.s32.totalorder %s30, 0
      %p481 = por %p479, %p480
      %p482 = scmp.ne.s32.totalorder %s470, %s471
      %p483 = scmp.eq.s32.totalorder %s31, 3
      %p484 = por %p482, %p483
      %p486 = scmp.ne.s32.totalorder %s471, %s485
      %p487 = scmp.eq.s32.totalorder %s31, 0
      %p488 = por %p486, %p487
      %p489 = scmp.le.s32.totalorder 1, %s25
      %p490 = scmp.lt.s32.totalorder %s25, 5
      %p491 = pnand %p489, %p490
      %p492 = pneg %p491
      // Predicated region
      $region9: #{tpu_custom_call.1} parent=5 // pred_check
        _
      $region10: #{tpu_custom_call.1} parent=5 // pred_check_branch
        %494 = sbr.rel (%p491) target = $region12
      $region11: #{tpu_custom_call.1} parent=5 // pred_region
        %s495 = ssub.s32 %s25, 1
        // Predicated region
        $region13: #{tpu_custom_call.1} parent=11 // pred_check
          %p496 = pneg %p58
        $region14: #{tpu_custom_call.1} parent=11 // pred_check_branch
          %498 = sbr.rel (%p496) target = $region16
        $region15: #{tpu_custom_call.1} parent=11 // pred_region
          _
        $region16: #{tpu_custom_call.1} parent=11 // pred_fallthru
          _
        // Predicated region
        $region17: #{tpu_custom_call.1} parent=11 // pred_check
          %p499 = pneg %p79
        $region18: #{tpu_custom_call.1} parent=11 // pred_check_branch
          %501 = sbr.rel (%p499) target = $region20
        $region19: #{tpu_custom_call.1} parent=11 // pred_region
          _
        $region20: #{tpu_custom_call.1} parent=11 // pred_fallthru
          _
        // Predicated region
        $region21: #{tpu_custom_call.1} parent=11 // pred_check
          %p502 = pneg %p100
        $region22: #{tpu_custom_call.1} parent=11 // pred_check_branch
          %504 = sbr.rel (%p502) target = $region24
        $region23: #{tpu_custom_call.1} parent=11 // pred_region
          _
        $region24: #{tpu_custom_call.1} parent=11 // pred_fallthru
          _
        // Predicated region
        $region25: #{tpu_custom_call.1} parent=11 // pred_check
          %p505 = pneg %p439
        $region26: #{tpu_custom_call.1} parent=11 // pred_check_branch
          %507 = sbr.rel (%p505) target = $region28
        $region27: #{tpu_custom_call.1} parent=11 // pred_region
          _
        $region28: #{tpu_custom_call.1} parent=11 // pred_fallthru
          _
        // Predicated region
        $region29: #{tpu_custom_call.1} parent=11 // pred_check
          %p508 = pneg %p460
        $region30: #{tpu_custom_call.1} parent=11 // pred_check_branch
          %510 = sbr.rel (%p508) target = $region32
        $region31: #{tpu_custom_call.1} parent=11 // pred_region
          _
        $region32: #{tpu_custom_call.1} parent=11 // pred_fallthru
          _
      $region12: #{tpu_custom_call.1} parent=5 // pred_fallthru
        _
      %p511 = scmp.lt.s32.totalorder %s25, 4
      // Predicated region
      $region33: #{tpu_custom_call.1} parent=5 // pred_check
        %p512 = pneg %p511
      $region34: #{tpu_custom_call.1} parent=5 // pred_check_branch
        %514 = sbr.rel (%p512) target = $region36
      $region35: #{tpu_custom_call.1} parent=5 // pred_region
        // Predicated region
        $region37: #{tpu_custom_call.1} parent=35 // pred_check
          %p515 = pneg %p120
        $region38: #{tpu_custom_call.1} parent=35 // pred_check_branch
          %517 = sbr.rel (%p515) target = $region40
        $region39: #{tpu_custom_call.1} parent=35 // pred_region
          %p518 = scmp.lt.s32.totalorder %s32, 1
          %s519 = scalar_select %p518, %s32, 1
          %s520 = smul.addr %s519, 16
          %s521 = smul.addr %s520, 4
          %s522 = scalar_lea.vmem %s3, %s521
        $region40: #{tpu_custom_call.1} parent=35 // pred_fallthru
          _
        // Predicated region
        $region41: #{tpu_custom_call.1} parent=35 // pred_check
          %p523 = pneg %p146
        $region42: #{tpu_custom_call.1} parent=35 // pred_check_branch
          %525 = sbr.rel (%p523) target = $region44
        $region43: #{tpu_custom_call.1} parent=35 // pred_region
          %p526 = scmp.lt.s32.totalorder %s32, 1
          %s527 = scalar_select %p526, %s32, 1
          %s528 = smul.addr %s527, 2
          %s529 = scalar_lea.vmem %s4, %s528
        $region44: #{tpu_custom_call.1} parent=35 // pred_fallthru
          _
        // Predicated region
        $region45: #{tpu_custom_call.1} parent=35 // pred_check
          %p530 = pneg %p172
        $region46: #{tpu_custom_call.1} parent=35 // pred_check_branch
          %532 = sbr.rel (%p530) target = $region48
        $region47: #{tpu_custom_call.1} parent=35 // pred_region
          %p533 = scmp.lt.s32.totalorder %s32, 1
          %s534 = scalar_select %p533, %s32, 1
          %s535 = smul.addr %s534, 8
          %s536 = smul.addr %s535, 4
          %s537 = scalar_lea.vmem %s5, %s536
        $region48: #{tpu_custom_call.1} parent=35 // pred_fallthru
          _
        // Predicated region
        $region49: #{tpu_custom_call.1} parent=35 // pred_check
          %p538 = pneg %p198
        $region50: #{tpu_custom_call.1} parent=35 // pred_check_branch
          %540 = sbr.rel (%p538) target = $region52
        $region51: #{tpu_custom_call.1} parent=35 // pred_region
          %p541 = scmp.lt.s32.totalorder %s32, 1
          %s542 = scalar_select %p541, %s32, 1
          %s543 = scalar_lea.vmem %s6, %s542
        $region52: #{tpu_custom_call.1} parent=35 // pred_fallthru
          _
        // Predicated region
        $region53: #{tpu_custom_call.1} parent=35 // pred_check
          %p544 = pneg %p224
        $region54: #{tpu_custom_call.1} parent=35 // pred_check_branch
          %546 = sbr.rel (%p544) target = $region56
        $region55: #{tpu_custom_call.1} parent=35 // pred_region
          %p547 = scmp.lt.s32.totalorder %s32, 1
          %s548 = scalar_select %p547, %s32, 1
          %s549 = scalar_lea.vmem %s7, %s548
        $region56: #{tpu_custom_call.1} parent=35 // pred_fallthru
          _
        // Predicated region
        $region57: #{tpu_custom_call.1} parent=35 // pred_check
          %p550 = pneg %p250
        $region58: #{tpu_custom_call.1} parent=35 // pred_check_branch
          %552 = sbr.rel (%p550) target = $region60
        $region59: #{tpu_custom_call.1} parent=35 // pred_region
          %p553 = scmp.lt.s32.totalorder %s32, 1
          %s554 = scalar_select %p553, %s32, 1
          %s555 = scalar_lea.vmem %s8, %s554
        $region60: #{tpu_custom_call.1} parent=35 // pred_fallthru
          _
        // Predicated region
        $region61: #{tpu_custom_call.1} parent=35 // pred_check
          %p556 = pneg %p278
        $region62: #{tpu_custom_call.1} parent=35 // pred_check_branch
          %558 = sbr.rel (%p556) target = $region64
        $region63: #{tpu_custom_call.1} parent=35 // pred_region
          %s559 = sand.u32 %s268, 1
          %s560 = sand.u32 %s268, 1
          %s561 = smul.addr %s560, 256
          %s562 = scalar_lea.vmem [#allocation5], %s561
          %s563 = smul.u32 8, %s33
          %s564 = smul.addr %s32, 128
          %s565 = sadd.s32 %s563, %s564
          %s566 = smul.addr %s565, 4
          %s567 = scalar_lea.vmem %s9, %s566
          // Predicated region
          $region65: #{tpu_custom_call.1} parent=63 // pred_check
            _
          $region66: #{tpu_custom_call.1} parent=63 // pred_check_branch
            %569 = sbr.rel (0) target = $region68
          $region67: #{tpu_custom_call.1} parent=63 // pred_region
            // Predicated region
            $region69: #{tpu_custom_call.1} parent=67 // pred_check
              _
            $region70: #{tpu_custom_call.1} parent=67 // pred_check_branch
              %571 = sbr.rel (0) target = $region72
            $region71: #{tpu_custom_call.1} parent=67 // pred_region
              loop: start=0, step=1, limit=1
              $region73: #{tpu_custom_call.1} parent=71 // loop_pre_header
                _
              $region74: #{tpu_custom_call.1} parent=71 // loop_header
                %s573 = sphi 0, %s577
                %p574 = scmp.ge.s32.totalorder %s573, 1
                %s578 = sphi %s567, %s567
                %s579 = sphi %s562, %s562
              $region75: #{tpu_custom_call.1} parent=71 // loop_header_branch
                %576 = sbr.rel (%p574) target = $region79
              $region76: #{tpu_custom_call.1} parent=71 // loop_body
                %v580 = vld [vmem:[%s578] sm:$0xff]
                %581 = vst [vmem:[%s579] sm:$0xff] %v580
                %v582 = vld [vmem:[%s578 + $0x8] sm:$0xff]
                %583 = vst [vmem:[%s579 + $0x8] sm:$0xff] %v582
                %v584 = vld [vmem:[%s578 + $0x10] sm:$0xff]
                %585 = vst [vmem:[%s579 + $0x10] sm:$0xff] %v584
                %v586 = vld [vmem:[%s578 + $0x18] sm:$0xff]
                %587 = vst [vmem:[%s579 + $0x18] sm:$0xff] %v586
                %v588 = vld [vmem:[%s578 + $0x40] sm:$0xff]
                %589 = vst [vmem:[%s579 + $0x20] sm:$0xff] %v588
                %v590 = vld [vmem:[%s578 + $0x48] sm:$0xff]
                %591 = vst [vmem:[%s579 + $0x28] sm:$0xff] %v590
                %v592 = vld [vmem:[%s578 + $0x50] sm:$0xff]
                %593 = vst [vmem:[%s579 + $0x30] sm:$0xff] %v592
                %v594 = vld [vmem:[%s578 + $0x58] sm:$0xff]
                %595 = vst [vmem:[%s579 + $0x38] sm:$0xff] %v594
                %v596 = vld [vmem:[%s578 + $0x80] sm:$0xff]
                %597 = vst [vmem:[%s579 + $0x40] sm:$0xff] %v596
                %v598 = vld [vmem:[%s578 + $0x88] sm:$0xff]
                %599 = vst [vmem:[%s579 + $0x48] sm:$0xff] %v598
                %v600 = vld [vmem:[%s578 + $0x90] sm:$0xff]
                %601 = vst [vmem:[%s579 + $0x50] sm:$0xff] %v600
                %v602 = vld [vmem:[%s578 + $0x98] sm:$0xff]
                %603 = vst [vmem:[%s579 + $0x58] sm:$0xff] %v602
                %v604 = vld [vmem:[%s578 + $0xc0] sm:$0xff]
                %605 = vst [vmem:[%s579 + $0x60] sm:$0xff] %v604
                %v606 = vld [vmem:[%s578 + $0xc8] sm:$0xff]
                %607 = vst [vmem:[%s579 + $0x68] sm:$0xff] %v606
                %v608 = vld [vmem:[%s578 + $0xd0] sm:$0xff]
                %609 = vst [vmem:[%s579 + $0x70] sm:$0xff] %v608
                %v610 = vld [vmem:[%s578 + $0xd8] sm:$0xff]
                %611 = vst [vmem:[%s579 + $0x78] sm:$0xff] %v610
                %v612 = vld [vmem:[%s578 + $0x100] sm:$0xff]
                %613 = vst [vmem:[%s579 + $0x80] sm:$0xff] %v612
                %v614 = vld [vmem:[%s578 + $0x108] sm:$0xff]
                %615 = vst [vmem:[%s579 + $0x88] sm:$0xff] %v614
                %v616 = vld [vmem:[%s578 + $0x110] sm:$0xff]
                %617 = vst [vmem:[%s579 + $0x90] sm:$0xff] %v616
                %v618 = vld [vmem:[%s578 + $0x118] sm:$0xff]
                %619 = vst [vmem:[%s579 + $0x98] sm:$0xff] %v618
                %v620 = vld [vmem:[%s578 + $0x140] sm:$0xff]
                %621 = vst [vmem:[%s579 + $0xa0] sm:$0xff] %v620
                %v622 = vld [vmem:[%s578 + $0x148] sm:$0xff]
                %623 = vst [vmem:[%s579 + $0xa8] sm:$0xff] %v622
                %v624 = vld [vmem:[%s578 + $0x150] sm:$0xff]
                %625 = vst [vmem:[%s579 + $0xb0] sm:$0xff] %v624
                %v626 = vld [vmem:[%s578 + $0x158] sm:$0xff]
                %627 = vst [vmem:[%s579 + $0xb8] sm:$0xff] %v626
                %v628 = vld [vmem:[%s578 + $0x180] sm:$0xff]
                %629 = vst [vmem:[%s579 + $0xc0] sm:$0xff] %v628
                %v630 = vld [vmem:[%s578 + $0x188] sm:$0xff]
                %631 = vst [vmem:[%s579 + $0xc8] sm:$0xff] %v630
                %v632 = vld [vmem:[%s578 + $0x190] sm:$0xff]
                %633 = vst [vmem:[%s579 + $0xd0] sm:$0xff] %v632
                %v634 = vld [vmem:[%s578 + $0x198] sm:$0xff]
                %635 = vst [vmem:[%s579 + $0xd8] sm:$0xff] %v634
                %v636 = vld [vmem:[%s578 + $0x1c0] sm:$0xff]
                %637 = vst [vmem:[%s579 + $0xe0] sm:$0xff] %v636
                %v638 = vld [vmem:[%s578 + $0x1c8] sm:$0xff]
                %639 = vst [vmem:[%s579 + $0xe8] sm:$0xff] %v638
                %v640 = vld [vmem:[%s578 + $0x1d0] sm:$0xff]
                %641 = vst [vmem:[%s579 + $0xf0] sm:$0xff] %v640
                %v642 = vld [vmem:[%s578 + $0x1d8] sm:$0xff]
                %643 = vst [vmem:[%s579 + $0xf8] sm:$0xff] %v642
              $region77: #{tpu_custom_call.1} parent=71 // loop_footer
                %s577 = sadd.s32 1, %s573
              $region78: #{tpu_custom_call.1} parent=71 // loop_footer_branch
                %572 = sbr.rel target = $region74
              $region79: #{tpu_custom_call.1} parent=71 // loop_exit
                _
            $region72: #{tpu_custom_call.1} parent=67 // pred_fallthru
              _
            // Predicated region
            $region80: #{tpu_custom_call.1} parent=67 // pred_check
              _
            $region81: #{tpu_custom_call.1} parent=67 // pred_check_branch
              %645 = sbr.rel target = $region83
            $region82: #{tpu_custom_call.1} parent=67 // pred_region
              _
            $region83: #{tpu_custom_call.1} parent=67 // pred_fallthru
              _
          $region68: #{tpu_custom_call.1} parent=63 // pred_fallthru
            _
          %646 = vnop
        $region64: #{tpu_custom_call.1} parent=35 // pred_fallthru
          _
        // Predicated region
        $region84: #{tpu_custom_call.1} parent=35 // pred_check
          %p647 = pneg %p306
        $region85: #{tpu_custom_call.1} parent=35 // pred_check_branch
          %649 = sbr.rel (%p647) target = $region87
        $region86: #{tpu_custom_call.1} parent=35 // pred_region
          %s650 = smul.u32 8, %s33
          %p651 = scmp.lt.s32.totalorder %s32, 1
          %s652 = scalar_select %p651, %s32, 1
          %p653 = scmp.lt.s32.totalorder %s650, 15
          %s654 = scalar_select %p653, %s650, 15
          %s655 = smul.addr %s652, 16
          %s656 = sadd.s32 %s654, %s655
          %s657 = scalar_lea.vmem %s10, %s656
          %s658 = smul.u32 8, %s33
        $region87: #{tpu_custom_call.1} parent=35 // pred_fallthru
          _
        // Predicated region
        $region88: #{tpu_custom_call.1} parent=35 // pred_check
          %p659 = pneg %p334
        $region89: #{tpu_custom_call.1} parent=35 // pred_check_branch
          %661 = sbr.rel (%p659) target = $region91
        $region90: #{tpu_custom_call.1} parent=35 // pred_region
          %s662 = smul.u32 128, %s33
          %p663 = scmp.lt.s32.totalorder %s32, 1
          %s664 = scalar_select %p663, %s32, 1
          %p665 = scmp.lt.s32.totalorder %s662, 255
          %s666 = scalar_select %p665, %s662, 255
          %s667 = smul.addr %s664, 256
          %s668 = sadd.s32 %s666, %s667
          %s669 = smul.addr %s668, 4
          %s670 = scalar_lea.vmem %s11, %s669
          %s671 = smul.u32 128, %s33
        $region91: #{tpu_custom_call.1} parent=35 // pred_fallthru
          _
        // Predicated region
        $region92: #{tpu_custom_call.1} parent=35 // pred_check
          %p672 = pneg %p360
        $region93: #{tpu_custom_call.1} parent=35 // pred_check_branch
          %674 = sbr.rel (%p672) target = $region95
        $region94: #{tpu_custom_call.1} parent=35 // pred_region
          %p675 = scmp.lt.s32.totalorder %s32, 1
          %s676 = scalar_select %p675, %s32, 1
          %s677 = scalar_lea.vmem %s12, %s676
        $region95: #{tpu_custom_call.1} parent=35 // pred_fallthru
          _
        // Predicated region
        $region96: #{tpu_custom_call.1} parent=35 // pred_check
          %p678 = pneg %p386
        $region97: #{tpu_custom_call.1} parent=35 // pred_check_branch
          %680 = sbr.rel (%p678) target = $region99
        $region98: #{tpu_custom_call.1} parent=35 // pred_region
          %p681 = scmp.lt.s32.totalorder %s32, 1
          %s682 = scalar_select %p681, %s32, 1
          %s683 = scalar_lea.vmem %s13, %s682
        $region99: #{tpu_custom_call.1} parent=35 // pred_fallthru
          _
        // Predicated region
        $region100: #{tpu_custom_call.1} parent=35 // pred_check
          %p684 = pneg %p412
        $region101: #{tpu_custom_call.1} parent=35 // pred_check_branch
          %686 = sbr.rel (%p684) target = $region103
        $region102: #{tpu_custom_call.1} parent=35 // pred_region
          %p687 = scmp.lt.s32.totalorder %s32, 1
          %s688 = scalar_select %p687, %s32, 1
          %s689 = scalar_lea.vmem %s14, %s688
        $region103: #{tpu_custom_call.1} parent=35 // pred_fallthru
          _
      $region36: #{tpu_custom_call.1} parent=5 // pred_fallthru
        _
      %p690 = scmp.le.s32.totalorder 1, %s25
      %p691 = scmp.lt.s32.totalorder %s25, 5
      %p692 = pnand %p690, %p691
      %p693 = pneg %p692
      // Predicated region
      $region104: #{tpu_custom_call.1} parent=5 // pred_check
        _
      $region105: #{tpu_custom_call.1} parent=5 // pred_check_branch
        %695 = sbr.rel (%p692) target = $region107
      $region106: #{tpu_custom_call.1} parent=5 // pred_region
        %s696 = ssub.s32 %s25, 1
        %s697 = sand.u32 %s271, 1
        %s698 = sand.u32 %s271, 1
        %s699 = smul.addr %s698, 256
        %s700 = scalar_lea.vmem [#allocation5], %s699
        // Predicated region
        $region108: #{tpu_custom_call.1} parent=106 // pred_check
          %p701 = pneg %p284
        $region109: #{tpu_custom_call.1} parent=106 // pred_check_branch
          %703 = sbr.rel (%p701) target = $region111
        $region110: #{tpu_custom_call.1} parent=106 // pred_region
          _
        $region111: #{tpu_custom_call.1} parent=106 // pred_fallthru
          _
        %p704 = pneg %p58
        %p705 = pneg %p55
        %p706 = pneg %p79
        %p707 = pneg %p76
        %p708 = pneg %p100
        %p709 = pneg %p97
        %p710 = scmp.lt.s32.totalorder %s34, 1
        %s711 = scalar_select %p710, %s34, 1
        %s712 = smul.addr %s711, 16
        %s713 = smul.addr %s712, 4
        %s714 = scalar_lea.vmem %s3, %s713
        %p715 = pneg %p126
        %p716 = pneg %p123
        %p717 = scmp.lt.s32.totalorder %s34, 1
        %s718 = scalar_select %p717, %s34, 1
        %s719 = smul.addr %s718, 2
        %s720 = scalar_lea.vmem %s4, %s719
        %p721 = pneg %p152
        %p722 = pneg %p149
        %p723 = scmp.lt.s32.totalorder %s34, 1
        %s724 = scalar_select %p723, %s34, 1
        %s725 = smul.addr %s724, 8
        %s726 = smul.addr %s725, 4
        %s727 = scalar_lea.vmem %s5, %s726
        %p728 = pneg %p178
        %p729 = pneg %p175
        %p730 = scmp.lt.s32.totalorder %s34, 1
        %s731 = scalar_select %p730, %s34, 1
        %s732 = scalar_lea.vmem %s6, %s731
        %p733 = pneg %p204
        %p734 = pneg %p201
        %p735 = scmp.lt.s32.totalorder %s34, 1
        %s736 = scalar_select %p735, %s34, 1
        %s737 = scalar_lea.vmem %s7, %s736
        %p738 = pneg %p230
        %p739 = pneg %p227
        %p740 = scmp.lt.s32.totalorder %s34, 1
        %s741 = scalar_select %p740, %s34, 1
        %s742 = scalar_lea.vmem %s8, %s741
        %p743 = pneg %p256
        %p744 = pneg %p253
        %s745 = sand.u32 %s271, 1
        %s746 = sand.u32 %s271, 1
        %s747 = smul.addr %s746, 256
        %s748 = scalar_lea.vmem [#allocation5], %s747
        %p749 = pneg %p284
        %p750 = pneg %p281
        %s751 = smul.u32 8, %s35
        %p752 = scmp.lt.s32.totalorder %s34, 1
        %s753 = scalar_select %p752, %s34, 1
        %p754 = scmp.lt.s32.totalorder %s751, 15
        %s755 = scalar_select %p754, %s751, 15
        %s756 = smul.addr %s753, 16
        %s757 = sadd.s32 %s755, %s756
        %s758 = scalar_lea.vmem %s10, %s757
        %p759 = pneg %p312
        %p760 = pneg %p309
        %s761 = smul.u32 128, %s35
        %p762 = scmp.lt.s32.totalorder %s34, 1
        %s763 = scalar_select %p762, %s34, 1
        %p764 = scmp.lt.s32.totalorder %s761, 255
        %s765 = scalar_select %p764, %s761, 255
        %s766 = smul.addr %s763, 256
        %s767 = sadd.s32 %s765, %s766
        %s768 = smul.addr %s767, 4
        %s769 = scalar_lea.vmem %s11, %s768
        %p770 = pneg %p340
        %p771 = pneg %p337
        %p772 = scmp.lt.s32.totalorder %s34, 1
        %s773 = scalar_select %p772, %s34, 1
        %s774 = scalar_lea.vmem %s12, %s773
        %p775 = pneg %p366
        %p776 = pneg %p363
        %p777 = scmp.lt.s32.totalorder %s34, 1
        %s778 = scalar_select %p777, %s34, 1
        %s779 = scalar_lea.vmem %s13, %s778
        %p780 = pneg %p392
        %p781 = pneg %p389
        %p782 = scmp.lt.s32.totalorder %s34, 1
        %s783 = scalar_select %p782, %s34, 1
        %s784 = scalar_lea.vmem %s14, %s783
        %p785 = pneg %p418
        %p786 = pneg %p415
        %p787 = pneg %p439
        %p788 = pneg %p436
        %p789 = pneg %p460
        %p790 = pneg %p457
        %p791 = pneg %p481
        %p792 = pneg %p478
        %p793 = scmp.lt.s32.totalorder %s34, 1
        %s794 = scalar_select %p793, %s34, 1
        %s795 = smul.addr %s794, 16
        %s796 = smul.addr %s795, 4
        %s797 = scalar_lea.vmem %s3, %s796
        %p798 = scmp.lt.s32.totalorder %s34, 1
        %s799 = scalar_select %p798, %s34, 1
        %s800 = smul.addr %s799, 2
        %s801 = scalar_lea.vmem %s4, %s800
        %p802 = scmp.lt.s32.totalorder %s34, 1
        %s803 = scalar_select %p802, %s34, 1
        %s804 = smul.addr %s803, 8
        %s805 = smul.addr %s804, 4
        %s806 = scalar_lea.vmem %s5, %s805
        %p807 = scmp.lt.s32.totalorder %s34, 1
        %s808 = scalar_select %p807, %s34, 1
        %s809 = scalar_lea.vmem %s6, %s808
        %p810 = scmp.lt.s32.totalorder %s34, 1
        %s811 = scalar_select %p810, %s34, 1
        %s812 = scalar_lea.vmem %s7, %s811
        %p813 = scmp.lt.s32.totalorder %s34, 1
        %s814 = scalar_select %p813, %s34, 1
        %s815 = scalar_lea.vmem %s8, %s814
        %s816 = smul.u32 8, %s35
        %s817 = smul.u32 8, %s35
        %p818 = scmp.lt.s32.totalorder %s34, 1
        %s819 = scalar_select %p818, %s34, 1
        %p820 = scmp.lt.s32.totalorder %s817, 15
        %s821 = scalar_select %p820, %s817, 15
        %s822 = smul.addr %s819, 16
        %s823 = sadd.s32 %s821, %s822
        %s824 = scalar_lea.vmem %s10, %s823
        %s825 = smul.u32 8, %s35
        %s826 = smul.u32 128, %s35
        %p827 = scmp.lt.s32.totalorder %s34, 1
        %s828 = scalar_select %p827, %s34, 1
        %p829 = scmp.lt.s32.totalorder %s826, 255
        %s830 = scalar_select %p829, %s826, 255
        %s831 = smul.addr %s828, 256
        %s832 = sadd.s32 %s830, %s831
        %s833 = smul.addr %s832, 4
        %s834 = scalar_lea.vmem %s11, %s833
        %s835 = smul.u32 128, %s35
        %p836 = scmp.lt.s32.totalorder %s34, 1
        %s837 = scalar_select %p836, %s34, 1
        %s838 = scalar_lea.vmem %s12, %s837
        %p839 = scmp.lt.s32.totalorder %s34, 1
        %s840 = scalar_select %p839, %s34, 1
        %s841 = scalar_lea.vmem %s13, %s840
        %p842 = scmp.lt.s32.totalorder %s34, 1
        %s843 = scalar_select %p842, %s34, 1
        %s844 = scalar_lea.vmem %s14, %s843
        %p846 = scmp.eq.s32.totalorder %s34, 0
        %p847 = scmp.eq.s32.totalorder %s35, 0
        %p848 = pnand %p846, %p847
        %p849 = pneg %p848
        // Predicated region
        $region112: #{tpu_custom_call.1} parent=106 // pred_check
          _
        $region113: #{tpu_custom_call.1} parent=106 // pred_check_branch
          %851 = sbr.rel (%p848) target = $region115
        $region114: #{tpu_custom_call.1} parent=106 // pred_region
          %v852 = vld [vmem:[%s0] sm:$0xff]
          %v853 = vld [vmem:[%s0 + $0x8] sm:$0xff]
          %v854 = vpack.c.bf16 %v853, %v852
          %v855 = vld [vmem:[%s1] sm:$0xf]
          %v856 = vld [vmem:[%s2] sm:$0x1]
          %v858 = vperm.slane %v856, 0
          %vm860 = vcmask 64512
          %v862 = vsel %vm860, %v854, 0
          %vm864 = vcmask 1043456
          %v866 = vsel %vm864, %v855, 0
          %868 = vmatpush.bf16.msra.mxu0 0
          %869 = vmatpush.bf16.msra.mxu0 0
          %870 = vmatpush.bf16.msra.mxu0 0
          %871 = vmatpush.bf16.msra.mxu0 0
          %872 = vmatpush.bf16.msra.mxu0 0
          %873 = vmatpush.bf16.msra.mxu0 0
          %874 = vmatpush.bf16.msra.mxu0 0
          %875 = vmatpush.bf16.msra.mxu0 %v866
          %876 = vmatmul.bf16.gmra.mxu0 %v862
          %v877 = vpop.f32.mrf.mxu0
          %v878 = vadd.f32 %v858, %v877
          %v879 = vpop.f32.mrf.mxu0
          %v880 = vadd.f32 %v858, %v879
          %881 = vdwg.mxu0
          %vm882 = vcmask 523264
          %883 = vst.msk [vmem:[#allocation2] sm:$0xff] %vm882, %v878
          %884 = vst.msk [vmem:[#allocation2 + $0x8] sm:$0xff] %vm882, %v880
        $region115: #{tpu_custom_call.1} parent=106 // pred_fallthru
          _
        // Predicated region
        $region116: #{tpu_custom_call.1} parent=106 // pred_check
          %p885 = pneg %p847
        $region117: #{tpu_custom_call.1} parent=106 // pred_check_branch
          %887 = sbr.rel (%p885) target = $region119
        $region118: #{tpu_custom_call.1} parent=106 // pred_region
          %v888 = vld [vmem:[#allocation2] sm:$0xff]
          %v889 = vld [vmem:[#allocation2 + $0x8] sm:$0xff]
          %v890 = vpack.c.bf16 %v889, %v888
          %v891 = vld [vmem:[%s797] sm:$0xff]
          %v892 = vld [vmem:[%s797 + $0x8] sm:$0xff]
          %v893 = vld [vmem:[%s797 + $0x10] sm:$0xff]
          %v894 = vld [vmem:[%s797 + $0x18] sm:$0xff]
          %v895 = vld [vmem:[%s797 + $0x20] sm:$0xff]
          %v896 = vld [vmem:[%s797 + $0x28] sm:$0xff]
          %v897 = vld [vmem:[%s797 + $0x30] sm:$0xff]
          %v898 = vld [vmem:[%s797 + $0x38] sm:$0xff]
          %v899 = vld [vmem:[%s801] sm:$0x3]
          %v901 = vperm.slane %v899, 0
          %v902 = vperm.slane %v899, 1
          %v913 = vunpack.c.l.b16 %v891
          %v914 = vunpack.c.h.b16 %v891
          %v915 = vunpack.c.l.b16 %v892
          %v916 = vunpack.c.h.b16 %v892
          %v917 = vunpack.c.l.b16 %v893
          %v918 = vunpack.c.h.b16 %v893
          %v919 = vunpack.c.l.b16 %v894
          %v920 = vunpack.c.h.b16 %v894
          %v921 = vunpack.c.l.b16 %v895
          %v922 = vunpack.c.h.b16 %v895
          %v923 = vunpack.c.l.b16 %v896
          %v924 = vunpack.c.h.b16 %v896
          %v925 = vunpack.c.l.b16 %v897
          %v926 = vunpack.c.h.b16 %v897
          %v927 = vunpack.c.l.b16 %v898
          %v928 = vunpack.c.h.b16 %v898
          %v929 = vpack.c.b16 %v915, %v913
          %v930 = vpack.c.b16 %v916, %v914
          %v931 = vpack.c.b16 %v919, %v917
          %v932 = vpack.c.b16 %v920, %v918
          %v933 = vpack.c.b16 %v923, %v921
          %v934 = vpack.c.b16 %v924, %v922
          %v935 = vpack.c.b16 %v927, %v925
          %v936 = vpack.c.b16 %v928, %v926
          %vm945 = vcmask 523264
          %v947 = vsel %vm945, %v890, 0
          %949 = vmatpush.bf16.msra.mxu0 0
          %950 = vmatpush.bf16.msra.mxu0 0
          %951 = vmatpush.bf16.msra.mxu0 0
          %952 = vmatpush.bf16.msra.mxu0 0
          %953 = vmatpush.bf16.msra.mxu0 %v935
          %954 = vmatpush.bf16.msra.mxu0 %v933
          %955 = vmatpush.bf16.msra.mxu0 %v931
          %956 = vmatpush.bf16.msra.mxu0 %v929
          %957 = vmatmul.bf16.gmra.mxu0 %v947
          %v958 = vpop.f32.mrf.mxu0
          %v959 = vadd.f32 %v901, %v958
          %v960 = vpop.f32.mrf.mxu0
          %v961 = vadd.f32 %v901, %v960
          %962 = vdwg.mxu0
          %963 = vmatpush.bf16.msra.mxu0 0
          %964 = vmatpush.bf16.msra.mxu0 0
          %965 = vmatpush.bf16.msra.mxu0 0
          %966 = vmatpush.bf16.msra.mxu0 0
          %967 = vmatpush.bf16.msra.mxu0 %v936
          %968 = vmatpush.bf16.msra.mxu0 %v934
          %969 = vmatpush.bf16.msra.mxu0 %v932
          %970 = vmatpush.bf16.msra.mxu0 %v930
          %971 = vmatmul.bf16.gmra.mxu0 %v947
          %v972 = vpop.f32.mrf.mxu0
          %v973 = vadd.f32 %v902, %v972
          %v974 = vpop.f32.mrf.mxu0
          %v975 = vadd.f32 %v902, %v974
          %976 = vdwg.mxu0
          %979 = vrot.lane.b32.xlu0 %v959, 112
          %v980 = vpop.permute.xlu0 %979
          %981 = vrot.lane.b32.xlu0 %v961, 112
          %v982 = vpop.permute.xlu0 %981
          %985 = vrot.lane.b32.xlu0 %v959, 96
          %v986 = vpop.permute.xlu0 %985
          %987 = vrot.lane.b32.xlu0 %v961, 96
          %v988 = vpop.permute.xlu0 %987
          %991 = vrot.lane.b32.xlu0 %v959, 80
          %v992 = vpop.permute.xlu0 %991
          %993 = vrot.lane.b32.xlu0 %v961, 80
          %v994 = vpop.permute.xlu0 %993
          %v997 = vrot.slane %v986, 4
          %vm998 = vcmask 1047556
          %v999 = vsel %vm998, %v997, %v959
          %v1000 = vrot.slane %v959, 4
          %v1001 = vsel %vm998, %v986, %v1000
          %v1003 = vunpack.c.l.s4 1983009808
          %v1004 = vunpack.c.0.s8 %v1003
          %v1005 = vperm.slane %v999, %v1004
          %v1007 = vunpack.c.l.s4 1983009808
          %v1008 = vunpack.c.0.s8 %v1007
          %v1009 = vperm.slane %v1001, %v1008
          %v1010 = vrot.slane %v992, 4
          %v1011 = vsel %vm998, %v1010, %v980
          %v1012 = vrot.slane %v980, 4
          %v1013 = vsel %vm998, %v992, %v1012
          %v1015 = vunpack.c.l.s4 1983009808
          %v1016 = vunpack.c.0.s8 %v1015
          %v1017 = vperm.slane %v1011, %v1016
          %v1019 = vunpack.c.l.s4 1983009808
          %v1020 = vunpack.c.0.s8 %v1019
          %v1021 = vperm.slane %v1013, %v1020
          %v1022 = vrot.slane %v1017, 4
          %v1023 = vsel %vm998, %v1022, %v1005
          %v1024 = vrot.slane %v1005, 4
          %v1025 = vsel %vm998, %v1017, %v1024
          %v1027 = vunpack.c.l.s4 1934713408
          %v1028 = vunpack.c.0.s8 %v1027
          %v1029 = vperm.slane %v1023, %v1028
          %v1031 = vunpack.c.l.s4 1934713408
          %v1032 = vunpack.c.0.s8 %v1031
          %v1033 = vperm.slane %v1025, %v1032
          %v1034 = vrot.slane %v1021, 4
          %v1035 = vsel %vm998, %v1034, %v1009
          %v1036 = vrot.slane %v1009, 4
          %v1037 = vsel %vm998, %v1021, %v1036
          %v1039 = vunpack.c.l.s4 1934713408
          %v1040 = vunpack.c.0.s8 %v1039
          %v1041 = vperm.slane %v1035, %v1040
          %v1043 = vunpack.c.l.s4 1934713408
          %v1044 = vunpack.c.0.s8 %v1043
          %v1045 = vperm.slane %v1037, %v1044
          %v1046 = vrot.slane %v1029, 4
          %v1047 = vsel %vm998, 0.0, %v1046
          %v1048 = vrot.slane %v1033, 4
          %v1049 = vsel %vm998, 0.0, %v1048
          %v1050 = vrot.slane %v1041, 4
          %v1051 = vsel %vm998, 0.0, %v1050
          %v1052 = vrot.slane %v1045, 4
          %v1053 = vsel %vm998, 0.0, %v1052
          %v1054 = vrot.slane %v988, 4
          %v1055 = vsel %vm998, %v1054, %v961
          %v1056 = vrot.slane %v961, 4
          %v1057 = vsel %vm998, %v988, %v1056
          %v1059 = vunpack.c.l.s4 1983009808
          %v1060 = vunpack.c.0.s8 %v1059
          %v1061 = vperm.slane %v1055, %v1060
          %v1063 = vunpack.c.l.s4 1983009808
          %v1064 = vunpack.c.0.s8 %v1063
          %v1065 = vperm.slane %v1057, %v1064
          %v1066 = vrot.slane %v994, 4
          %v1067 = vsel %vm998, %v1066, %v982
          %v1068 = vrot.slane %v982, 4
          %v1069 = vsel %vm998, %v994, %v1068
          %v1071 = vunpack.c.l.s4 1983009808
          %v1072 = vunpack.c.0.s8 %v1071
          %v1073 = vperm.slane %v1067, %v1072
          %v1075 = vunpack.c.l.s4 1983009808
          %v1076 = vunpack.c.0.s8 %v1075
          %v1077 = vperm.slane %v1069, %v1076
          %v1078 = vrot.slane %v1073, 4
          %v1079 = vsel %vm998, %v1078, %v1061
          %v1080 = vrot.slane %v1061, 4
          %v1081 = vsel %vm998, %v1073, %v1080
          %v1083 = vunpack.c.l.s4 1934713408
          %v1084 = vunpack.c.0.s8 %v1083
          %v1085 = vperm.slane %v1079, %v1084
          %v1087 = vunpack.c.l.s4 1934713408
          %v1088 = vunpack.c.0.s8 %v1087
          %v1089 = vperm.slane %v1081, %v1088
          %v1090 = vrot.slane %v1077, 4
          %v1091 = vsel %vm998, %v1090, %v1065
          %v1092 = vrot.slane %v1065, 4
          %v1093 = vsel %vm998, %v1077, %v1092
          %v1095 = vunpack.c.l.s4 1934713408
          %v1096 = vunpack.c.0.s8 %v1095
          %v1097 = vperm.slane %v1091, %v1096
          %v1099 = vunpack.c.l.s4 1934713408
          %v1100 = vunpack.c.0.s8 %v1099
          %v1101 = vperm.slane %v1093, %v1100
          %v1102 = vrot.slane %v1085, 4
          %v1103 = vsel %vm998, 0.0, %v1102
          %v1104 = vrot.slane %v1089, 4
          %v1105 = vsel %vm998, 0.0, %v1104
          %v1106 = vrot.slane %v1097, 4
          %v1107 = vsel %vm998, 0.0, %v1106
          %v1108 = vrot.slane %v1101, 4
          %v1109 = vsel %vm998, 0.0, %v1108
          %v1110 = vsel %vm998, %v1048, %v1029
          %v1112 = vunpack.c.l.s4 1983009808
          %v1113 = vunpack.c.0.s8 %v1112
          %v1114 = vperm.slane %v1110, %v1113
          %v1115 = vrot.slane %v1049, 4
          %v1116 = vsel %vm998, %v1115, %v1047
          %v1118 = vunpack.c.l.s4 1983009808
          %v1119 = vunpack.c.0.s8 %v1118
          %v1120 = vperm.slane %v1116, %v1119
          %v1121 = vsel %vm998, %v1052, %v1041
          %v1123 = vunpack.c.l.s4 1983009808
          %v1124 = vunpack.c.0.s8 %v1123
          %v1125 = vperm.slane %v1121, %v1124
          %v1126 = vrot.slane %v1053, 4
          %v1127 = vsel %vm998, %v1126, %v1051
          %v1129 = vunpack.c.l.s4 1983009808
          %v1130 = vunpack.c.0.s8 %v1129
          %v1131 = vperm.slane %v1127, %v1130
          %v1132 = vrot.slane %v1120, 4
          %v1133 = vsel %vm998, %v1132, %v1114
          %v1134 = vrot.slane %v1114, 4
          %v1135 = vsel %vm998, %v1120, %v1134
          %v1137 = vunpack.c.l.s4 1934713408
          %v1138 = vunpack.c.0.s8 %v1137
          %v1139 = vperm.slane %v1133, %v1138
          %v1141 = vunpack.c.l.s4 1934713408
          %v1142 = vunpack.c.0.s8 %v1141
          %v1143 = vperm.slane %v1135, %v1142
          %v1144 = vrot.slane %v1131, 4
          %v1145 = vsel %vm998, %v1144, %v1125
          %v1146 = vrot.slane %v1125, 4
          %v1147 = vsel %vm998, %v1131, %v1146
          %v1149 = vunpack.c.l.s4 1934713408
          %v1150 = vunpack.c.0.s8 %v1149
          %v1151 = vperm.slane %v1145, %v1150
          %v1153 = vunpack.c.l.s4 1934713408
          %v1154 = vunpack.c.0.s8 %v1153
          %v1155 = vperm.slane %v1147, %v1154
          %v1156 = vrot.slane %v1151, 4
          %v1157 = vsel %vm998, %v1156, %v1139
          %v1158 = vrot.slane %v1139, 4
          %v1159 = vsel %vm998, %v1151, %v1158
          %v1160 = vrot.slane %v1155, 4
          %v1161 = vsel %vm998, %v1160, %v1143
          %v1162 = vrot.slane %v1143, 4
          %v1163 = vsel %vm998, %v1155, %v1162
          %v1164 = vsel %vm998, %v1104, %v1085
          %v1166 = vunpack.c.l.s4 1983009808
          %v1167 = vunpack.c.0.s8 %v1166
          %v1168 = vperm.slane %v1164, %v1167
          %v1169 = vrot.slane %v1105, 4
          %v1170 = vsel %vm998, %v1169, %v1103
          %v1172 = vunpack.c.l.s4 1983009808
          %v1173 = vunpack.c.0.s8 %v1172
          %v1174 = vperm.slane %v1170, %v1173
          %v1175 = vsel %vm998, %v1108, %v1097
          %v1177 = vunpack.c.l.s4 1983009808
          %v1178 = vunpack.c.0.s8 %v1177
          %v1179 = vperm.slane %v1175, %v1178
          %v1180 = vrot.slane %v1109, 4
          %v1181 = vsel %vm998, %v1180, %v1107
          %v1183 = vunpack.c.l.s4 1983009808
          %v1184 = vunpack.c.0.s8 %v1183
          %v1185 = vperm.slane %v1181, %v1184
          %v1186 = vrot.slane %v1174, 4
          %v1187 = vsel %vm998, %v1186, %v1168
          %v1188 = vrot.slane %v1168, 4
          %v1189 = vsel %vm998, %v1174, %v1188
          %v1191 = vunpack.c.l.s4 1934713408
          %v1192 = vunpack.c.0.s8 %v1191
          %v1193 = vperm.slane %v1187, %v1192
          %v1195 = vunpack.c.l.s4 1934713408
          %v1196 = vunpack.c.0.s8 %v1195
          %v1197 = vperm.slane %v1189, %v1196
          %v1198 = vrot.slane %v1185, 4
          %v1199 = vsel %vm998, %v1198, %v1179
          %v1200 = vrot.slane %v1179, 4
          %v1201 = vsel %vm998, %v1185, %v1200
          %v1203 = vunpack.c.l.s4 1934713408
          %v1204 = vunpack.c.0.s8 %v1203
          %v1205 = vperm.slane %v1199, %v1204
          %v1207 = vunpack.c.l.s4 1934713408
          %v1208 = vunpack.c.0.s8 %v1207
          %v1209 = vperm.slane %v1201, %v1208
          %v1210 = vrot.slane %v1205, 4
          %v1211 = vsel %vm998, %v1210, %v1193
          %v1212 = vrot.slane %v1193, 4
          %v1213 = vsel %vm998, %v1205, %v1212
          %v1214 = vrot.slane %v1209, 4
          %v1215 = vsel %vm998, %v1214, %v1197
          %v1216 = vrot.slane %v1197, 4
          %v1217 = vsel %vm998, %v1209, %v1216
          %v1218 = vpack.c.bf16 %v1157, %v1157
          %v1219 = vpack.c.bf16 %v1159, %v1159
          %v1220 = vpack.c.bf16 %v1161, %v1161
          %v1221 = vpack.c.bf16 %v1163, %v1163
          %v1222 = vpack.c.bf16 %v1211, %v1211
          %v1223 = vpack.c.bf16 %v1213, %v1213
          %v1224 = vpack.c.bf16 %v1215, %v1215
          %v1225 = vpack.c.bf16 %v1217, %v1217
          %1226 = vrot.lane.b32.xlu0 %v959, 64
          %v1227 = vpop.permute.xlu0 %1226
          %1228 = vrot.lane.b32.xlu0 %v961, 64
          %v1229 = vpop.permute.xlu0 %1228
          %1230 = vrot.lane.b32.xlu0 %v980, 64
          %v1231 = vpop.permute.xlu0 %1230
          %1232 = vrot.lane.b32.xlu0 %v982, 64
          %v1233 = vpop.permute.xlu0 %1232
          %1234 = vrot.lane.b32.xlu0 %v986, 64
          %v1235 = vpop.permute.xlu0 %1234
          %1236 = vrot.lane.b32.xlu0 %v988, 64
          %v1237 = vpop.permute.xlu0 %1236
          %1238 = vrot.lane.b32.xlu0 %v992, 64
          %v1239 = vpop.permute.xlu0 %1238
          %1240 = vrot.lane.b32.xlu0 %v994, 64
          %v1241 = vpop.permute.xlu0 %1240
          %v1250 = vrot.slane %v1235, 4
          %v1251 = vsel %vm998, %v1250, %v1227
          %v1252 = vrot.slane %v1227, 4
          %v1253 = vsel %vm998, %v1235, %v1252
          %v1255 = vunpack.c.l.s4 1983009808
          %v1256 = vunpack.c.0.s8 %v1255
          %v1257 = vperm.slane %v1251, %v1256
          %v1259 = vunpack.c.l.s4 1983009808
          %v1260 = vunpack.c.0.s8 %v1259
          %v1261 = vperm.slane %v1253, %v1260
          %v1262 = vrot.slane %v1239, 4
          %v1263 = vsel %vm998, %v1262, %v1231
          %v1264 = vrot.slane %v1231, 4
          %v1265 = vsel %vm998, %v1239, %v1264
          %v1267 = vunpack.c.l.s4 1983009808
          %v1268 = vunpack.c.0.s8 %v1267
          %v1269 = vperm.slane %v1263, %v1268
          %v1271 = vunpack.c.l.s4 1983009808
          %v1272 = vunpack.c.0.s8 %v1271
          %v1273 = vperm.slane %v1265, %v1272
          %v1274 = vrot.slane %v1269, 4
          %v1275 = vsel %vm998, %v1274, %v1257
          %v1276 = vrot.slane %v1257, 4
          %v1277 = vsel %vm998, %v1269, %v1276
          %v1279 = vunpack.c.l.s4 1934713408
          %v1280 = vunpack.c.0.s8 %v1279
          %v1281 = vperm.slane %v1275, %v1280
          %v1283 = vunpack.c.l.s4 1934713408
          %v1284 = vunpack.c.0.s8 %v1283
          %v1285 = vperm.slane %v1277, %v1284
          %v1286 = vrot.slane %v1273, 4
          %v1287 = vsel %vm998, %v1286, %v1261
          %v1288 = vrot.slane %v1261, 4
          %v1289 = vsel %vm998, %v1273, %v1288
          %v1291 = vunpack.c.l.s4 1934713408
          %v1292 = vunpack.c.0.s8 %v1291
          %v1293 = vperm.slane %v1287, %v1292
          %v1295 = vunpack.c.l.s4 1934713408
          %v1296 = vunpack.c.0.s8 %v1295
          %v1297 = vperm.slane %v1289, %v1296
          %v1298 = vrot.slane %v1281, 4
          %v1299 = vsel %vm998, 0.0, %v1298
          %v1300 = vrot.slane %v1285, 4
          %v1301 = vsel %vm998, 0.0, %v1300
          %v1302 = vrot.slane %v1293, 4
          %v1303 = vsel %vm998, 0.0, %v1302
          %v1304 = vrot.slane %v1297, 4
          %v1305 = vsel %vm998, 0.0, %v1304
          %v1306 = vrot.slane %v1237, 4
          %v1307 = vsel %vm998, %v1306, %v1229
          %v1308 = vrot.slane %v1229, 4
          %v1309 = vsel %vm998, %v1237, %v1308
          %v1311 = vunpack.c.l.s4 1983009808
          %v1312 = vunpack.c.0.s8 %v1311
          %v1313 = vperm.slane %v1307, %v1312
          %v1315 = vunpack.c.l.s4 1983009808
          %v1316 = vunpack.c.0.s8 %v1315
          %v1317 = vperm.slane %v1309, %v1316
          %v1318 = vrot.slane %v1241, 4
          %v1319 = vsel %vm998, %v1318, %v1233
          %v1320 = vrot.slane %v1233, 4
          %v1321 = vsel %vm998, %v1241, %v1320
          %v1323 = vunpack.c.l.s4 1983009808
          %v1324 = vunpack.c.0.s8 %v1323
          %v1325 = vperm.slane %v1319, %v1324
          %v1327 = vunpack.c.l.s4 1983009808
          %v1328 = vunpack.c.0.s8 %v1327
          %v1329 = vperm.slane %v1321, %v1328
          %v1330 = vrot.slane %v1325, 4
          %v1331 = vsel %vm998, %v1330, %v1313
          %v1332 = vrot.slane %v1313, 4
          %v1333 = vsel %vm998, %v1325, %v1332
          %v1335 = vunpack.c.l.s4 1934713408
          %v1336 = vunpack.c.0.s8 %v1335
          %v1337 = vperm.slane %v1331, %v1336
          %v1339 = vunpack.c.l.s4 1934713408
          %v1340 = vunpack.c.0.s8 %v1339
          %v1341 = vperm.slane %v1333, %v1340
          %v1342 = vrot.slane %v1329, 4
          %v1343 = vsel %vm998, %v1342, %v1317
          %v1344 = vrot.slane %v1317, 4
          %v1345 = vsel %vm998, %v1329, %v1344
          %v1347 = vunpack.c.l.s4 1934713408
          %v1348 = vunpack.c.0.s8 %v1347
          %v1349 = vperm.slane %v1343, %v1348
          %v1351 = vunpack.c.l.s4 1934713408
          %v1352 = vunpack.c.0.s8 %v1351
          %v1353 = vperm.slane %v1345, %v1352
          %v1354 = vrot.slane %v1337, 4
          %v1355 = vsel %vm998, 0.0, %v1354
          %v1356 = vrot.slane %v1341, 4
          %v1357 = vsel %vm998, 0.0, %v1356
          %v1358 = vrot.slane %v1349, 4
          %v1359 = vsel %vm998, 0.0, %v1358
          %v1360 = vrot.slane %v1353, 4
          %v1361 = vsel %vm998, 0.0, %v1360
          %v1362 = vsel %vm998, %v1300, %v1281
          %v1364 = vunpack.c.l.s4 1983009808
          %v1365 = vunpack.c.0.s8 %v1364
          %v1366 = vperm.slane %v1362, %v1365
          %v1367 = vrot.slane %v1301, 4
          %v1368 = vsel %vm998, %v1367, %v1299
          %v1370 = vunpack.c.l.s4 1983009808
          %v1371 = vunpack.c.0.s8 %v1370
          %v1372 = vperm.slane %v1368, %v1371
          %v1373 = vsel %vm998, %v1304, %v1293
          %v1375 = vunpack.c.l.s4 1983009808
          %v1376 = vunpack.c.0.s8 %v1375
          %v1377 = vperm.slane %v1373, %v1376
          %v1378 = vrot.slane %v1305, 4
          %v1379 = vsel %vm998, %v1378, %v1303
          %v1381 = vunpack.c.l.s4 1983009808
          %v1382 = vunpack.c.0.s8 %v1381
          %v1383 = vperm.slane %v1379, %v1382
          %v1384 = vrot.slane %v1372, 4
          %v1385 = vsel %vm998, %v1384, %v1366
          %v1386 = vrot.slane %v1366, 4
          %v1387 = vsel %vm998, %v1372, %v1386
          %v1389 = vunpack.c.l.s4 1934713408
          %v1390 = vunpack.c.0.s8 %v1389
          %v1391 = vperm.slane %v1385, %v1390
          %v1393 = vunpack.c.l.s4 1934713408
          %v1394 = vunpack.c.0.s8 %v1393
          %v1395 = vperm.slane %v1387, %v1394
          %v1396 = vrot.slane %v1383, 4
          %v1397 = vsel %vm998, %v1396, %v1377
          %v1398 = vrot.slane %v1377, 4
          %v1399 = vsel %vm998, %v1383, %v1398
          %v1401 = vunpack.c.l.s4 1934713408
          %v1402 = vunpack.c.0.s8 %v1401
          %v1403 = vperm.slane %v1397, %v1402
          %v1405 = vunpack.c.l.s4 1934713408
          %v1406 = vunpack.c.0.s8 %v1405
          %v1407 = vperm.slane %v1399, %v1406
          %v1408 = vrot.slane %v1403, 4
          %v1409 = vsel %vm998, %v1408, %v1391
          %v1410 = vrot.slane %v1391, 4
          %v1411 = vsel %vm998, %v1403, %v1410
          %v1412 = vrot.slane %v1407, 4
          %v1413 = vsel %vm998, %v1412, %v1395
          %v1414 = vrot.slane %v1395, 4
          %v1415 = vsel %vm998, %v1407, %v1414
          %v1416 = vsel %vm998, %v1356, %v1337
          %v1418 = vunpack.c.l.s4 1983009808
          %v1419 = vunpack.c.0.s8 %v1418
          %v1420 = vperm.slane %v1416, %v1419
          %v1421 = vrot.slane %v1357, 4
          %v1422 = vsel %vm998, %v1421, %v1355
          %v1424 = vunpack.c.l.s4 1983009808
          %v1425 = vunpack.c.0.s8 %v1424
          %v1426 = vperm.slane %v1422, %v1425
          %v1427 = vsel %vm998, %v1360, %v1349
          %v1429 = vunpack.c.l.s4 1983009808
          %v1430 = vunpack.c.0.s8 %v1429
          %v1431 = vperm.slane %v1427, %v1430
          %v1432 = vrot.slane %v1361, 4
          %v1433 = vsel %vm998, %v1432, %v1359
          %v1435 = vunpack.c.l.s4 1983009808
          %v1436 = vunpack.c.0.s8 %v1435
          %v1437 = vperm.slane %v1433, %v1436
          %v1438 = vrot.slane %v1426, 4
          %v1439 = vsel %vm998, %v1438, %v1420
          %v1440 = vrot.slane %v1420, 4
          %v1441 = vsel %vm998, %v1426, %v1440
          %v1443 = vunpack.c.l.s4 1934713408
          %v1444 = vunpack.c.0.s8 %v1443
          %v1445 = vperm.slane %v1439, %v1444
          %v1447 = vunpack.c.l.s4 1934713408
          %v1448 = vunpack.c.0.s8 %v1447
          %v1449 = vperm.slane %v1441, %v1448
          %v1450 = vrot.slane %v1437, 4
          %v1451 = vsel %vm998, %v1450, %v1431
          %v1452 = vrot.slane %v1431, 4
          %v1453 = vsel %vm998, %v1437, %v1452
          %v1455 = vunpack.c.l.s4 1934713408
          %v1456 = vunpack.c.0.s8 %v1455
          %v1457 = vperm.slane %v1451, %v1456
          %v1459 = vunpack.c.l.s4 1934713408
          %v1460 = vunpack.c.0.s8 %v1459
          %v1461 = vperm.slane %v1453, %v1460
          %v1462 = vrot.slane %v1457, 4
          %v1463 = vsel %vm998, %v1462, %v1445
          %v1464 = vrot.slane %v1445, 4
          %v1465 = vsel %vm998, %v1457, %v1464
          %v1466 = vrot.slane %v1461, 4
          %v1467 = vsel %vm998, %v1466, %v1449
          %v1468 = vrot.slane %v1449, 4
          %v1469 = vsel %vm998, %v1461, %v1468
          %v1470 = vpack.c.bf16 %v1409, %v1409
          %v1471 = vpack.c.bf16 %v1411, %v1411
          %v1472 = vpack.c.bf16 %v1413, %v1413
          %v1473 = vpack.c.bf16 %v1415, %v1415
          %v1474 = vpack.c.bf16 %v1463, %v1463
          %v1475 = vpack.c.bf16 %v1465, %v1465
          %v1476 = vpack.c.bf16 %v1467, %v1467
          %v1477 = vpack.c.bf16 %v1469, %v1469
          %1480 = vrot.lane.b32.xlu0 %v973, 112
          %v1481 = vpop.permute.xlu0 %1480
          %1482 = vrot.lane.b32.xlu0 %v975, 112
          %v1483 = vpop.permute.xlu0 %1482
          %1486 = vrot.lane.b32.xlu0 %v973, 96
          %v1487 = vpop.permute.xlu0 %1486
          %1488 = vrot.lane.b32.xlu0 %v975, 96
          %v1489 = vpop.permute.xlu0 %1488
          %1492 = vrot.lane.b32.xlu0 %v973, 80
          %v1493 = vpop.permute.xlu0 %1492
          %1494 = vrot.lane.b32.xlu0 %v975, 80
          %v1495 = vpop.permute.xlu0 %1494
          %v1498 = vrot.slane %v1487, 4
          %v1499 = vsel %vm998, %v1498, %v973
          %v1500 = vrot.slane %v973, 4
          %v1501 = vsel %vm998, %v1487, %v1500
          %v1503 = vunpack.c.l.s4 1983009808
          %v1504 = vunpack.c.0.s8 %v1503
          %v1505 = vperm.slane %v1499, %v1504
          %v1507 = vunpack.c.l.s4 1983009808
          %v1508 = vunpack.c.0.s8 %v1507
          %v1509 = vperm.slane %v1501, %v1508
          %v1510 = vrot.slane %v1493, 4
          %v1511 = vsel %vm998, %v1510, %v1481
          %v1512 = vrot.slane %v1481, 4
          %v1513 = vsel %vm998, %v1493, %v1512
          %v1515 = vunpack.c.l.s4 1983009808
          %v1516 = vunpack.c.0.s8 %v1515
          %v1517 = vperm.slane %v1511, %v1516
          %v1519 = vunpack.c.l.s4 1983009808
          %v1520 = vunpack.c.0.s8 %v1519
          %v1521 = vperm.slane %v1513, %v1520
          %v1522 = vrot.slane %v1517, 4
          %v1523 = vsel %vm998, %v1522, %v1505
          %v1524 = vrot.slane %v1505, 4
          %v1525 = vsel %vm998, %v1517, %v1524
          %v1527 = vunpack.c.l.s4 1934713408
          %v1528 = vunpack.c.0.s8 %v1527
          %v1529 = vperm.slane %v1523, %v1528
          %v1531 = vunpack.c.l.s4 1934713408
          %v1532 = vunpack.c.0.s8 %v1531
          %v1533 = vperm.slane %v1525, %v1532
          %v1534 = vrot.slane %v1521, 4
          %v1535 = vsel %vm998, %v1534, %v1509
          %v1536 = vrot.slane %v1509, 4
          %v1537 = vsel %vm998, %v1521, %v1536
          %v1539 = vunpack.c.l.s4 1934713408
          %v1540 = vunpack.c.0.s8 %v1539
          %v1541 = vperm.slane %v1535, %v1540
          %v1543 = vunpack.c.l.s4 1934713408
          %v1544 = vunpack.c.0.s8 %v1543
          %v1545 = vperm.slane %v1537, %v1544
          %v1546 = vrot.slane %v1529, 4
          %v1547 = vsel %vm998, 0.0, %v1546
          %v1548 = vrot.slane %v1533, 4
          %v1549 = vsel %vm998, 0.0, %v1548
          %v1550 = vrot.slane %v1541, 4
          %v1551 = vsel %vm998, 0.0, %v1550
          %v1552 = vrot.slane %v1545, 4
          %v1553 = vsel %vm998, 0.0, %v1552
          %v1554 = vrot.slane %v1489, 4
          %v1555 = vsel %vm998, %v1554, %v975
          %v1556 = vrot.slane %v975, 4
          %v1557 = vsel %vm998, %v1489, %v1556
          %v1559 = vunpack.c.l.s4 1983009808
          %v1560 = vunpack.c.0.s8 %v1559
          %v1561 = vperm.slane %v1555, %v1560
          %v1563 = vunpack.c.l.s4 1983009808
          %v1564 = vunpack.c.0.s8 %v1563
          %v1565 = vperm.slane %v1557, %v1564
          %v1566 = vrot.slane %v1495, 4
          %v1567 = vsel %vm998, %v1566, %v1483
          %v1568 = vrot.slane %v1483, 4
          %v1569 = vsel %vm998, %v1495, %v1568
          %v1571 = vunpack.c.l.s4 1983009808
          %v1572 = vunpack.c.0.s8 %v1571
          %v1573 = vperm.slane %v1567, %v1572
          %v1575 = vunpack.c.l.s4 1983009808
          %v1576 = vunpack.c.0.s8 %v1575
          %v1577 = vperm.slane %v1569, %v1576
          %v1578 = vrot.slane %v1573, 4
          %v1579 = vsel %vm998, %v1578, %v1561
          %v1580 = vrot.slane %v1561, 4
          %v1581 = vsel %vm998, %v1573, %v1580
          %v1583 = vunpack.c.l.s4 1934713408
          %v1584 = vunpack.c.0.s8 %v1583
          %v1585 = vperm.slane %v1579, %v1584
          %v1587 = vunpack.c.l.s4 1934713408
          %v1588 = vunpack.c.0.s8 %v1587
          %v1589 = vperm.slane %v1581, %v1588
          %v1590 = vrot.slane %v1577, 4
          %v1591 = vsel %vm998, %v1590, %v1565
          %v1592 = vrot.slane %v1565, 4
          %v1593 = vsel %vm998, %v1577, %v1592
          %v1595 = vunpack.c.l.s4 1934713408
          %v1596 = vunpack.c.0.s8 %v1595
          %v1597 = vperm.slane %v1591, %v1596
          %v1599 = vunpack.c.l.s4 1934713408
          %v1600 = vunpack.c.0.s8 %v1599
          %v1601 = vperm.slane %v1593, %v1600
          %v1602 = vrot.slane %v1585, 4
          %v1603 = vsel %vm998, 0.0, %v1602
          %v1604 = vrot.slane %v1589, 4
          %v1605 = vsel %vm998, 0.0, %v1604
          %v1606 = vrot.slane %v1597, 4
          %v1607 = vsel %vm998, 0.0, %v1606
          %v1608 = vrot.slane %v1601, 4
          %v1609 = vsel %vm998, 0.0, %v1608
          %v1610 = vsel %vm998, %v1548, %v1529
          %v1612 = vunpack.c.l.s4 1983009808
          %v1613 = vunpack.c.0.s8 %v1612
          %v1614 = vperm.slane %v1610, %v1613
          %v1615 = vrot.slane %v1549, 4
          %v1616 = vsel %vm998, %v1615, %v1547
          %v1618 = vunpack.c.l.s4 1983009808
          %v1619 = vunpack.c.0.s8 %v1618
          %v1620 = vperm.slane %v1616, %v1619
          %v1621 = vsel %vm998, %v1552, %v1541
          %v1623 = vunpack.c.l.s4 1983009808
          %v1624 = vunpack.c.0.s8 %v1623
          %v1625 = vperm.slane %v1621, %v1624
          %v1626 = vrot.slane %v1553, 4
          %v1627 = vsel %vm998, %v1626, %v1551
          %v1629 = vunpack.c.l.s4 1983009808
          %v1630 = vunpack.c.0.s8 %v1629
          %v1631 = vperm.slane %v1627, %v1630
          %v1632 = vrot.slane %v1620, 4
          %v1633 = vsel %vm998, %v1632, %v1614
          %v1634 = vrot.slane %v1614, 4
          %v1635 = vsel %vm998, %v1620, %v1634
          %v1637 = vunpack.c.l.s4 1934713408
          %v1638 = vunpack.c.0.s8 %v1637
          %v1639 = vperm.slane %v1633, %v1638
          %v1641 = vunpack.c.l.s4 1934713408
          %v1642 = vunpack.c.0.s8 %v1641
          %v1643 = vperm.slane %v1635, %v1642
          %v1644 = vrot.slane %v1631, 4
          %v1645 = vsel %vm998, %v1644, %v1625
          %v1646 = vrot.slane %v1625, 4
          %v1647 = vsel %vm998, %v1631, %v1646
          %v1649 = vunpack.c.l.s4 1934713408
          %v1650 = vunpack.c.0.s8 %v1649
          %v1651 = vperm.slane %v1645, %v1650
          %v1653 = vunpack.c.l.s4 1934713408
          %v1654 = vunpack.c.0.s8 %v1653
          %v1655 = vperm.slane %v1647, %v1654
          %v1656 = vrot.slane %v1651, 4
          %v1657 = vsel %vm998, %v1656, %v1639
          %v1658 = vrot.slane %v1639, 4
          %v1659 = vsel %vm998, %v1651, %v1658
          %v1660 = vrot.slane %v1655, 4
          %v1661 = vsel %vm998, %v1660, %v1643
          %v1662 = vrot.slane %v1643, 4
          %v1663 = vsel %vm998, %v1655, %v1662
          %v1664 = vsel %vm998, %v1604, %v1585
          %v1666 = vunpack.c.l.s4 1983009808
          %v1667 = vunpack.c.0.s8 %v1666
          %v1668 = vperm.slane %v1664, %v1667
          %v1669 = vrot.slane %v1605, 4
          %v1670 = vsel %vm998, %v1669, %v1603
          %v1672 = vunpack.c.l.s4 1983009808
          %v1673 = vunpack.c.0.s8 %v1672
          %v1674 = vperm.slane %v1670, %v1673
          %v1675 = vsel %vm998, %v1608, %v1597
          %v1677 = vunpack.c.l.s4 1983009808
          %v1678 = vunpack.c.0.s8 %v1677
          %v1679 = vperm.slane %v1675, %v1678
          %v1680 = vrot.slane %v1609, 4
          %v1681 = vsel %vm998, %v1680, %v1607
          %v1683 = vunpack.c.l.s4 1983009808
          %v1684 = vunpack.c.0.s8 %v1683
          %v1685 = vperm.slane %v1681, %v1684
          %v1686 = vrot.slane %v1674, 4
          %v1687 = vsel %vm998, %v1686, %v1668
          %v1688 = vrot.slane %v1668, 4
          %v1689 = vsel %vm998, %v1674, %v1688
          %v1691 = vunpack.c.l.s4 1934713408
          %v1692 = vunpack.c.0.s8 %v1691
          %v1693 = vperm.slane %v1687, %v1692
          %v1695 = vunpack.c.l.s4 1934713408
          %v1696 = vunpack.c.0.s8 %v1695
          %v1697 = vperm.slane %v1689, %v1696
          %v1698 = vrot.slane %v1685, 4
          %v1699 = vsel %vm998, %v1698, %v1679
          %v1700 = vrot.slane %v1679, 4
          %v1701 = vsel %vm998, %v1685, %v1700
          %v1703 = vunpack.c.l.s4 1934713408
          %v1704 = vunpack.c.0.s8 %v1703
          %v1705 = vperm.slane %v1699, %v1704
          %v1707 = vunpack.c.l.s4 1934713408
          %v1708 = vunpack.c.0.s8 %v1707
          %v1709 = vperm.slane %v1701, %v1708
          %v1710 = vrot.slane %v1705, 4
          %v1711 = vsel %vm998, %v1710, %v1693
          %v1712 = vrot.slane %v1693, 4
          %v1713 = vsel %vm998, %v1705, %v1712
          %v1714 = vrot.slane %v1709, 4
          %v1715 = vsel %vm998, %v1714, %v1697
          %v1716 = vrot.slane %v1697, 4
          %v1717 = vsel %vm998, %v1709, %v1716
          %v1718 = vpack.c.bf16 %v1657, %v1657
          %v1719 = vpack.c.bf16 %v1659, %v1659
          %v1720 = vpack.c.bf16 %v1661, %v1661
          %v1721 = vpack.c.bf16 %v1663, %v1663
          %v1722 = vpack.c.bf16 %v1711, %v1711
          %v1723 = vpack.c.bf16 %v1713, %v1713
          %v1724 = vpack.c.bf16 %v1715, %v1715
          %v1725 = vpack.c.bf16 %v1717, %v1717
          %vm1726 = vcmask 130048
          %v1728 = vsel %vm1726, %v1218, 0
          %v1731 = vsel %vm1726, %v1470, 0
          %1733 = vmatpush.bf16.xpose.msra.mxu0 0
          %1734 = vmatpush.bf16.xpose.msra.mxu0 0
          %1735 = vmatpush.bf16.xpose.msra.mxu0 0
          %1736 = vmatpush.bf16.xpose.msra.mxu0 0
          %1737 = vmatpush.bf16.xpose.msra.mxu0 0
          %1738 = vmatpush.bf16.xpose.msra.mxu0 0
          %1739 = vmatpush.bf16.xpose.msra.mxu0 0
          %1740 = vmatpush.bf16.xpose.msra.mxu0 %v1731
          %1741 = vmatmul.bf16.gmra.mxu0 %v1728
          %v1742 = vpop.f32.mrf.mxu0
          %v1743 = vadd.f32 0.0, %v1742
          %v1744 = vpop.f32.mrf.mxu0
          %1745 = vdwg.mxu0
          %v1747 = vsel %vm1726, %v1219, 0
          %v1750 = vsel %vm1726, %v1471, 0
          %1752 = vmatpush.bf16.xpose.msra.mxu0 0
          %1753 = vmatpush.bf16.xpose.msra.mxu0 0
          %1754 = vmatpush.bf16.xpose.msra.mxu0 0
          %1755 = vmatpush.bf16.xpose.msra.mxu0 0
          %1756 = vmatpush.bf16.xpose.msra.mxu0 0
          %1757 = vmatpush.bf16.xpose.msra.mxu0 0
          %1758 = vmatpush.bf16.xpose.msra.mxu0 0
          %1759 = vmatpush.bf16.xpose.msra.mxu0 %v1750
          %1760 = vmatmul.bf16.gmra.mxu0 %v1747
          %v1761 = vpop.f32.mrf.mxu0
          %v1762 = vadd.f32 0.0, %v1761
          %v1763 = vpop.f32.mrf.mxu0
          %1764 = vdwg.mxu0
          %v1766 = vsel %vm1726, %v1220, 0
          %v1769 = vsel %vm1726, %v1472, 0
          %1771 = vmatpush.bf16.xpose.msra.mxu0 0
          %1772 = vmatpush.bf16.xpose.msra.mxu0 0
          %1773 = vmatpush.bf16.xpose.msra.mxu0 0
          %1774 = vmatpush.bf16.xpose.msra.mxu0 0
          %1775 = vmatpush.bf16.xpose.msra.mxu0 0
          %1776 = vmatpush.bf16.xpose.msra.mxu0 0
          %1777 = vmatpush.bf16.xpose.msra.mxu0 0
          %1778 = vmatpush.bf16.xpose.msra.mxu0 %v1769
          %1779 = vmatmul.bf16.gmra.mxu0 %v1766
          %v1780 = vpop.f32.mrf.mxu0
          %v1781 = vadd.f32 0.0, %v1780
          %v1782 = vpop.f32.mrf.mxu0
          %1783 = vdwg.mxu0
          %v1785 = vsel %vm1726, %v1221, 0
          %v1788 = vsel %vm1726, %v1473, 0
          %1790 = vmatpush.bf16.xpose.msra.mxu0 0
          %1791 = vmatpush.bf16.xpose.msra.mxu0 0
          %1792 = vmatpush.bf16.xpose.msra.mxu0 0
          %1793 = vmatpush.bf16.xpose.msra.mxu0 0
          %1794 = vmatpush.bf16.xpose.msra.mxu0 0
          %1795 = vmatpush.bf16.xpose.msra.mxu0 0
          %1796 = vmatpush.bf16.xpose.msra.mxu0 0
          %1797 = vmatpush.bf16.xpose.msra.mxu0 %v1788
          %1798 = vmatmul.bf16.gmra.mxu0 %v1785
          %v1799 = vpop.f32.mrf.mxu0
          %v1800 = vadd.f32 0.0, %v1799
          %v1801 = vpop.f32.mrf.mxu0
          %1802 = vdwg.mxu0
          %v1804 = vsel %vm1726, %v1222, 0
          %v1807 = vsel %vm1726, %v1474, 0
          %1809 = vmatpush.bf16.xpose.msra.mxu0 0
          %1810 = vmatpush.bf16.xpose.msra.mxu0 0
          %1811 = vmatpush.bf16.xpose.msra.mxu0 0
          %1812 = vmatpush.bf16.xpose.msra.mxu0 0
          %1813 = vmatpush.bf16.xpose.msra.mxu0 0
          %1814 = vmatpush.bf16.xpose.msra.mxu0 0
          %1815 = vmatpush.bf16.xpose.msra.mxu0 0
          %1816 = vmatpush.bf16.xpose.msra.mxu0 %v1807
          %1817 = vmatmul.bf16.gmra.mxu0 %v1804
          %v1818 = vpop.f32.mrf.mxu0
          %v1819 = vadd.f32 0.0, %v1818
          %v1820 = vpop.f32.mrf.mxu0
          %1821 = vdwg.mxu0
          %v1823 = vsel %vm1726, %v1223, 0
          %v1826 = vsel %vm1726, %v1475, 0
          %1828 = vmatpush.bf16.xpose.msra.mxu0 0
          %1829 = vmatpush.bf16.xpose.msra.mxu0 0
          %1830 = vmatpush.bf16.xpose.msra.mxu0 0
          %1831 = vmatpush.bf16.xpose.msra.mxu0 0
          %1832 = vmatpush.bf16.xpose.msra.mxu0 0
          %1833 = vmatpush.bf16.xpose.msra.mxu0 0
          %1834 = vmatpush.bf16.xpose.msra.mxu0 0
          %1835 = vmatpush.bf16.xpose.msra.mxu0 %v1826
          %1836 = vmatmul.bf16.gmra.mxu0 %v1823
          %v1837 = vpop.f32.mrf.mxu0
          %v1838 = vadd.f32 0.0, %v1837
          %v1839 = vpop.f32.mrf.mxu0
          %1840 = vdwg.mxu0
          %v1842 = vsel %vm1726, %v1224, 0
          %v1845 = vsel %vm1726, %v1476, 0
          %1847 = vmatpush.bf16.xpose.msra.mxu0 0
          %1848 = vmatpush.bf16.xpose.msra.mxu0 0
          %1849 = vmatpush.bf16.xpose.msra.mxu0 0
          %1850 = vmatpush.bf16.xpose.msra.mxu0 0
          %1851 = vmatpush.bf16.xpose.msra.mxu0 0
          %1852 = vmatpush.bf16.xpose.msra.mxu0 0
          %1853 = vmatpush.bf16.xpose.msra.mxu0 0
          %1854 = vmatpush.bf16.xpose.msra.mxu0 %v1845
          %1855 = vmatmul.bf16.gmra.mxu0 %v1842
          %v1856 = vpop.f32.mrf.mxu0
          %v1857 = vadd.f32 0.0, %v1856
          %v1858 = vpop.f32.mrf.mxu0
          %1859 = vdwg.mxu0
          %v1861 = vsel %vm1726, %v1225, 0
          %v1864 = vsel %vm1726, %v1477, 0
          %1866 = vmatpush.bf16.xpose.msra.mxu0 0
          %1867 = vmatpush.bf16.xpose.msra.mxu0 0
          %1868 = vmatpush.bf16.xpose.msra.mxu0 0
          %1869 = vmatpush.bf16.xpose.msra.mxu0 0
          %1870 = vmatpush.bf16.xpose.msra.mxu0 0
          %1871 = vmatpush.bf16.xpose.msra.mxu0 0
          %1872 = vmatpush.bf16.xpose.msra.mxu0 0
          %1873 = vmatpush.bf16.xpose.msra.mxu0 %v1864
          %1874 = vmatmul.bf16.gmra.mxu0 %v1861
          %v1875 = vpop.f32.mrf.mxu0
          %v1876 = vadd.f32 0.0, %v1875
          %v1877 = vpop.f32.mrf.mxu0
          %1878 = vdwg.mxu0
          %vm1879 = vcmask 64512
          %v1880 = vsel %vm1879, %v1743, -inf
          %1881 = vmax.xlane.f32.xlu0 %v1880
          %v1882 = vpop.xlane.xlu0 %1881
          %v1883 = vsel %vm1879, %v1762, -inf
          %1884 = vmax.xlane.f32.xlu0 %v1883
          %v1885 = vpop.xlane.xlu0 %1884
          %v1886 = vsel %vm1879, %v1781, -inf
          %1887 = vmax.xlane.f32.xlu0 %v1886
          %v1888 = vpop.xlane.xlu0 %1887
          %v1889 = vsel %vm1879, %v1800, -inf
          %1890 = vmax.xlane.f32.xlu0 %v1889
          %v1891 = vpop.xlane.xlu0 %1890
          %v1892 = vsel %vm1879, %v1819, -inf
          %1893 = vmax.xlane.f32.xlu0 %v1892
          %v1894 = vpop.xlane.xlu0 %1893
          %v1895 = vsel %vm1879, %v1838, -inf
          %1896 = vmax.xlane.f32.xlu0 %v1895
          %v1897 = vpop.xlane.xlu0 %1896
          %v1898 = vsel %vm1879, %v1857, -inf
          %1899 = vmax.xlane.f32.xlu0 %v1898
          %v1900 = vpop.xlane.xlu0 %1899
          %v1901 = vsel %vm1879, %v1876, -inf
          %1902 = vmax.xlane.f32.xlu0 %v1901
          %v1903 = vpop.xlane.xlu0 %1902
          %v1904 = vsub.f32 %v1743, %v1882
          %v1905 = vsub.f32 %v1762, %v1885
          %v1906 = vsub.f32 %v1781, %v1888
          %v1907 = vsub.f32 %v1800, %v1891
          %v1908 = vsub.f32 %v1819, %v1894
          %v1909 = vsub.f32 %v1838, %v1897
          %v1910 = vsub.f32 %v1857, %v1900
          %v1911 = vsub.f32 %v1876, %v1903
          %v1912 = vmul.f32 %v1904, 1.442695
          %v1913 = vpow.pop %v1912
          %v1914 = vmul.f32 %v1905, 1.442695
          %v1915 = vpow.pop %v1914
          %v1916 = vmul.f32 %v1906, 1.442695
          %v1917 = vpow.pop %v1916
          %v1918 = vmul.f32 %v1907, 1.442695
          %v1919 = vpow.pop %v1918
          %v1920 = vmul.f32 %v1908, 1.442695
          %v1921 = vpow.pop %v1920
          %v1922 = vmul.f32 %v1909, 1.442695
          %v1923 = vpow.pop %v1922
          %v1924 = vmul.f32 %v1910, 1.442695
          %v1925 = vpow.pop %v1924
          %v1926 = vmul.f32 %v1911, 1.442695
          %v1927 = vpow.pop %v1926
          %v1928 = vsel %vm1879, %v1913, 0.0
          %1929 = vadd.xlane.f32.xlu0 %v1928
          %v1930 = vpop.xlane.xlu0 %1929
          %v1931 = vsel %vm1879, %v1915, 0.0
          %1932 = vadd.xlane.f32.xlu0 %v1931
          %v1933 = vpop.xlane.xlu0 %1932
          %v1934 = vsel %vm1879, %v1917, 0.0
          %1935 = vadd.xlane.f32.xlu0 %v1934
          %v1936 = vpop.xlane.xlu0 %1935
          %v1937 = vsel %vm1879, %v1919, 0.0
          %1938 = vadd.xlane.f32.xlu0 %v1937
          %v1939 = vpop.xlane.xlu0 %1938
          %v1940 = vsel %vm1879, %v1921, 0.0
          %1941 = vadd.xlane.f32.xlu0 %v1940
          %v1942 = vpop.xlane.xlu0 %1941
          %v1943 = vsel %vm1879, %v1923, 0.0
          %1944 = vadd.xlane.f32.xlu0 %v1943
          %v1945 = vpop.xlane.xlu0 %1944
          %v1946 = vsel %vm1879, %v1925, 0.0
          %1947 = vadd.xlane.f32.xlu0 %v1946
          %v1948 = vpop.xlane.xlu0 %1947
          %v1949 = vsel %vm1879, %v1927, 0.0
          %1950 = vadd.xlane.f32.xlu0 %v1949
          %v1951 = vpop.xlane.xlu0 %1950
          %v1952 = vrcp.pop %v1930
          %v1953 = vrcp.pop %v1933
          %v1954 = vrcp.pop %v1936
          %v1955 = vrcp.pop %v1939
          %v1956 = vrcp.pop %v1942
          %v1957 = vrcp.pop %v1945
          %v1958 = vrcp.pop %v1948
          %v1959 = vrcp.pop %v1951
          %v1960 = vmul.f32 %v1913, %v1952
          %v1961 = vmul.f32 %v1915, %v1953
          %v1962 = vmul.f32 %v1917, %v1954
          %v1963 = vmul.f32 %v1919, %v1955
          %v1964 = vmul.f32 %v1921, %v1956
          %v1965 = vmul.f32 %v1923, %v1957
          %v1966 = vmul.f32 %v1925, %v1958
          %v1967 = vmul.f32 %v1927, %v1959
          %v1968 = vpack.c.bf16 %v1960, %v1960
          %v1969 = vpack.c.bf16 %v1961, %v1961
          %v1970 = vpack.c.bf16 %v1962, %v1962
          %v1971 = vpack.c.bf16 %v1963, %v1963
          %v1972 = vpack.c.bf16 %v1964, %v1964
          %v1973 = vpack.c.bf16 %v1965, %v1965
          %v1974 = vpack.c.bf16 %v1966, %v1966
          %v1975 = vpack.c.bf16 %v1967, %v1967
          %v1977 = vsel %vm1879, %v1968, 0
          %vm1979 = vcmask 1043456
          %v1981 = vsel %vm1979, %v1718, 0
          %1983 = vmatpush.bf16.msra.mxu0 0
          %1984 = vmatpush.bf16.msra.mxu0 0
          %1985 = vmatpush.bf16.msra.mxu0 0
          %1986 = vmatpush.bf16.msra.mxu0 0
          %1987 = vmatpush.bf16.msra.mxu0 0
          %1988 = vmatpush.bf16.msra.mxu0 0
          %1989 = vmatpush.bf16.msra.mxu0 0
          %1990 = vmatpush.bf16.msra.mxu0 %v1981
          %1991 = vmatmul.bf16.gmra.mxu0 %v1977
          %v1992 = vpop.f32.mrf.mxu0
          %v1993 = vadd.f32 0.0, %v1992
          %v1994 = vpop.f32.mrf.mxu0
          %1995 = vdwg.mxu0
          %v1997 = vsel %vm1879, %v1969, 0
          %v2000 = vsel %vm1979, %v1719, 0
          %2002 = vmatpush.bf16.msra.mxu0 0
          %2003 = vmatpush.bf16.msra.mxu0 0
          %2004 = vmatpush.bf16.msra.mxu0 0
          %2005 = vmatpush.bf16.msra.mxu0 0
          %2006 = vmatpush.bf16.msra.mxu0 0
          %2007 = vmatpush.bf16.msra.mxu0 0
          %2008 = vmatpush.bf16.msra.mxu0 0
          %2009 = vmatpush.bf16.msra.mxu0 %v2000
          %2010 = vmatmul.bf16.gmra.mxu0 %v1997
          %v2011 = vpop.f32.mrf.mxu0
          %v2012 = vadd.f32 0.0, %v2011
          %v2013 = vpop.f32.mrf.mxu0
          %2014 = vdwg.mxu0
          %v2016 = vsel %vm1879, %v1970, 0
          %v2019 = vsel %vm1979, %v1720, 0
          %2021 = vmatpush.bf16.msra.mxu0 0
          %2022 = vmatpush.bf16.msra.mxu0 0
          %2023 = vmatpush.bf16.msra.mxu0 0
          %2024 = vmatpush.bf16.msra.mxu0 0
          %2025 = vmatpush.bf16.msra.mxu0 0
          %2026 = vmatpush.bf16.msra.mxu0 0
          %2027 = vmatpush.bf16.msra.mxu0 0
          %2028 = vmatpush.bf16.msra.mxu0 %v2019
          %2029 = vmatmul.bf16.gmra.mxu0 %v2016
          %v2030 = vpop.f32.mrf.mxu0
          %v2031 = vadd.f32 0.0, %v2030
          %v2032 = vpop.f32.mrf.mxu0
          %2033 = vdwg.mxu0
          %v2035 = vsel %vm1879, %v1971, 0
          %v2038 = vsel %vm1979, %v1721, 0
          %2040 = vmatpush.bf16.msra.mxu0 0
          %2041 = vmatpush.bf16.msra.mxu0 0
          %2042 = vmatpush.bf16.msra.mxu0 0
          %2043 = vmatpush.bf16.msra.mxu0 0
          %2044 = vmatpush.bf16.msra.mxu0 0
          %2045 = vmatpush.bf16.msra.mxu0 0
          %2046 = vmatpush.bf16.msra.mxu0 0
          %2047 = vmatpush.bf16.msra.mxu0 %v2038
          %2048 = vmatmul.bf16.gmra.mxu0 %v2035
          %v2049 = vpop.f32.mrf.mxu0
          %v2050 = vadd.f32 0.0, %v2049
          %v2051 = vpop.f32.mrf.mxu0
          %2052 = vdwg.mxu0
          %v2054 = vsel %vm1879, %v1972, 0
          %v2057 = vsel %vm1979, %v1722, 0
          %2059 = vmatpush.bf16.msra.mxu0 0
          %2060 = vmatpush.bf16.msra.mxu0 0
          %2061 = vmatpush.bf16.msra.mxu0 0
          %2062 = vmatpush.bf16.msra.mxu0 0
          %2063 = vmatpush.bf16.msra.mxu0 0
          %2064 = vmatpush.bf16.msra.mxu0 0
          %2065 = vmatpush.bf16.msra.mxu0 0
          %2066 = vmatpush.bf16.msra.mxu0 %v2057
          %2067 = vmatmul.bf16.gmra.mxu0 %v2054
          %v2068 = vpop.f32.mrf.mxu0
          %v2069 = vadd.f32 0.0, %v2068
          %v2070 = vpop.f32.mrf.mxu0
          %2071 = vdwg.mxu0
          %v2073 = vsel %vm1879, %v1973, 0
          %v2076 = vsel %vm1979, %v1723, 0
          %2078 = vmatpush.bf16.msra.mxu0 0
          %2079 = vmatpush.bf16.msra.mxu0 0
          %2080 = vmatpush.bf16.msra.mxu0 0
          %2081 = vmatpush.bf16.msra.mxu0 0
          %2082 = vmatpush.bf16.msra.mxu0 0
          %2083 = vmatpush.bf16.msra.mxu0 0
          %2084 = vmatpush.bf16.msra.mxu0 0
          %2085 = vmatpush.bf16.msra.mxu0 %v2076
          %2086 = vmatmul.bf16.gmra.mxu0 %v2073
          %v2087 = vpop.f32.mrf.mxu0
          %v2088 = vadd.f32 0.0, %v2087
          %v2089 = vpop.f32.mrf.mxu0
          %2090 = vdwg.mxu0
          %v2092 = vsel %vm1879, %v1974, 0
          %v2095 = vsel %vm1979, %v1724, 0
          %2097 = vmatpush.bf16.msra.mxu0 0
          %2098 = vmatpush.bf16.msra.mxu0 0
          %2099 = vmatpush.bf16.msra.mxu0 0
          %2100 = vmatpush.bf16.msra.mxu0 0
          %2101 = vmatpush.bf16.msra.mxu0 0
          %2102 = vmatpush.bf16.msra.mxu0 0
          %2103 = vmatpush.bf16.msra.mxu0 0
          %2104 = vmatpush.bf16.msra.mxu0 %v2095
          %2105 = vmatmul.bf16.gmra.mxu0 %v2092
          %v2106 = vpop.f32.mrf.mxu0
          %v2107 = vadd.f32 0.0, %v2106
          %v2108 = vpop.f32.mrf.mxu0
          %2109 = vdwg.mxu0
          %v2111 = vsel %vm1879, %v1975, 0
          %v2114 = vsel %vm1979, %v1725, 0
          %2116 = vmatpush.bf16.msra.mxu0 0
          %2117 = vmatpush.bf16.msra.mxu0 0
          %2118 = vmatpush.bf16.msra.mxu0 0
          %2119 = vmatpush.bf16.msra.mxu0 0
          %2120 = vmatpush.bf16.msra.mxu0 0
          %2121 = vmatpush.bf16.msra.mxu0 0
          %2122 = vmatpush.bf16.msra.mxu0 0
          %2123 = vmatpush.bf16.msra.mxu0 %v2114
          %2124 = vmatmul.bf16.gmra.mxu0 %v2111
          %v2125 = vpop.f32.mrf.mxu0
          %v2126 = vadd.f32 0.0, %v2125
          %v2127 = vpop.f32.mrf.mxu0
          %2128 = vdwg.mxu0
          %v2129 = vrot.slane %v2031, 4
          %v2130 = vsel %vm998, %v2129, %v1993
          %v2131 = vrot.slane %v1993, 4
          %v2132 = vsel %vm998, %v2031, %v2131
          %v2134 = vunpack.c.l.s4 1983009808
          %v2135 = vunpack.c.0.s8 %v2134
          %v2136 = vperm.slane %v2130, %v2135
          %v2138 = vunpack.c.l.s4 1983009808
          %v2139 = vunpack.c.0.s8 %v2138
          %v2140 = vperm.slane %v2132, %v2139
          %v2141 = vrot.slane %v2050, 4
          %v2142 = vsel %vm998, %v2141, %v2012
          %v2143 = vrot.slane %v2012, 4
          %v2144 = vsel %vm998, %v2050, %v2143
          %v2146 = vunpack.c.l.s4 1983009808
          %v2147 = vunpack.c.0.s8 %v2146
          %v2148 = vperm.slane %v2142, %v2147
          %v2150 = vunpack.c.l.s4 1983009808
          %v2151 = vunpack.c.0.s8 %v2150
          %v2152 = vperm.slane %v2144, %v2151
          %v2153 = vrot.slane %v2148, 4
          %v2154 = vsel %vm998, %v2153, %v2136
          %v2155 = vrot.slane %v2136, 4
          %v2156 = vsel %vm998, %v2148, %v2155
          %v2158 = vunpack.c.l.s4 1934713408
          %v2159 = vunpack.c.0.s8 %v2158
          %v2160 = vperm.slane %v2154, %v2159
          %v2162 = vunpack.c.l.s4 1934713408
          %v2163 = vunpack.c.0.s8 %v2162
          %v2164 = vperm.slane %v2156, %v2163
          %v2165 = vrot.slane %v2152, 4
          %v2166 = vsel %vm998, %v2165, %v2140
          %v2167 = vrot.slane %v2140, 4
          %v2168 = vsel %vm998, %v2152, %v2167
          %v2170 = vunpack.c.l.s4 1934713408
          %v2171 = vunpack.c.0.s8 %v2170
          %v2172 = vperm.slane %v2166, %v2171
          %v2174 = vunpack.c.l.s4 1934713408
          %v2175 = vunpack.c.0.s8 %v2174
          %v2176 = vperm.slane %v2168, %v2175
          %v2177 = vrot.slane %v2160, 4
          %v2178 = vsel %vm998, 0.0, %v2177
          %v2179 = vrot.slane %v2164, 4
          %v2180 = vsel %vm998, 0.0, %v2179
          %v2181 = vrot.slane %v2172, 4
          %v2182 = vsel %vm998, 0.0, %v2181
          %v2183 = vrot.slane %v2176, 4
          %v2184 = vsel %vm998, 0.0, %v2183
          %v2185 = vrot.slane %v2107, 4
          %v2186 = vsel %vm998, %v2185, %v2069
          %v2187 = vrot.slane %v2069, 4
          %v2188 = vsel %vm998, %v2107, %v2187
          %v2190 = vunpack.c.l.s4 1983009808
          %v2191 = vunpack.c.0.s8 %v2190
          %v2192 = vperm.slane %v2186, %v2191
          %v2194 = vunpack.c.l.s4 1983009808
          %v2195 = vunpack.c.0.s8 %v2194
          %v2196 = vperm.slane %v2188, %v2195
          %v2197 = vrot.slane %v2126, 4
          %v2198 = vsel %vm998, %v2197, %v2088
          %v2199 = vrot.slane %v2088, 4
          %v2200 = vsel %vm998, %v2126, %v2199
          %v2202 = vunpack.c.l.s4 1983009808
          %v2203 = vunpack.c.0.s8 %v2202
          %v2204 = vperm.slane %v2198, %v2203
          %v2206 = vunpack.c.l.s4 1983009808
          %v2207 = vunpack.c.0.s8 %v2206
          %v2208 = vperm.slane %v2200, %v2207
          %v2209 = vrot.slane %v2204, 4
          %v2210 = vsel %vm998, %v2209, %v2192
          %v2211 = vrot.slane %v2192, 4
          %v2212 = vsel %vm998, %v2204, %v2211
          %v2214 = vunpack.c.l.s4 1934713408
          %v2215 = vunpack.c.0.s8 %v2214
          %v2216 = vperm.slane %v2210, %v2215
          %v2218 = vunpack.c.l.s4 1934713408
          %v2219 = vunpack.c.0.s8 %v2218
          %v2220 = vperm.slane %v2212, %v2219
          %v2221 = vrot.slane %v2208, 4
          %v2222 = vsel %vm998, %v2221, %v2196
          %v2223 = vrot.slane %v2196, 4
          %v2224 = vsel %vm998, %v2208, %v2223
          %v2226 = vunpack.c.l.s4 1934713408
          %v2227 = vunpack.c.0.s8 %v2226
          %v2228 = vperm.slane %v2222, %v2227
          %v2230 = vunpack.c.l.s4 1934713408
          %v2231 = vunpack.c.0.s8 %v2230
          %v2232 = vperm.slane %v2224, %v2231
          %v2233 = vrot.slane %v2216, 4
          %v2234 = vsel %vm998, 0.0, %v2233
          %v2235 = vrot.slane %v2220, 4
          %v2236 = vsel %vm998, 0.0, %v2235
          %v2237 = vrot.slane %v2228, 4
          %v2238 = vsel %vm998, 0.0, %v2237
          %v2239 = vrot.slane %v2232, 4
          %v2240 = vsel %vm998, 0.0, %v2239
          %v2241 = vsel %vm998, %v2179, %v2160
          %v2243 = vunpack.c.l.s4 1983009808
          %v2244 = vunpack.c.0.s8 %v2243
          %v2245 = vperm.slane %v2241, %v2244
          %v2246 = vrot.slane %v2180, 4
          %v2247 = vsel %vm998, %v2246, %v2178
          %v2249 = vunpack.c.l.s4 1983009808
          %v2250 = vunpack.c.0.s8 %v2249
          %v2251 = vperm.slane %v2247, %v2250
          %v2252 = vsel %vm998, %v2183, %v2172
          %v2254 = vunpack.c.l.s4 1983009808
          %v2255 = vunpack.c.0.s8 %v2254
          %v2256 = vperm.slane %v2252, %v2255
          %v2257 = vrot.slane %v2184, 4
          %v2258 = vsel %vm998, %v2257, %v2182
          %v2260 = vunpack.c.l.s4 1983009808
          %v2261 = vunpack.c.0.s8 %v2260
          %v2262 = vperm.slane %v2258, %v2261
          %v2263 = vrot.slane %v2251, 4
          %v2264 = vsel %vm998, %v2263, %v2245
          %v2265 = vrot.slane %v2245, 4
          %v2266 = vsel %vm998, %v2251, %v2265
          %v2268 = vunpack.c.l.s4 1934713408
          %v2269 = vunpack.c.0.s8 %v2268
          %v2270 = vperm.slane %v2264, %v2269
          %v2272 = vunpack.c.l.s4 1934713408
          %v2273 = vunpack.c.0.s8 %v2272
          %v2274 = vperm.slane %v2266, %v2273
          %v2275 = vrot.slane %v2262, 4
          %v2276 = vsel %vm998, %v2275, %v2256
          %v2277 = vrot.slane %v2256, 4
          %v2278 = vsel %vm998, %v2262, %v2277
          %v2280 = vunpack.c.l.s4 1934713408
          %v2281 = vunpack.c.0.s8 %v2280
          %v2282 = vperm.slane %v2276, %v2281
          %v2284 = vunpack.c.l.s4 1934713408
          %v2285 = vunpack.c.0.s8 %v2284
          %v2286 = vperm.slane %v2278, %v2285
          %v2287 = vrot.slane %v2282, 4
          %v2288 = vsel %vm998, %v2287, %v2270
          %v2289 = vrot.slane %v2270, 4
          %v2290 = vsel %vm998, %v2282, %v2289
          %v2291 = vrot.slane %v2286, 4
          %v2292 = vsel %vm998, %v2291, %v2274
          %v2293 = vrot.slane %v2274, 4
          %v2294 = vsel %vm998, %v2286, %v2293
          %v2295 = vsel %vm998, %v2235, %v2216
          %v2297 = vunpack.c.l.s4 1983009808
          %v2298 = vunpack.c.0.s8 %v2297
          %v2299 = vperm.slane %v2295, %v2298
          %v2300 = vrot.slane %v2236, 4
          %v2301 = vsel %vm998, %v2300, %v2234
          %v2303 = vunpack.c.l.s4 1983009808
          %v2304 = vunpack.c.0.s8 %v2303
          %v2305 = vperm.slane %v2301, %v2304
          %v2306 = vsel %vm998, %v2239, %v2228
          %v2308 = vunpack.c.l.s4 1983009808
          %v2309 = vunpack.c.0.s8 %v2308
          %v2310 = vperm.slane %v2306, %v2309
          %v2311 = vrot.slane %v2240, 4
          %v2312 = vsel %vm998, %v2311, %v2238
          %v2314 = vunpack.c.l.s4 1983009808
          %v2315 = vunpack.c.0.s8 %v2314
          %v2316 = vperm.slane %v2312, %v2315
          %v2317 = vrot.slane %v2305, 4
          %v2318 = vsel %vm998, %v2317, %v2299
          %v2319 = vrot.slane %v2299, 4
          %v2320 = vsel %vm998, %v2305, %v2319
          %v2322 = vunpack.c.l.s4 1934713408
          %v2323 = vunpack.c.0.s8 %v2322
          %v2324 = vperm.slane %v2318, %v2323
          %v2326 = vunpack.c.l.s4 1934713408
          %v2327 = vunpack.c.0.s8 %v2326
          %v2328 = vperm.slane %v2320, %v2327
          %v2329 = vrot.slane %v2316, 4
          %v2330 = vsel %vm998, %v2329, %v2310
          %v2331 = vrot.slane %v2310, 4
          %v2332 = vsel %vm998, %v2316, %v2331
          %v2334 = vunpack.c.l.s4 1934713408
          %v2335 = vunpack.c.0.s8 %v2334
          %v2336 = vperm.slane %v2330, %v2335
          %v2338 = vunpack.c.l.s4 1934713408
          %v2339 = vunpack.c.0.s8 %v2338
          %v2340 = vperm.slane %v2332, %v2339
          %v2341 = vrot.slane %v2336, 4
          %v2342 = vsel %vm998, %v2341, %v2324
          %v2343 = vrot.slane %v2324, 4
          %v2344 = vsel %vm998, %v2336, %v2343
          %v2345 = vrot.slane %v2340, 4
          %v2346 = vsel %vm998, %v2345, %v2328
          %v2347 = vrot.slane %v2328, 4
          %v2348 = vsel %vm998, %v2340, %v2347
          %2351 = vrot.lane.b32.xlu0 %v2290, 16
          %v2352 = vpop.permute.xlu0 %2351
          %2353 = vrot.lane.b32.xlu0 %v2344, 16
          %v2354 = vpop.permute.xlu0 %2353
          %2359 = vrot.lane.b32.xlu0 %v2292, 32
          %v2360 = vpop.permute.xlu0 %2359
          %2361 = vrot.lane.b32.xlu0 %v2346, 32
          %v2362 = vpop.permute.xlu0 %2361
          %2367 = vrot.lane.b32.xlu0 %v2294, 48
          %v2368 = vpop.permute.xlu0 %2367
          %2369 = vrot.lane.b32.xlu0 %v2348, 48
          %v2370 = vpop.permute.xlu0 %2369
          %v2373 = vsel %vm1726, %v2288, %v2352
          %v2374 = vsel %vm1726, %v2342, %v2354
          %vm2375 = vcmask 261120
          %v2376 = vsel %vm2375, %v2373, %v2360
          %v2377 = vsel %vm2375, %v2374, %v2362
          %vm2378 = vcmask 392192
          %v2379 = vsel %vm2378, %v2376, %v2368
          %v2380 = vsel %vm2378, %v2377, %v2370
          %v2381 = vpack.c.bf16 %v2380, %v2379
          %v2382 = vld [vmem:[%s806] sm:$0xf]
          %v2383 = vld [vmem:[%s806 + $0x4] sm:$0xf]
          %v2384 = vld [vmem:[%s806 + $0x8] sm:$0xf]
          %v2385 = vld [vmem:[%s806 + $0xc] sm:$0xf]
          %v2386 = vld [vmem:[%s806 + $0x10] sm:$0xf]
          %v2387 = vld [vmem:[%s806 + $0x14] sm:$0xf]
          %v2388 = vld [vmem:[%s806 + $0x18] sm:$0xf]
          %v2389 = vld [vmem:[%s806 + $0x1c] sm:$0xf]
          %v2390 = vld [vmem:[%s809] sm:$0x1]
          %v2392 = vperm.slane %v2390, 0
          %v2402 = vunpack.c.l.b16 %v2382
          %v2403 = vunpack.c.l.b16 %v2383
          %v2404 = vunpack.c.l.b16 %v2384
          %v2405 = vunpack.c.l.b16 %v2385
          %v2406 = vunpack.c.l.b16 %v2386
          %v2407 = vunpack.c.l.b16 %v2387
          %v2408 = vunpack.c.l.b16 %v2388
          %v2409 = vunpack.c.l.b16 %v2389
          %v2410 = vpack.c.b16 %v2403, %v2402
          %v2411 = vpack.c.b16 %v2405, %v2404
          %v2412 = vpack.c.b16 %v2407, %v2406
          %v2413 = vpack.c.b16 %v2409, %v2408
          %v2419 = vsel %vm945, %v2381, 0
          %2421 = vmatpush.bf16.msra.mxu0 0
          %2422 = vmatpush.bf16.msra.mxu0 0
          %2423 = vmatpush.bf16.msra.mxu0 0
          %2424 = vmatpush.bf16.msra.mxu0 0
          %2425 = vmatpush.bf16.msra.mxu0 %v2413
          %2426 = vmatpush.bf16.msra.mxu0 %v2412
          %2427 = vmatpush.bf16.msra.mxu0 %v2411
          %2428 = vmatpush.bf16.msra.mxu0 %v2410
          %2429 = vmatmul.bf16.gmra.mxu0 %v2419
          %v2430 = vpop.f32.mrf.mxu0
          %v2431 = vadd.f32 %v2392, %v2430
          %v2432 = vpop.f32.mrf.mxu0
          %v2433 = vadd.f32 %v2392, %v2432
          %2434 = vdwg.mxu0
          %v2435 = vadd.f32 %v888, %v2431
          %v2436 = vadd.f32 %v889, %v2433
          %v2437 = vld [vmem:[%s812] sm:$0x1]
          %v2438 = vld [vmem:[%s815] sm:$0x1]
          %v2439 = vsel %vm945, %v2435, 0.0
          %2440 = vadd.xlane.f32.xlu0 %v2439
          %v2441 = vpop.xlane.xlu0 %2440
          %v2442 = vsel %vm945, %v2436, 0.0
          %2443 = vadd.xlane.f32.xlu0 %v2442
          %v2444 = vpop.xlane.xlu0 %2443
          %v2445 = vrcp.pop 64.0
          %v2446 = vmul.f32 64.0, %v2445
          %v2447 = vsub.f32 1.0, %v2446
          %v2448 = vmul.f32 %v2445, %v2447
          %v2449 = vadd.f32 %v2445, %v2448
          %vm2450 = vweird.f32 %v2445
          %v2451 = vsel %vm2450, %v2445, %v2449
          %v2452 = vmul.f32 %v2441, %v2451
          %v2453 = vmul.f32 %v2444, %v2451
          %v2454 = vsub.f32 %v2435, %v2452
          %v2455 = vsub.f32 %v2436, %v2453
          %v2456 = vmul.f32 %v2454, %v2454
          %v2457 = vmul.f32 %v2455, %v2455
          %v2458 = vsel %vm945, %v2456, 0.0
          %2459 = vadd.xlane.f32.xlu0 %v2458
          %v2460 = vpop.xlane.xlu0 %2459
          %v2461 = vsel %vm945, %v2457, 0.0
          %2462 = vadd.xlane.f32.xlu0 %v2461
          %v2463 = vpop.xlane.xlu0 %2462
          %v2464 = vmul.f32 %v2460, %v2451
          %v2465 = vmul.f32 %v2463, %v2451
          %v2466 = vadd.f32 %v2464, 1e-05
          %v2467 = vadd.f32 %v2465, 1e-05
          %v2468 = vrsqrt.pop %v2466
          %v2469 = vmul.f32 %v2468, %v2466
          %v2470 = vmul.f32 %v2469, %v2468
          %v2471 = vmul.f32 0.5, %v2470
          %v2472 = vsub.f32 1.5, %v2471
          %v2473 = vmul.f32 %v2468, %v2472
          %vm2474 = vweird.f32 %v2466
          %vm2475 = vweird.f32 %v2468
          %vm2476 = vmor %vm2474, %vm2475
          %v2477 = vsel %vm2476, %v2468, %v2473
          %v2478 = vrsqrt.pop %v2467
          %v2479 = vmul.f32 %v2478, %v2467
          %v2480 = vmul.f32 %v2479, %v2478
          %v2481 = vmul.f32 0.5, %v2480
          %v2482 = vsub.f32 1.5, %v2481
          %v2483 = vmul.f32 %v2478, %v2482
          %vm2484 = vweird.f32 %v2467
          %vm2485 = vweird.f32 %v2478
          %vm2486 = vmor %vm2484, %vm2485
          %v2487 = vsel %vm2486, %v2478, %v2483
          %v2488 = vmul.f32 %v2454, %v2477
          %v2489 = vmul.f32 %v2455, %v2487
          %v2491 = vperm.slane %v2437, 0
          %v2493 = vmul.f32 %v2488, %v2491
          %v2494 = vmul.f32 %v2489, %v2491
          %v2496 = vperm.slane %v2438, 0
          %v2498 = vadd.f32 %v2493, %v2496
          %v2499 = vadd.f32 %v2494, %v2496
          %2500 = vst.msk [vmem:[#allocation2] sm:$0xff] %vm945, %v2498
          %2501 = vst.msk [vmem:[#allocation2 + $0x8] sm:$0xff] %vm945, %v2499
          %2502 = vst.msk [vmem:[#allocation3] sm:$0xff] %vm945, 0.0
          %2503 = vst.msk [vmem:[#allocation3 + $0x8] sm:$0xff] %vm945, 0.0
        $region119: #{tpu_custom_call.1} parent=106 // pred_fallthru
          _
        %v2504 = vld [vmem:[#allocation2] sm:$0xff]
        %v2505 = vld [vmem:[#allocation2 + $0x8] sm:$0xff]
        %v2506 = vpack.c.bf16 %v2505, %v2504
        %v2507 = vld [vmem:[%s700] sm:$0xff]
        %v2508 = vld [vmem:[%s700 + $0x8] sm:$0xff]
        %v2509 = vld [vmem:[%s700 + $0x10] sm:$0xff]
        %v2510 = vld [vmem:[%s700 + $0x18] sm:$0xff]
        %v2511 = vld [vmem:[%s700 + $0x20] sm:$0xff]
        %v2512 = vld [vmem:[%s700 + $0x28] sm:$0xff]
        %v2513 = vld [vmem:[%s700 + $0x30] sm:$0xff]
        %v2514 = vld [vmem:[%s700 + $0x38] sm:$0xff]
        %v2515 = vld [vmem:[%s700 + $0x40] sm:$0xff]
        %v2516 = vld [vmem:[%s700 + $0x48] sm:$0xff]
        %v2517 = vld [vmem:[%s700 + $0x50] sm:$0xff]
        %v2518 = vld [vmem:[%s700 + $0x58] sm:$0xff]
        %v2519 = vld [vmem:[%s700 + $0x60] sm:$0xff]
        %v2520 = vld [vmem:[%s700 + $0x68] sm:$0xff]
        %v2521 = vld [vmem:[%s700 + $0x70] sm:$0xff]
        %v2522 = vld [vmem:[%s700 + $0x78] sm:$0xff]
        %v2523 = vld [vmem:[%s700 + $0x80] sm:$0xff]
        %v2524 = vld [vmem:[%s700 + $0x88] sm:$0xff]
        %v2525 = vld [vmem:[%s700 + $0x90] sm:$0xff]
        %v2526 = vld [vmem:[%s700 + $0x98] sm:$0xff]
        %v2527 = vld [vmem:[%s700 + $0xa0] sm:$0xff]
        %v2528 = vld [vmem:[%s700 + $0xa8] sm:$0xff]
        %v2529 = vld [vmem:[%s700 + $0xb0] sm:$0xff]
        %v2530 = vld [vmem:[%s700 + $0xb8] sm:$0xff]
        %v2531 = vld [vmem:[%s700 + $0xc0] sm:$0xff]
        %v2532 = vld [vmem:[%s700 + $0xc8] sm:$0xff]
        %v2533 = vld [vmem:[%s700 + $0xd0] sm:$0xff]
        %v2534 = vld [vmem:[%s700 + $0xd8] sm:$0xff]
        %v2535 = vld [vmem:[%s700 + $0xe0] sm:$0xff]
        %v2536 = vld [vmem:[%s700 + $0xe8] sm:$0xff]
        %v2537 = vld [vmem:[%s700 + $0xf0] sm:$0xff]
        %v2538 = vld [vmem:[%s700 + $0xf8] sm:$0xff]
        %v2539 = vld [vmem:[%s824] sm:$0xff]
        %v2541 = vperm.slane %v2539, 0
        %v2542 = vperm.slane %v2539, 1
        %v2543 = vperm.slane %v2539, 2
        %v2544 = vperm.slane %v2539, 3
        %v2545 = vperm.slane %v2539, 4
        %v2546 = vperm.slane %v2539, 5
        %v2547 = vperm.slane %v2539, 6
        %v2548 = vperm.slane %v2539, 7
        %v2589 = vunpack.c.l.b16 %v2507
        %v2590 = vunpack.c.h.b16 %v2507
        %v2591 = vunpack.c.l.b16 %v2508
        %v2592 = vunpack.c.h.b16 %v2508
        %v2593 = vunpack.c.l.b16 %v2509
        %v2594 = vunpack.c.h.b16 %v2509
        %v2595 = vunpack.c.l.b16 %v2510
        %v2596 = vunpack.c.h.b16 %v2510
        %v2597 = vunpack.c.l.b16 %v2511
        %v2598 = vunpack.c.h.b16 %v2511
        %v2599 = vunpack.c.l.b16 %v2512
        %v2600 = vunpack.c.h.b16 %v2512
        %v2601 = vunpack.c.l.b16 %v2513
        %v2602 = vunpack.c.h.b16 %v2513
        %v2603 = vunpack.c.l.b16 %v2514
        %v2604 = vunpack.c.h.b16 %v2514
        %v2605 = vunpack.c.l.b16 %v2515
        %v2606 = vunpack.c.h.b16 %v2515
        %v2607 = vunpack.c.l.b16 %v2516
        %v2608 = vunpack.c.h.b16 %v2516
        %v2609 = vunpack.c.l.b16 %v2517
        %v2610 = vunpack.c.h.b16 %v2517
        %v2611 = vunpack.c.l.b16 %v2518
        %v2612 = vunpack.c.h.b16 %v2518
        %v2613 = vunpack.c.l.b16 %v2519
        %v2614 = vunpack.c.h.b16 %v2519
        %v2615 = vunpack.c.l.b16 %v2520
        %v2616 = vunpack.c.h.b16 %v2520
        %v2617 = vunpack.c.l.b16 %v2521
        %v2618 = vunpack.c.h.b16 %v2521
        %v2619 = vunpack.c.l.b16 %v2522
        %v2620 = vunpack.c.h.b16 %v2522
        %v2621 = vunpack.c.l.b16 %v2523
        %v2622 = vunpack.c.h.b16 %v2523
        %v2623 = vunpack.c.l.b16 %v2524
        %v2624 = vunpack.c.h.b16 %v2524
        %v2625 = vunpack.c.l.b16 %v2525
        %v2626 = vunpack.c.h.b16 %v2525
        %v2627 = vunpack.c.l.b16 %v2526
        %v2628 = vunpack.c.h.b16 %v2526
        %v2629 = vunpack.c.l.b16 %v2527
        %v2630 = vunpack.c.h.b16 %v2527
        %v2631 = vunpack.c.l.b16 %v2528
        %v2632 = vunpack.c.h.b16 %v2528
        %v2633 = vunpack.c.l.b16 %v2529
        %v2634 = vunpack.c.h.b16 %v2529
        %v2635 = vunpack.c.l.b16 %v2530
        %v2636 = vunpack.c.h.b16 %v2530
        %v2637 = vunpack.c.l.b16 %v2531
        %v2638 = vunpack.c.h.b16 %v2531
        %v2639 = vunpack.c.l.b16 %v2532
        %v2640 = vunpack.c.h.b16 %v2532
        %v2641 = vunpack.c.l.b16 %v2533
        %v2642 = vunpack.c.h.b16 %v2533
        %v2643 = vunpack.c.l.b16 %v2534
        %v2644 = vunpack.c.h.b16 %v2534
        %v2645 = vunpack.c.l.b16 %v2535
        %v2646 = vunpack.c.h.b16 %v2535
        %v2647 = vunpack.c.l.b16 %v2536
        %v2648 = vunpack.c.h.b16 %v2536
        %v2649 = vunpack.c.l.b16 %v2537
        %v2650 = vunpack.c.h.b16 %v2537
        %v2651 = vunpack.c.l.b16 %v2538
        %v2652 = vunpack.c.h.b16 %v2538
        %v2653 = vpack.c.b16 %v2597, %v2589
        %v2654 = vpack.c.b16 %v2598, %v2590
        %v2655 = vpack.c.b16 %v2599, %v2591
        %v2656 = vpack.c.b16 %v2600, %v2592
        %v2657 = vpack.c.b16 %v2601, %v2593
        %v2658 = vpack.c.b16 %v2602, %v2594
        %v2659 = vpack.c.b16 %v2603, %v2595
        %v2660 = vpack.c.b16 %v2604, %v2596
        %v2661 = vpack.c.b16 %v2613, %v2605
        %v2662 = vpack.c.b16 %v2614, %v2606
        %v2663 = vpack.c.b16 %v2615, %v2607
        %v2664 = vpack.c.b16 %v2616, %v2608
        %v2665 = vpack.c.b16 %v2617, %v2609
        %v2666 = vpack.c.b16 %v2618, %v2610
        %v2667 = vpack.c.b16 %v2619, %v2611
        %v2668 = vpack.c.b16 %v2620, %v2612
        %v2669 = vpack.c.b16 %v2629, %v2621
        %v2670 = vpack.c.b16 %v2630, %v2622
        %v2671 = vpack.c.b16 %v2631, %v2623
        %v2672 = vpack.c.b16 %v2632, %v2624
        %v2673 = vpack.c.b16 %v2633, %v2625
        %v2674 = vpack.c.b16 %v2634, %v2626
        %v2675 = vpack.c.b16 %v2635, %v2627
        %v2676 = vpack.c.b16 %v2636, %v2628
        %v2677 = vpack.c.b16 %v2645, %v2637
        %v2678 = vpack.c.b16 %v2646, %v2638
        %v2679 = vpack.c.b16 %v2647, %v2639
        %v2680 = vpack.c.b16 %v2648, %v2640
        %v2681 = vpack.c.b16 %v2649, %v2641
        %v2682 = vpack.c.b16 %v2650, %v2642
        %v2683 = vpack.c.b16 %v2651, %v2643
        %v2684 = vpack.c.b16 %v2652, %v2644
        %vm2717 = vcmask 523264
        %v2719 = vsel %vm2717, %v2506, 0
        %2721 = vmatpush.bf16.msra.mxu0 0
        %2722 = vmatpush.bf16.msra.mxu0 0
        %2723 = vmatpush.bf16.msra.mxu0 0
        %2724 = vmatpush.bf16.msra.mxu0 0
        %2725 = vmatpush.bf16.msra.mxu0 %v2677
        %2726 = vmatpush.bf16.msra.mxu0 %v2669
        %2727 = vmatpush.bf16.msra.mxu0 %v2661
        %2728 = vmatpush.bf16.msra.mxu0 %v2653
        %2729 = vmatmul.bf16.gmra.mxu0 %v2719
        %v2730 = vpop.f32.mrf.mxu0
        %v2731 = vadd.f32 %v2541, %v2730
        %v2732 = vpop.f32.mrf.mxu0
        %v2733 = vadd.f32 %v2541, %v2732
        %2734 = vdwg.mxu0
        %2735 = vmatpush.bf16.msra.mxu0 0
        %2736 = vmatpush.bf16.msra.mxu0 0
        %2737 = vmatpush.bf16.msra.mxu0 0
        %2738 = vmatpush.bf16.msra.mxu0 0
        %2739 = vmatpush.bf16.msra.mxu0 %v2678
        %2740 = vmatpush.bf16.msra.mxu0 %v2670
        %2741 = vmatpush.bf16.msra.mxu0 %v2662
        %2742 = vmatpush.bf16.msra.mxu0 %v2654
        %2743 = vmatmul.bf16.gmra.mxu0 %v2719
        %v2744 = vpop.f32.mrf.mxu0
        %v2745 = vadd.f32 %v2542, %v2744
        %v2746 = vpop.f32.mrf.mxu0
        %v2747 = vadd.f32 %v2542, %v2746
        %2748 = vdwg.mxu0
        %2749 = vmatpush.bf16.msra.mxu0 0
        %2750 = vmatpush.bf16.msra.mxu0 0
        %2751 = vmatpush.bf16.msra.mxu0 0
        %2752 = vmatpush.bf16.msra.mxu0 0
        %2753 = vmatpush.bf16.msra.mxu0 %v2679
        %2754 = vmatpush.bf16.msra.mxu0 %v2671
        %2755 = vmatpush.bf16.msra.mxu0 %v2663
        %2756 = vmatpush.bf16.msra.mxu0 %v2655
        %2757 = vmatmul.bf16.gmra.mxu0 %v2719
        %v2758 = vpop.f32.mrf.mxu0
        %v2759 = vadd.f32 %v2543, %v2758
        %v2760 = vpop.f32.mrf.mxu0
        %v2761 = vadd.f32 %v2543, %v2760
        %2762 = vdwg.mxu0
        %2763 = vmatpush.bf16.msra.mxu0 0
        %2764 = vmatpush.bf16.msra.mxu0 0
        %2765 = vmatpush.bf16.msra.mxu0 0
        %2766 = vmatpush.bf16.msra.mxu0 0
        %2767 = vmatpush.bf16.msra.mxu0 %v2680
        %2768 = vmatpush.bf16.msra.mxu0 %v2672
        %2769 = vmatpush.bf16.msra.mxu0 %v2664
        %2770 = vmatpush.bf16.msra.mxu0 %v2656
        %2771 = vmatmul.bf16.gmra.mxu0 %v2719
        %v2772 = vpop.f32.mrf.mxu0
        %v2773 = vadd.f32 %v2544, %v2772
        %v2774 = vpop.f32.mrf.mxu0
        %v2775 = vadd.f32 %v2544, %v2774
        %2776 = vdwg.mxu0
        %2777 = vmatpush.bf16.msra.mxu0 0
        %2778 = vmatpush.bf16.msra.mxu0 0
        %2779 = vmatpush.bf16.msra.mxu0 0
        %2780 = vmatpush.bf16.msra.mxu0 0
        %2781 = vmatpush.bf16.msra.mxu0 %v2681
        %2782 = vmatpush.bf16.msra.mxu0 %v2673
        %2783 = vmatpush.bf16.msra.mxu0 %v2665
        %2784 = vmatpush.bf16.msra.mxu0 %v2657
        %2785 = vmatmul.bf16.gmra.mxu0 %v2719
        %v2786 = vpop.f32.mrf.mxu0
        %v2787 = vadd.f32 %v2545, %v2786
        %v2788 = vpop.f32.mrf.mxu0
        %v2789 = vadd.f32 %v2545, %v2788
        %2790 = vdwg.mxu0
        %2791 = vmatpush.bf16.msra.mxu0 0
        %2792 = vmatpush.bf16.msra.mxu0 0
        %2793 = vmatpush.bf16.msra.mxu0 0
        %2794 = vmatpush.bf16.msra.mxu0 0
        %2795 = vmatpush.bf16.msra.mxu0 %v2682
        %2796 = vmatpush.bf16.msra.mxu0 %v2674
        %2797 = vmatpush.bf16.msra.mxu0 %v2666
        %2798 = vmatpush.bf16.msra.mxu0 %v2658
        %2799 = vmatmul.bf16.gmra.mxu0 %v2719
        %v2800 = vpop.f32.mrf.mxu0
        %v2801 = vadd.f32 %v2546, %v2800
        %v2802 = vpop.f32.mrf.mxu0
        %v2803 = vadd.f32 %v2546, %v2802
        %2804 = vdwg.mxu0
        %2805 = vmatpush.bf16.msra.mxu0 0
        %2806 = vmatpush.bf16.msra.mxu0 0
        %2807 = vmatpush.bf16.msra.mxu0 0
        %2808 = vmatpush.bf16.msra.mxu0 0
        %2809 = vmatpush.bf16.msra.mxu0 %v2683
        %2810 = vmatpush.bf16.msra.mxu0 %v2675
        %2811 = vmatpush.bf16.msra.mxu0 %v2667
        %2812 = vmatpush.bf16.msra.mxu0 %v2659
        %2813 = vmatmul.bf16.gmra.mxu0 %v2719
        %v2814 = vpop.f32.mrf.mxu0
        %v2815 = vadd.f32 %v2547, %v2814
        %v2816 = vpop.f32.mrf.mxu0
        %v2817 = vadd.f32 %v2547, %v2816
        %2818 = vdwg.mxu0
        %2819 = vmatpush.bf16.msra.mxu0 0
        %2820 = vmatpush.bf16.msra.mxu0 0
        %2821 = vmatpush.bf16.msra.mxu0 0
        %2822 = vmatpush.bf16.msra.mxu0 0
        %2823 = vmatpush.bf16.msra.mxu0 %v2684
        %2824 = vmatpush.bf16.msra.mxu0 %v2676
        %2825 = vmatpush.bf16.msra.mxu0 %v2668
        %2826 = vmatpush.bf16.msra.mxu0 %v2660
        %2827 = vmatmul.bf16.gmra.mxu0 %v2719
        %v2828 = vpop.f32.mrf.mxu0
        %v2829 = vadd.f32 %v2548, %v2828
        %v2830 = vpop.f32.mrf.mxu0
        %v2831 = vadd.f32 %v2548, %v2830
        %2832 = vdwg.mxu0
        %v2833 = vmax.f32 %v2731, 0.0
        %v2834 = vmax.f32 %v2745, 0.0
        %v2835 = vmax.f32 %v2759, 0.0
        %v2836 = vmax.f32 %v2773, 0.0
        %v2837 = vmax.f32 %v2787, 0.0
        %v2838 = vmax.f32 %v2801, 0.0
        %v2839 = vmax.f32 %v2815, 0.0
        %v2840 = vmax.f32 %v2829, 0.0
        %v2841 = vmax.f32 %v2733, 0.0
        %v2842 = vmax.f32 %v2747, 0.0
        %v2843 = vmax.f32 %v2761, 0.0
        %v2844 = vmax.f32 %v2775, 0.0
        %v2845 = vmax.f32 %v2789, 0.0
        %v2846 = vmax.f32 %v2803, 0.0
        %v2847 = vmax.f32 %v2817, 0.0
        %v2848 = vmax.f32 %v2831, 0.0
        %v2849 = vld [vmem:[#allocation3] sm:$0xff]
        %v2850 = vld [vmem:[#allocation3 + $0x8] sm:$0xff]
        %v2851 = vpack.c.bf16 %v2841, %v2833
        %v2852 = vpack.c.bf16 %v2842, %v2834
        %v2853 = vpack.c.bf16 %v2843, %v2835
        %v2854 = vpack.c.bf16 %v2844, %v2836
        %v2855 = vpack.c.bf16 %v2845, %v2837
        %v2856 = vpack.c.bf16 %v2846, %v2838
        %v2857 = vpack.c.bf16 %v2847, %v2839
        %v2858 = vpack.c.bf16 %v2848, %v2840
        %v2859 = vld [vmem:[%s834] sm:$0xf]
        %v2860 = vld [vmem:[%s834 + $0x4] sm:$0xf]
        %v2861 = vld [vmem:[%s834 + $0x8] sm:$0xf]
        %v2862 = vld [vmem:[%s834 + $0xc] sm:$0xf]
        %v2863 = vld [vmem:[%s834 + $0x10] sm:$0xf]
        %v2864 = vld [vmem:[%s834 + $0x14] sm:$0xf]
        %v2865 = vld [vmem:[%s834 + $0x18] sm:$0xf]
        %v2866 = vld [vmem:[%s834 + $0x1c] sm:$0xf]
        %v2867 = vld [vmem:[%s834 + $0x20] sm:$0xf]
        %v2868 = vld [vmem:[%s834 + $0x24] sm:$0xf]
        %v2869 = vld [vmem:[%s834 + $0x28] sm:$0xf]
        %v2870 = vld [vmem:[%s834 + $0x2c] sm:$0xf]
        %v2871 = vld [vmem:[%s834 + $0x30] sm:$0xf]
        %v2872 = vld [vmem:[%s834 + $0x34] sm:$0xf]
        %v2873 = vld [vmem:[%s834 + $0x38] sm:$0xf]
        %v2874 = vld [vmem:[%s834 + $0x3c] sm:$0xf]
        %v2875 = vld [vmem:[%s834 + $0x40] sm:$0xf]
        %v2876 = vld [vmem:[%s834 + $0x44] sm:$0xf]
        %v2877 = vld [vmem:[%s834 + $0x48] sm:$0xf]
        %v2878 = vld [vmem:[%s834 + $0x4c] sm:$0xf]
        %v2879 = vld [vmem:[%s834 + $0x50] sm:$0xf]
        %v2880 = vld [vmem:[%s834 + $0x54] sm:$0xf]
        %v2881 = vld [vmem:[%s834 + $0x58] sm:$0xf]
        %v2882 = vld [vmem:[%s834 + $0x5c] sm:$0xf]
        %v2883 = vld [vmem:[%s834 + $0x60] sm:$0xf]
        %v2884 = vld [vmem:[%s834 + $0x64] sm:$0xf]
        %v2885 = vld [vmem:[%s834 + $0x68] sm:$0xf]
        %v2886 = vld [vmem:[%s834 + $0x6c] sm:$0xf]
        %v2887 = vld [vmem:[%s834 + $0x70] sm:$0xf]
        %v2888 = vld [vmem:[%s834 + $0x74] sm:$0xf]
        %v2889 = vld [vmem:[%s834 + $0x78] sm:$0xf]
        %v2890 = vld [vmem:[%s834 + $0x7c] sm:$0xf]
        %v2891 = vld [vmem:[%s834 + $0x80] sm:$0xf]
        %v2892 = vld [vmem:[%s834 + $0x84] sm:$0xf]
        %v2893 = vld [vmem:[%s834 + $0x88] sm:$0xf]
        %v2894 = vld [vmem:[%s834 + $0x8c] sm:$0xf]
        %v2895 = vld [vmem:[%s834 + $0x90] sm:$0xf]
        %v2896 = vld [vmem:[%s834 + $0x94] sm:$0xf]
        %v2897 = vld [vmem:[%s834 + $0x98] sm:$0xf]
        %v2898 = vld [vmem:[%s834 + $0x9c] sm:$0xf]
        %v2899 = vld [vmem:[%s834 + $0xa0] sm:$0xf]
        %v2900 = vld [vmem:[%s834 + $0xa4] sm:$0xf]
        %v2901 = vld [vmem:[%s834 + $0xa8] sm:$0xf]
        %v2902 = vld [vmem:[%s834 + $0xac] sm:$0xf]
        %v2903 = vld [vmem:[%s834 + $0xb0] sm:$0xf]
        %v2904 = vld [vmem:[%s834 + $0xb4] sm:$0xf]
        %v2905 = vld [vmem:[%s834 + $0xb8] sm:$0xf]
        %v2906 = vld [vmem:[%s834 + $0xbc] sm:$0xf]
        %v2907 = vld [vmem:[%s834 + $0xc0] sm:$0xf]
        %v2908 = vld [vmem:[%s834 + $0xc4] sm:$0xf]
        %v2909 = vld [vmem:[%s834 + $0xc8] sm:$0xf]
        %v2910 = vld [vmem:[%s834 + $0xcc] sm:$0xf]
        %v2911 = vld [vmem:[%s834 + $0xd0] sm:$0xf]
        %v2912 = vld [vmem:[%s834 + $0xd4] sm:$0xf]
        %v2913 = vld [vmem:[%s834 + $0xd8] sm:$0xf]
        %v2914 = vld [vmem:[%s834 + $0xdc] sm:$0xf]
        %v2915 = vld [vmem:[%s834 + $0xe0] sm:$0xf]
        %v2916 = vld [vmem:[%s834 + $0xe4] sm:$0xf]
        %v2917 = vld [vmem:[%s834 + $0xe8] sm:$0xf]
        %v2918 = vld [vmem:[%s834 + $0xec] sm:$0xf]
        %v2919 = vld [vmem:[%s834 + $0xf0] sm:$0xf]
        %v2920 = vld [vmem:[%s834 + $0xf4] sm:$0xf]
        %v2921 = vld [vmem:[%s834 + $0xf8] sm:$0xf]
        %v2922 = vld [vmem:[%s834 + $0xfc] sm:$0xf]
        %v2923 = vld [vmem:[%s834 + $0x100] sm:$0xf]
        %v2924 = vld [vmem:[%s834 + $0x104] sm:$0xf]
        %v2925 = vld [vmem:[%s834 + $0x108] sm:$0xf]
        %v2926 = vld [vmem:[%s834 + $0x10c] sm:$0xf]
        %v2927 = vld [vmem:[%s834 + $0x110] sm:$0xf]
        %v2928 = vld [vmem:[%s834 + $0x114] sm:$0xf]
        %v2929 = vld [vmem:[%s834 + $0x118] sm:$0xf]
        %v2930 = vld [vmem:[%s834 + $0x11c] sm:$0xf]
        %v2931 = vld [vmem:[%s834 + $0x120] sm:$0xf]
        %v2932 = vld [vmem:[%s834 + $0x124] sm:$0xf]
        %v2933 = vld [vmem:[%s834 + $0x128] sm:$0xf]
        %v2934 = vld [vmem:[%s834 + $0x12c] sm:$0xf]
        %v2935 = vld [vmem:[%s834 + $0x130] sm:$0xf]
        %v2936 = vld [vmem:[%s834 + $0x134] sm:$0xf]
        %v2937 = vld [vmem:[%s834 + $0x138] sm:$0xf]
        %v2938 = vld [vmem:[%s834 + $0x13c] sm:$0xf]
        %v2939 = vld [vmem:[%s834 + $0x140] sm:$0xf]
        %v2940 = vld [vmem:[%s834 + $0x144] sm:$0xf]
        %v2941 = vld [vmem:[%s834 + $0x148] sm:$0xf]
        %v2942 = vld [vmem:[%s834 + $0x14c] sm:$0xf]
        %v2943 = vld [vmem:[%s834 + $0x150] sm:$0xf]
        %v2944 = vld [vmem:[%s834 + $0x154] sm:$0xf]
        %v2945 = vld [vmem:[%s834 + $0x158] sm:$0xf]
        %v2946 = vld [vmem:[%s834 + $0x15c] sm:$0xf]
        %v2947 = vld [vmem:[%s834 + $0x160] sm:$0xf]
        %v2948 = vld [vmem:[%s834 + $0x164] sm:$0xf]
        %v2949 = vld [vmem:[%s834 + $0x168] sm:$0xf]
        %v2950 = vld [vmem:[%s834 + $0x16c] sm:$0xf]
        %v2951 = vld [vmem:[%s834 + $0x170] sm:$0xf]
        %v2952 = vld [vmem:[%s834 + $0x174] sm:$0xf]
        %v2953 = vld [vmem:[%s834 + $0x178] sm:$0xf]
        %v2954 = vld [vmem:[%s834 + $0x17c] sm:$0xf]
        %v2955 = vld [vmem:[%s834 + $0x180] sm:$0xf]
        %v2956 = vld [vmem:[%s834 + $0x184] sm:$0xf]
        %v2957 = vld [vmem:[%s834 + $0x188] sm:$0xf]
        %v2958 = vld [vmem:[%s834 + $0x18c] sm:$0xf]
        %v2959 = vld [vmem:[%s834 + $0x190] sm:$0xf]
        %v2960 = vld [vmem:[%s834 + $0x194] sm:$0xf]
        %v2961 = vld [vmem:[%s834 + $0x198] sm:$0xf]
        %v2962 = vld [vmem:[%s834 + $0x19c] sm:$0xf]
        %v2963 = vld [vmem:[%s834 + $0x1a0] sm:$0xf]
        %v2964 = vld [vmem:[%s834 + $0x1a4] sm:$0xf]
        %v2965 = vld [vmem:[%s834 + $0x1a8] sm:$0xf]
        %v2966 = vld [vmem:[%s834 + $0x1ac] sm:$0xf]
        %v2967 = vld [vmem:[%s834 + $0x1b0] sm:$0xf]
        %v2968 = vld [vmem:[%s834 + $0x1b4] sm:$0xf]
        %v2969 = vld [vmem:[%s834 + $0x1b8] sm:$0xf]
        %v2970 = vld [vmem:[%s834 + $0x1bc] sm:$0xf]
        %v2971 = vld [vmem:[%s834 + $0x1c0] sm:$0xf]
        %v2972 = vld [vmem:[%s834 + $0x1c4] sm:$0xf]
        %v2973 = vld [vmem:[%s834 + $0x1c8] sm:$0xf]
        %v2974 = vld [vmem:[%s834 + $0x1cc] sm:$0xf]
        %v2975 = vld [vmem:[%s834 + $0x1d0] sm:$0xf]
        %v2976 = vld [vmem:[%s834 + $0x1d4] sm:$0xf]
        %v2977 = vld [vmem:[%s834 + $0x1d8] sm:$0xf]
        %v2978 = vld [vmem:[%s834 + $0x1dc] sm:$0xf]
        %v2979 = vld [vmem:[%s834 + $0x1e0] sm:$0xf]
        %v2980 = vld [vmem:[%s834 + $0x1e4] sm:$0xf]
        %v2981 = vld [vmem:[%s834 + $0x1e8] sm:$0xf]
        %v2982 = vld [vmem:[%s834 + $0x1ec] sm:$0xf]
        %v2983 = vld [vmem:[%s834 + $0x1f0] sm:$0xf]
        %v2984 = vld [vmem:[%s834 + $0x1f4] sm:$0xf]
        %v2985 = vld [vmem:[%s834 + $0x1f8] sm:$0xf]
        %v2986 = vld [vmem:[%s834 + $0x1fc] sm:$0xf]
        %v3115 = vunpack.c.l.b16 %v2859
        %v3116 = vunpack.c.l.b16 %v2860
        %v3117 = vunpack.c.l.b16 %v2861
        %v3118 = vunpack.c.l.b16 %v2862
        %v3119 = vunpack.c.l.b16 %v2863
        %v3120 = vunpack.c.l.b16 %v2864
        %v3121 = vunpack.c.l.b16 %v2865
        %v3122 = vunpack.c.l.b16 %v2866
        %v3123 = vunpack.c.l.b16 %v2867
        %v3124 = vunpack.c.l.b16 %v2868
        %v3125 = vunpack.c.l.b16 %v2869
        %v3126 = vunpack.c.l.b16 %v2870
        %v3127 = vunpack.c.l.b16 %v2871
        %v3128 = vunpack.c.l.b16 %v2872
        %v3129 = vunpack.c.l.b16 %v2873
        %v3130 = vunpack.c.l.b16 %v2874
        %v3131 = vunpack.c.l.b16 %v2875
        %v3132 = vunpack.c.l.b16 %v2876
        %v3133 = vunpack.c.l.b16 %v2877
        %v3134 = vunpack.c.l.b16 %v2878
        %v3135 = vunpack.c.l.b16 %v2879
        %v3136 = vunpack.c.l.b16 %v2880
        %v3137 = vunpack.c.l.b16 %v2881
        %v3138 = vunpack.c.l.b16 %v2882
        %v3139 = vunpack.c.l.b16 %v2883
        %v3140 = vunpack.c.l.b16 %v2884
        %v3141 = vunpack.c.l.b16 %v2885
        %v3142 = vunpack.c.l.b16 %v2886
        %v3143 = vunpack.c.l.b16 %v2887
        %v3144 = vunpack.c.l.b16 %v2888
        %v3145 = vunpack.c.l.b16 %v2889
        %v3146 = vunpack.c.l.b16 %v2890
        %v3147 = vunpack.c.l.b16 %v2891
        %v3148 = vunpack.c.l.b16 %v2892
        %v3149 = vunpack.c.l.b16 %v2893
        %v3150 = vunpack.c.l.b16 %v2894
        %v3151 = vunpack.c.l.b16 %v2895
        %v3152 = vunpack.c.l.b16 %v2896
        %v3153 = vunpack.c.l.b16 %v2897
        %v3154 = vunpack.c.l.b16 %v2898
        %v3155 = vunpack.c.l.b16 %v2899
        %v3156 = vunpack.c.l.b16 %v2900
        %v3157 = vunpack.c.l.b16 %v2901
        %v3158 = vunpack.c.l.b16 %v2902
        %v3159 = vunpack.c.l.b16 %v2903
        %v3160 = vunpack.c.l.b16 %v2904
        %v3161 = vunpack.c.l.b16 %v2905
        %v3162 = vunpack.c.l.b16 %v2906
        %v3163 = vunpack.c.l.b16 %v2907
        %v3164 = vunpack.c.l.b16 %v2908
        %v3165 = vunpack.c.l.b16 %v2909
        %v3166 = vunpack.c.l.b16 %v2910
        %v3167 = vunpack.c.l.b16 %v2911
        %v3168 = vunpack.c.l.b16 %v2912
        %v3169 = vunpack.c.l.b16 %v2913
        %v3170 = vunpack.c.l.b16 %v2914
        %v3171 = vunpack.c.l.b16 %v2915
        %v3172 = vunpack.c.l.b16 %v2916
        %v3173 = vunpack.c.l.b16 %v2917
        %v3174 = vunpack.c.l.b16 %v2918
        %v3175 = vunpack.c.l.b16 %v2919
        %v3176 = vunpack.c.l.b16 %v2920
        %v3177 = vunpack.c.l.b16 %v2921
        %v3178 = vunpack.c.l.b16 %v2922
        %v3179 = vunpack.c.l.b16 %v2923
        %v3180 = vunpack.c.l.b16 %v2924
        %v3181 = vunpack.c.l.b16 %v2925
        %v3182 = vunpack.c.l.b16 %v2926
        %v3183 = vunpack.c.l.b16 %v2927
        %v3184 = vunpack.c.l.b16 %v2928
        %v3185 = vunpack.c.l.b16 %v2929
        %v3186 = vunpack.c.l.b16 %v2930
        %v3187 = vunpack.c.l.b16 %v2931
        %v3188 = vunpack.c.l.b16 %v2932
        %v3189 = vunpack.c.l.b16 %v2933
        %v3190 = vunpack.c.l.b16 %v2934
        %v3191 = vunpack.c.l.b16 %v2935
        %v3192 = vunpack.c.l.b16 %v2936
        %v3193 = vunpack.c.l.b16 %v2937
        %v3194 = vunpack.c.l.b16 %v2938
        %v3195 = vunpack.c.l.b16 %v2939
        %v3196 = vunpack.c.l.b16 %v2940
        %v3197 = vunpack.c.l.b16 %v2941
        %v3198 = vunpack.c.l.b16 %v2942
        %v3199 = vunpack.c.l.b16 %v2943
        %v3200 = vunpack.c.l.b16 %v2944
        %v3201 = vunpack.c.l.b16 %v2945
        %v3202 = vunpack.c.l.b16 %v2946
        %v3203 = vunpack.c.l.b16 %v2947
        %v3204 = vunpack.c.l.b16 %v2948
        %v3205 = vunpack.c.l.b16 %v2949
        %v3206 = vunpack.c.l.b16 %v2950
        %v3207 = vunpack.c.l.b16 %v2951
        %v3208 = vunpack.c.l.b16 %v2952
        %v3209 = vunpack.c.l.b16 %v2953
        %v3210 = vunpack.c.l.b16 %v2954
        %v3211 = vunpack.c.l.b16 %v2955
        %v3212 = vunpack.c.l.b16 %v2956
        %v3213 = vunpack.c.l.b16 %v2957
        %v3214 = vunpack.c.l.b16 %v2958
        %v3215 = vunpack.c.l.b16 %v2959
        %v3216 = vunpack.c.l.b16 %v2960
        %v3217 = vunpack.c.l.b16 %v2961
        %v3218 = vunpack.c.l.b16 %v2962
        %v3219 = vunpack.c.l.b16 %v2963
        %v3220 = vunpack.c.l.b16 %v2964
        %v3221 = vunpack.c.l.b16 %v2965
        %v3222 = vunpack.c.l.b16 %v2966
        %v3223 = vunpack.c.l.b16 %v2967
        %v3224 = vunpack.c.l.b16 %v2968
        %v3225 = vunpack.c.l.b16 %v2969
        %v3226 = vunpack.c.l.b16 %v2970
        %v3227 = vunpack.c.l.b16 %v2971
        %v3228 = vunpack.c.l.b16 %v2972
        %v3229 = vunpack.c.l.b16 %v2973
        %v3230 = vunpack.c.l.b16 %v2974
        %v3231 = vunpack.c.l.b16 %v2975
        %v3232 = vunpack.c.l.b16 %v2976
        %v3233 = vunpack.c.l.b16 %v2977
        %v3234 = vunpack.c.l.b16 %v2978
        %v3235 = vunpack.c.l.b16 %v2979
        %v3236 = vunpack.c.l.b16 %v2980
        %v3237 = vunpack.c.l.b16 %v2981
        %v3238 = vunpack.c.l.b16 %v2982
        %v3239 = vunpack.c.l.b16 %v2983
        %v3240 = vunpack.c.l.b16 %v2984
        %v3241 = vunpack.c.l.b16 %v2985
        %v3242 = vunpack.c.l.b16 %v2986
        %v3243 = vpack.c.b16 %v3116, %v3115
        %v3244 = vpack.c.b16 %v3118, %v3117
        %v3245 = vpack.c.b16 %v3120, %v3119
        %v3246 = vpack.c.b16 %v3122, %v3121
        %v3247 = vpack.c.b16 %v3124, %v3123
        %v3248 = vpack.c.b16 %v3126, %v3125
        %v3249 = vpack.c.b16 %v3128, %v3127
        %v3250 = vpack.c.b16 %v3130, %v3129
        %v3251 = vpack.c.b16 %v3132, %v3131
        %v3252 = vpack.c.b16 %v3134, %v3133
        %v3253 = vpack.c.b16 %v3136, %v3135
        %v3254 = vpack.c.b16 %v3138, %v3137
        %v3255 = vpack.c.b16 %v3140, %v3139
        %v3256 = vpack.c.b16 %v3142, %v3141
        %v3257 = vpack.c.b16 %v3144, %v3143
        %v3258 = vpack.c.b16 %v3146, %v3145
        %v3259 = vpack.c.b16 %v3148, %v3147
        %v3260 = vpack.c.b16 %v3150, %v3149
        %v3261 = vpack.c.b16 %v3152, %v3151
        %v3262 = vpack.c.b16 %v3154, %v3153
        %v3263 = vpack.c.b16 %v3156, %v3155
        %v3264 = vpack.c.b16 %v3158, %v3157
        %v3265 = vpack.c.b16 %v3160, %v3159
        %v3266 = vpack.c.b16 %v3162, %v3161
        %v3267 = vpack.c.b16 %v3164, %v3163
        %v3268 = vpack.c.b16 %v3166, %v3165
        %v3269 = vpack.c.b16 %v3168, %v3167
        %v3270 = vpack.c.b16 %v3170, %v3169
        %v3271 = vpack.c.b16 %v3172, %v3171
        %v3272 = vpack.c.b16 %v3174, %v3173
        %v3273 = vpack.c.b16 %v3176, %v3175
        %v3274 = vpack.c.b16 %v3178, %v3177
        %v3275 = vpack.c.b16 %v3180, %v3179
        %v3276 = vpack.c.b16 %v3182, %v3181
        %v3277 = vpack.c.b16 %v3184, %v3183
        %v3278 = vpack.c.b16 %v3186, %v3185
        %v3279 = vpack.c.b16 %v3188, %v3187
        %v3280 = vpack.c.b16 %v3190, %v3189
        %v3281 = vpack.c.b16 %v3192, %v3191
        %v3282 = vpack.c.b16 %v3194, %v3193
        %v3283 = vpack.c.b16 %v3196, %v3195
        %v3284 = vpack.c.b16 %v3198, %v3197
        %v3285 = vpack.c.b16 %v3200, %v3199
        %v3286 = vpack.c.b16 %v3202, %v3201
        %v3287 = vpack.c.b16 %v3204, %v3203
        %v3288 = vpack.c.b16 %v3206, %v3205
        %v3289 = vpack.c.b16 %v3208, %v3207
        %v3290 = vpack.c.b16 %v3210, %v3209
        %v3291 = vpack.c.b16 %v3212, %v3211
        %v3292 = vpack.c.b16 %v3214, %v3213
        %v3293 = vpack.c.b16 %v3216, %v3215
        %v3294 = vpack.c.b16 %v3218, %v3217
        %v3295 = vpack.c.b16 %v3220, %v3219
        %v3296 = vpack.c.b16 %v3222, %v3221
        %v3297 = vpack.c.b16 %v3224, %v3223
        %v3298 = vpack.c.b16 %v3226, %v3225
        %v3299 = vpack.c.b16 %v3228, %v3227
        %v3300 = vpack.c.b16 %v3230, %v3229
        %v3301 = vpack.c.b16 %v3232, %v3231
        %v3302 = vpack.c.b16 %v3234, %v3233
        %v3303 = vpack.c.b16 %v3236, %v3235
        %v3304 = vpack.c.b16 %v3238, %v3237
        %v3305 = vpack.c.b16 %v3240, %v3239
        %v3306 = vpack.c.b16 %v3242, %v3241
        %3371 = vmatpush.bf16.msra.mxu0 %v3250
        %3372 = vmatpush.bf16.msra.mxu0 %v3249
        %3373 = vmatpush.bf16.msra.mxu0 %v3248
        %3374 = vmatpush.bf16.msra.mxu0 %v3247
        %3375 = vmatpush.bf16.msra.mxu0 %v3246
        %3376 = vmatpush.bf16.msra.mxu0 %v3245
        %3377 = vmatpush.bf16.msra.mxu0 %v3244
        %3378 = vmatpush.bf16.msra.mxu0 %v3243
        %3379 = vmatmul.bf16.gmra.mxu0 %v2851
        %v3380 = vpop.f32.mrf.mxu0
        %v3381 = vadd.f32 0.0, %v3380
        %v3382 = vpop.f32.mrf.mxu0
        %v3383 = vadd.f32 0.0, %v3382
        %3384 = vdwg.mxu0
        %3385 = vmatpush.bf16.msra.mxu0 %v3258
        %3386 = vmatpush.bf16.msra.mxu0 %v3257
        %3387 = vmatpush.bf16.msra.mxu0 %v3256
        %3388 = vmatpush.bf16.msra.mxu0 %v3255
        %3389 = vmatpush.bf16.msra.mxu0 %v3254
        %3390 = vmatpush.bf16.msra.mxu0 %v3253
        %3391 = vmatpush.bf16.msra.mxu0 %v3252
        %3392 = vmatpush.bf16.msra.mxu0 %v3251
        %3393 = vmatmul.bf16.gmra.mxu0 %v2852
        %v3394 = vpop.f32.mrf.mxu0
        %v3395 = vadd.f32 %v3381, %v3394
        %v3396 = vpop.f32.mrf.mxu0
        %v3397 = vadd.f32 %v3383, %v3396
        %3398 = vdwg.mxu0
        %3399 = vmatpush.bf16.msra.mxu0 %v3266
        %3400 = vmatpush.bf16.msra.mxu0 %v3265
        %3401 = vmatpush.bf16.msra.mxu0 %v3264
        %3402 = vmatpush.bf16.msra.mxu0 %v3263
        %3403 = vmatpush.bf16.msra.mxu0 %v3262
        %3404 = vmatpush.bf16.msra.mxu0 %v3261
        %3405 = vmatpush.bf16.msra.mxu0 %v3260
        %3406 = vmatpush.bf16.msra.mxu0 %v3259
        %3407 = vmatmul.bf16.gmra.mxu0 %v2853
        %v3408 = vpop.f32.mrf.mxu0
        %v3409 = vadd.f32 %v3395, %v3408
        %v3410 = vpop.f32.mrf.mxu0
        %v3411 = vadd.f32 %v3397, %v3410
        %3412 = vdwg.mxu0
        %3413 = vmatpush.bf16.msra.mxu0 %v3274
        %3414 = vmatpush.bf16.msra.mxu0 %v3273
        %3415 = vmatpush.bf16.msra.mxu0 %v3272
        %3416 = vmatpush.bf16.msra.mxu0 %v3271
        %3417 = vmatpush.bf16.msra.mxu0 %v3270
        %3418 = vmatpush.bf16.msra.mxu0 %v3269
        %3419 = vmatpush.bf16.msra.mxu0 %v3268
        %3420 = vmatpush.bf16.msra.mxu0 %v3267
        %3421 = vmatmul.bf16.gmra.mxu0 %v2854
        %v3422 = vpop.f32.mrf.mxu0
        %v3423 = vadd.f32 %v3409, %v3422
        %v3424 = vpop.f32.mrf.mxu0
        %v3425 = vadd.f32 %v3411, %v3424
        %3426 = vdwg.mxu0
        %3427 = vmatpush.bf16.msra.mxu0 %v3282
        %3428 = vmatpush.bf16.msra.mxu0 %v3281
        %3429 = vmatpush.bf16.msra.mxu0 %v3280
        %3430 = vmatpush.bf16.msra.mxu0 %v3279
        %3431 = vmatpush.bf16.msra.mxu0 %v3278
        %3432 = vmatpush.bf16.msra.mxu0 %v3277
        %3433 = vmatpush.bf16.msra.mxu0 %v3276
        %3434 = vmatpush.bf16.msra.mxu0 %v3275
        %3435 = vmatmul.bf16.gmra.mxu0 %v2855
        %v3436 = vpop.f32.mrf.mxu0
        %v3437 = vadd.f32 %v3423, %v3436
        %v3438 = vpop.f32.mrf.mxu0
        %v3439 = vadd.f32 %v3425, %v3438
        %3440 = vdwg.mxu0
        %3441 = vmatpush.bf16.msra.mxu0 %v3290
        %3442 = vmatpush.bf16.msra.mxu0 %v3289
        %3443 = vmatpush.bf16.msra.mxu0 %v3288
        %3444 = vmatpush.bf16.msra.mxu0 %v3287
        %3445 = vmatpush.bf16.msra.mxu0 %v3286
        %3446 = vmatpush.bf16.msra.mxu0 %v3285
        %3447 = vmatpush.bf16.msra.mxu0 %v3284
        %3448 = vmatpush.bf16.msra.mxu0 %v3283
        %3449 = vmatmul.bf16.gmra.mxu0 %v2856
        %v3450 = vpop.f32.mrf.mxu0
        %v3451 = vadd.f32 %v3437, %v3450
        %v3452 = vpop.f32.mrf.mxu0
        %v3453 = vadd.f32 %v3439, %v3452
        %3454 = vdwg.mxu0
        %3455 = vmatpush.bf16.msra.mxu0 %v3298
        %3456 = vmatpush.bf16.msra.mxu0 %v3297
        %3457 = vmatpush.bf16.msra.mxu0 %v3296
        %3458 = vmatpush.bf16.msra.mxu0 %v3295
        %3459 = vmatpush.bf16.msra.mxu0 %v3294
        %3460 = vmatpush.bf16.msra.mxu0 %v3293
        %3461 = vmatpush.bf16.msra.mxu0 %v3292
        %3462 = vmatpush.bf16.msra.mxu0 %v3291
        %3463 = vmatmul.bf16.gmra.mxu0 %v2857
        %v3464 = vpop.f32.mrf.mxu0
        %v3465 = vadd.f32 %v3451, %v3464
        %v3466 = vpop.f32.mrf.mxu0
        %v3467 = vadd.f32 %v3453, %v3466
        %3468 = vdwg.mxu0
        %3469 = vmatpush.bf16.msra.mxu0 %v3306
        %3470 = vmatpush.bf16.msra.mxu0 %v3305
        %3471 = vmatpush.bf16.msra.mxu0 %v3304
        %3472 = vmatpush.bf16.msra.mxu0 %v3303
        %3473 = vmatpush.bf16.msra.mxu0 %v3302
        %3474 = vmatpush.bf16.msra.mxu0 %v3301
        %3475 = vmatpush.bf16.msra.mxu0 %v3300
        %3476 = vmatpush.bf16.msra.mxu0 %v3299
        %3477 = vmatmul.bf16.gmra.mxu0 %v2858
        %v3478 = vpop.f32.mrf.mxu0
        %v3479 = vadd.f32 %v3465, %v3478
        %v3480 = vpop.f32.mrf.mxu0
        %v3481 = vadd.f32 %v3467, %v3480
        %3482 = vdwg.mxu0
        %v3483 = vadd.f32 %v2849, %v3479
        %v3484 = vadd.f32 %v2850, %v3481
        %3485 = vst.msk [vmem:[#allocation3] sm:$0xff] %vm2717, %v3483
        %3486 = vst.msk [vmem:[#allocation3 + $0x8] sm:$0xff] %vm2717, %v3484
        %p3487 = scmp.eq.s32.totalorder %s35, 1
        // Predicated region
        $region120: #{tpu_custom_call.1} parent=106 // pred_check
          %p3488 = pneg %p3487
        $region121: #{tpu_custom_call.1} parent=106 // pred_check_branch
          %3490 = sbr.rel (%p3488) target = $region123
        $region122: #{tpu_custom_call.1} parent=106 // pred_region
          %v3491 = vld [vmem:[#allocation2] sm:$0xff]
          %v3492 = vld [vmem:[#allocation2 + $0x8] sm:$0xff]
          %v3493 = vld [vmem:[#allocation3] sm:$0xff]
          %v3494 = vld [vmem:[#allocation3 + $0x8] sm:$0xff]
          %v3495 = vadd.f32 %v3491, %v3493
          %v3496 = vadd.f32 %v3492, %v3494
          %v3497 = vld [vmem:[%s838] sm:$0x1]
          %v3499 = vperm.slane %v3497, 0
          %v3501 = vadd.f32 %v3495, %v3499
          %v3502 = vadd.f32 %v3496, %v3499
          %v3503 = vld [vmem:[%s841] sm:$0x1]
          %v3504 = vld [vmem:[%s844] sm:$0x1]
          %v3505 = vsel %vm2717, %v3501, 0.0
          %3506 = vadd.xlane.f32.xlu0 %v3505
          %v3507 = vpop.xlane.xlu0 %3506
          %v3508 = vsel %vm2717, %v3502, 0.0
          %3509 = vadd.xlane.f32.xlu0 %v3508
          %v3510 = vpop.xlane.xlu0 %3509
          %v3511 = vrcp.pop 64.0
          %v3512 = vmul.f32 64.0, %v3511
          %v3513 = vsub.f32 1.0, %v3512
          %v3514 = vmul.f32 %v3511, %v3513
          %v3515 = vadd.f32 %v3511, %v3514
          %vm3516 = vweird.f32 %v3511
          %v3517 = vsel %vm3516, %v3511, %v3515
          %v3518 = vmul.f32 %v3507, %v3517
          %v3519 = vmul.f32 %v3510, %v3517
          %v3520 = vsub.f32 %v3501, %v3518
          %v3521 = vsub.f32 %v3502, %v3519
          %v3522 = vmul.f32 %v3520, %v3520
          %v3523 = vmul.f32 %v3521, %v3521
          %v3524 = vsel %vm2717, %v3522, 0.0
          %3525 = vadd.xlane.f32.xlu0 %v3524
          %v3526 = vpop.xlane.xlu0 %3525
          %v3527 = vsel %vm2717, %v3523, 0.0
          %3528 = vadd.xlane.f32.xlu0 %v3527
          %v3529 = vpop.xlane.xlu0 %3528
          %v3530 = vmul.f32 %v3526, %v3517
          %v3531 = vmul.f32 %v3529, %v3517
          %v3532 = vadd.f32 %v3530, 1e-05
          %v3533 = vadd.f32 %v3531, 1e-05
          %v3534 = vrsqrt.pop %v3532
          %v3535 = vmul.f32 %v3534, %v3532
          %v3536 = vmul.f32 %v3535, %v3534
          %v3537 = vmul.f32 0.5, %v3536
          %v3538 = vsub.f32 1.5, %v3537
          %v3539 = vmul.f32 %v3534, %v3538
          %vm3540 = vweird.f32 %v3532
          %vm3541 = vweird.f32 %v3534
          %vm3542 = vmor %vm3540, %vm3541
          %v3543 = vsel %vm3542, %v3534, %v3539
          %v3544 = vrsqrt.pop %v3533
          %v3545 = vmul.f32 %v3544, %v3533
          %v3546 = vmul.f32 %v3545, %v3544
          %v3547 = vmul.f32 0.5, %v3546
          %v3548 = vsub.f32 1.5, %v3547
          %v3549 = vmul.f32 %v3544, %v3548
          %vm3550 = vweird.f32 %v3533
          %vm3551 = vweird.f32 %v3544
          %vm3552 = vmor %vm3550, %vm3551
          %v3553 = vsel %vm3552, %v3544, %v3549
          %v3554 = vmul.f32 %v3520, %v3543
          %v3555 = vmul.f32 %v3521, %v3553
          %v3557 = vperm.slane %v3503, 0
          %v3559 = vmul.f32 %v3554, %v3557
          %v3560 = vmul.f32 %v3555, %v3557
          %v3562 = vperm.slane %v3504, 0
          %v3564 = vadd.f32 %v3559, %v3562
          %v3565 = vadd.f32 %v3560, %v3562
          %3566 = vst.msk [vmem:[#allocation2] sm:$0xff] %vm2717, %v3564
          %3567 = vst.msk [vmem:[#allocation2 + $0x8] sm:$0xff] %vm2717, %v3565
        $region123: #{tpu_custom_call.1} parent=106 // pred_fallthru
          _
        %p3568 = scmp.eq.s32.totalorder %s34, 1
        %p3569 = pnand %p3568, %p3487
        %p3570 = pneg %p3569
        // Predicated region
        $region124: #{tpu_custom_call.1} parent=106 // pred_check
          _
        $region125: #{tpu_custom_call.1} parent=106 // pred_check_branch
          %3572 = sbr.rel (%p3569) target = $region127
        $region126: #{tpu_custom_call.1} parent=106 // pred_region
          %v3573 = vld [vmem:[#allocation2] sm:$0xff]
          %v3574 = vld [vmem:[#allocation2 + $0x8] sm:$0xff]
          %v3575 = vpack.c.bf16 %v3573, %v3573
          %v3576 = vpack.c.bf16 %v3574, %v3574
          %v3577 = vld [vmem:[%s15] sm:$0xf]
          %v3578 = vld [vmem:[%s15 + $0x4] sm:$0xf]
          %v3579 = vld [vmem:[%s15 + $0x8] sm:$0xf]
          %v3580 = vld [vmem:[%s15 + $0xc] sm:$0xf]
          %v3581 = vld [vmem:[%s15 + $0x10] sm:$0xf]
          %v3582 = vld [vmem:[%s15 + $0x14] sm:$0xf]
          %v3583 = vld [vmem:[%s15 + $0x18] sm:$0xf]
          %v3584 = vld [vmem:[%s15 + $0x1c] sm:$0xf]
          %v3585 = vld [vmem:[#allocation4] sm:$0x1]
          %v3587 = vperm.slane %v3585, 0
          %v3591 = vunpack.c.l.b16 %v3575
          %v3592 = vunpack.c.l.b16 %v3576
          %v3593 = vrot.slane %v3591, 7
          %v3594 = vrot.slane %v3592, 6
          %vm3595 = vcmask 1041409
          %v3596 = vsel %vm3595, %v3594, %v3593
          %v3597 = vpack.c.b16 %v3596, %v3596
          %v3606 = vunpack.c.l.b16 %v3577
          %v3607 = vunpack.c.l.b16 %v3578
          %v3608 = vunpack.c.l.b16 %v3579
          %v3609 = vunpack.c.l.b16 %v3580
          %v3610 = vunpack.c.l.b16 %v3581
          %v3611 = vunpack.c.l.b16 %v3582
          %v3612 = vunpack.c.l.b16 %v3583
          %v3613 = vunpack.c.l.b16 %v3584
          %v3614 = vpack.c.b16 %v3607, %v3606
          %v3615 = vpack.c.b16 %v3609, %v3608
          %v3616 = vpack.c.b16 %v3611, %v3610
          %v3617 = vpack.c.b16 %v3613, %v3612
          %v3623 = vsel %vm2717, %v3597, 0
          %3625 = vmatpush.bf16.msra.mxu0 0
          %3626 = vmatpush.bf16.msra.mxu0 0
          %3627 = vmatpush.bf16.msra.mxu0 0
          %3628 = vmatpush.bf16.msra.mxu0 0
          %3629 = vmatpush.bf16.msra.mxu0 %v3617
          %3630 = vmatpush.bf16.msra.mxu0 %v3616
          %3631 = vmatpush.bf16.msra.mxu0 %v3615
          %3632 = vmatpush.bf16.msra.mxu0 %v3614
          %3633 = vmatmul.bf16.gmra.mxu0 %v3623
          %v3634 = vpop.f32.mrf.mxu0
          %v3635 = vadd.f32 %v3587, %v3634
          %v3636 = vpop.f32.mrf.mxu0
          %3637 = vdwg.mxu0
          %vm3638 = vcmask 1024
          %3639 = vst.msk [vmem:[%s17] sm:$0x3] %vm3638, %v3635
        $region127: #{tpu_custom_call.1} parent=106 // pred_fallthru
          _
        // Predicated region
        $region128: #{tpu_custom_call.1} parent=106 // pred_check
          %p3640 = pneg %p478
        $region129: #{tpu_custom_call.1} parent=106 // pred_check_branch
          %3642 = sbr.rel (%p3640) target = $region131
        $region130: #{tpu_custom_call.1} parent=106 // pred_region
          _
        $region131: #{tpu_custom_call.1} parent=106 // pred_fallthru
          _
        // Predicated region
        $region132: #{tpu_custom_call.1} parent=106 // pred_check
          %p3643 = pneg %p478
        $region133: #{tpu_custom_call.1} parent=106 // pred_check_branch
          %3645 = sbr.rel (%p3643) target = $region135
        $region134: #{tpu_custom_call.1} parent=106 // pred_region
          _
        $region135: #{tpu_custom_call.1} parent=106 // pred_fallthru
          _
      $region107: #{tpu_custom_call.1} parent=5 // pred_fallthru
        _
      %p3646 = scmp.le.s32.totalorder 2, %s25
      // Predicated region
      $region136: #{tpu_custom_call.1} parent=5 // pred_check
        %p3647 = pneg %p3646
      $region137: #{tpu_custom_call.1} parent=5 // pred_check_branch
        %3649 = sbr.rel (%p3647) target = $region139
      $region138: #{tpu_custom_call.1} parent=5 // pred_region
        %s3650 = ssub.s32 %s25, 2
      $region139: #{tpu_custom_call.1} parent=5 // pred_fallthru
        _
    $region6: #{tpu_custom_call.1} parent=1 // loop_footer
      %s29 = sadd.s32 1, %s25
    $region7: #{tpu_custom_call.1} parent=1 // loop_footer_branch
      %24 = sbr.rel target = $region3
    $region8: #{tpu_custom_call.1} parent=1 // loop_exit
      _

</llo_original>
